<compile_context>
chip_gen: v6e
topology: v6e:2x2x1
jax: 0.10.0
libtpu: 0.0.40
codegen_flags: <defaults>
</compile_context>

<pallas_src>
import functools

import jax
import jax.numpy as jnp
from jax.experimental import pallas as pl
from jax.experimental.pallas import tpu as pltpu


def decoder_kernel(z_ref, w1_ref, b1_ref, w2_ref, b2_ref, o_ref, acc_ref):
    k = pl.program_id(0)
    nz = w1_ref.shape[0]

    # ---- Layer 1 for this K-chunk (VPU) ----------------------------------
    # K = nz = 2 contraction as an explicit outer product: an MXU pass with a
    # 2-deep RHS would be <2% utilized.  Padded nh3 columns are zero in both
    # w1 and b1, so they contribute relu(0) = 0 and (with zero w2 rows) do not
    # affect the result.
    z = z_ref[...]                                     # (B, nz) f32
    h = b1_ref[...]                                    # (1, tk), broadcasts
    for j in range(nz):                                # nz == 2, static unroll
        h = h + z[:, j:j + 1] * w1_ref[j:j + 1, :]
    h = jnp.maximum(h, 0.0)                            # ReLU, (B, tk) f32

    # ---- Layer 2 partial product (MXU), f32 accumulation ------------------
    @pl.when(k == 0)
    def _init():
        acc_ref[...] = jnp.zeros_like(acc_ref)

    acc_ref[...] += jnp.dot(h.astype(jnp.bfloat16), w2_ref[...],
                            preferred_element_type=jnp.float32)

    # ---- Finalize: bias + tanh once, at the last K step --------------------
    @pl.when(k == pl.num_programs(0) - 1)
    def _finalize():
        o_ref[...] = jnp.tanh(acc_ref[...] + b2_ref[...])


def prepare_decoder_params(w1, b1, w2, b2, *, k_tile=1024):
    """One-time parameter prep: zero-pad nh3 to a multiple of k_tile (so K
    tiles are (8,128)-legal) and cast the dominant w2 to bf16 (halves the
    HBM->VMEM traffic that bounds this kernel).  Accumulation stays f32."""
    nz, nh3 = w1.shape
    nh3_pad = k_tile * pl.cdiv(nh3, k_tile)
    pad = nh3_pad - nh3
    w1p = jnp.pad(w1, ((0, 0), (0, pad)))
    b1p = jnp.pad(b1, ((0, 0), (0, pad)))
    w2p = jnp.pad(w2, ((0, pad), (0, 0))).astype(jnp.bfloat16)
    return w1p, b1p, w2p, b2


@functools.partial(jax.jit, static_argnames=("k_tile",))
def decoder_forward(z, w1p, b1p, w2p, b2, *, k_tile=1024):
    B, nz = z.shape
    nh3p = w1p.shape[1]
    nin = w2p.shape[1]
    assert nh3p % k_tile == 0, "padded nh3 must be divisible by k_tile"
    num_k = nh3p // k_tile

    flops = 2 * B * nh3p * nin + 2 * B * nz * nh3p
    bytes_accessed = (
        z.size * z.dtype.itemsize
        + w1p.size * w1p.dtype.itemsize
        + b1p.size * b1p.dtype.itemsize
        + w2p.size * w2p.dtype.itemsize
        + b2.size * b2.dtype.itemsize
        + B * nin * 4
    )

    return pl.pallas_call(
        decoder_kernel,
        out_shape=jax.ShapeDtypeStruct((B, nin), jnp.float32),
        grid=(num_k,),
        in_specs=[
            # Full batch every step (tiny: B x nz).
            pl.BlockSpec((B, nz), lambda k: (0, 0)),
            # Layer-1 params sliced along the (padded) nh3 axis.
            pl.BlockSpec((nz, k_tile), lambda k: (0, k)),
            pl.BlockSpec((1, k_tile), lambda k: (0, k)),
            # w2 streamed in K-chunks: double-buffered DMA overlaps compute,
            # and only one ~1.5 MB chunk (x2 buffers) is VMEM-resident.
            pl.BlockSpec((k_tile, nin), lambda k: (k, 0)),
            pl.BlockSpec((1, nin), lambda k: (0, 0)),
        ],
        # Output block constant across K -> VMEM-resident, written back once.
        out_specs=pl.BlockSpec((B, nin), lambda k: (0, 0)),
        scratch_shapes=[pltpu.VMEM((B, nin), jnp.float32)],
        compiler_params=pltpu.CompilerParams(
            # K is a reduction axis into a resident accumulator.
            dimension_semantics=("arbitrary",)
        ),
        cost_estimate=pl.CostEstimate(
            flops=flops,
            transcendentals=B * nin,          # tanh
            bytes_accessed=bytes_accessed,
        ),
    )(z, w1p, b1p, w2p, b2)


if __name__ == "__main__":
    # Shapes exactly as the module spec implies:
    #   nz = 2 (latent), nh3 = 28*28*5 = 3920, nin = 28*28 = 784.
    NZ, NH3, NIN = 2, 28 * 28 * 5, 28 * 28
    B = 64
    K_TILE = 1024

    key = jax.random.PRNGKey(0)
    kz, kw1, kb1, kw2, kb2 = jax.random.split(key, 5)

    # Deterministic parameter init (mimics nn.Linear uniform(-1/sqrt(fan_in), ...))
    lim1 = 1.0 / jnp.sqrt(float(NZ))
    lim2 = 1.0 / jnp.sqrt(float(NH3))
    w1 = jax.random.uniform(kw1, (NZ, NH3), jnp.float32, -lim1, lim1)
    b1 = jax.random.uniform(kb1, (1, NH3), jnp.float32, -lim1, lim1)
    w2 = jax.random.uniform(kw2, (NH3, NIN), jnp.float32, -lim2, lim2)
    b2 = jax.random.uniform(kb2, (1, NIN), jnp.float32, -lim2, lim2)

    z = jax.random.normal(kz, (B, NZ), jnp.float32)

    # One-time param prep (padding + bf16 cast of the big weight).
    w1p, b1p, w2p, b2p = prepare_decoder_params(w1, b1, w2, b2, k_tile=K_TILE)

    out = decoder_forward(z, w1p, b1p, w2p, b2p, k_tile=K_TILE)
    out = jax.block_until_ready(out)

    # Pure-f32 reference matching the original PyTorch Decoder numerics.
    ref = jnp.tanh(jnp.maximum(z @ w1 + b1, 0.0) @ w2 + b2)

    assert out.shape == (B, NIN)
    max_err = float(jnp.max(jnp.abs(out - ref)))
    assert max_err < 2e-2, f"mismatch vs f32 reference: max_err={max_err}"

    print("KERNEL_OK")
</pallas_src>

<mosaic_0001>
module attributes {stable_mosaic.version = 11 : i64} {
  func.func @decoder_kernel(%arg0: i32, %arg1: memref<64x2xf32, #tpu.memory_space<vmem>>, %arg2: memref<2x1024xf32, #tpu.memory_space<vmem>>, %arg3: memref<1x1024xf32, #tpu.memory_space<vmem>>, %arg4: memref<1024x784xbf16, #tpu.memory_space<vmem>>, %arg5: memref<1x784xf32, #tpu.memory_space<vmem>>, %arg6: memref<64x784xf32, #tpu.memory_space<vmem>>, %arg7: memref<64x784xf32, #tpu.memory_space<vmem>>) attributes {dimension_semantics = [#tpu.dimension_semantics<arbitrary>], iteration_bounds = array<i64: 4>, scalar_prefetch = 0 : i64, scratch_operands = 1 : i64, tpu.core_type = #tpu.core_type<tc>, window_params = [{pipeline_mode = #tpu.pipeline_mode<synchronous>, transform_indices = @transform_0, window_bounds = array<i64: 64, 2>}, {transform_indices = @transform_1, window_bounds = array<i64: 2, 1024>}, {transform_indices = @transform_2, window_bounds = array<i64: 1, 1024>}, {transform_indices = @transform_3, window_bounds = array<i64: 1024, 784>}, {pipeline_mode = #tpu.pipeline_mode<synchronous>, transform_indices = @transform_4, window_bounds = array<i64: 1, 784>}, {pipeline_mode = #tpu.pipeline_mode<synchronous>, transform_indices = @transform_5, window_bounds = array<i64: 64, 784>}]} {
    %c0 = arith.constant 0 : index
    %c0_0 = arith.constant 0 : index
    %0 = vector.load %arg1[%c0, %c0_0] : memref<64x2xf32, #tpu.memory_space<vmem>>, vector<64x2xf32>
    %c0_1 = arith.constant 0 : index
    %c0_2 = arith.constant 0 : index
    %1 = vector.load %arg3[%c0_1, %c0_2] : memref<1x1024xf32, #tpu.memory_space<vmem>>, vector<1x1024xf32>
    %2 = vector.extract_strided_slice %0 {offsets = [0, 0], sizes = [64, 1], strides = [1, 1]} : vector<64x2xf32> to vector<64x1xf32>
    %c0_3 = arith.constant 0 : index
    %c0_4 = arith.constant 0 : index
    %3 = vector.load %arg2[%c0_3, %c0_4] : memref<2x1024xf32, #tpu.memory_space<vmem>>, vector<1x1024xf32>
    %4 = vector.broadcast %2 : vector<64x1xf32> to vector<64x1024xf32>
    %5 = vector.broadcast %3 : vector<1x1024xf32> to vector<64x1024xf32>
    %6 = arith.mulf %4, %5 : vector<64x1024xf32>
    %7 = vector.broadcast %1 : vector<1x1024xf32> to vector<64x1024xf32>
    %8 = arith.addf %7, %6 : vector<64x1024xf32>
    %9 = vector.extract_strided_slice %0 {offsets = [0, 1], sizes = [64, 1], strides = [1, 1]} : vector<64x2xf32> to vector<64x1xf32>
    %c1 = arith.constant 1 : index
    %c0_5 = arith.constant 0 : index
    %10 = vector.load %arg2[%c1, %c0_5] : memref<2x1024xf32, #tpu.memory_space<vmem>>, vector<1x1024xf32>
    %11 = vector.broadcast %9 : vector<64x1xf32> to vector<64x1024xf32>
    %12 = vector.broadcast %10 : vector<1x1024xf32> to vector<64x1024xf32>
    %13 = arith.mulf %11, %12 : vector<64x1024xf32>
    %14 = arith.addf %8, %13 : vector<64x1024xf32>
    %cst = arith.constant 0.000000e+00 : f32
    %15 = vector.broadcast %cst : f32 to vector<64x1024xf32>
    %16 = arith.maximumf %14, %15 : vector<64x1024xf32>
    %c0_i32 = arith.constant 0 : i32
    %17 = arith.cmpi eq, %arg0, %c0_i32 : i32
    %18 = arith.extui %17 : i1 to i32
    %c0_i32_6 = arith.constant 0 : i32
    %19 = arith.cmpi ne, %18, %c0_i32_6 : i32
    scf.if %19 {
      %cst_15 = arith.constant 0.000000e+00 : f32
      %29 = vector.broadcast %cst_15 : f32 to vector<64x784xf32>
      %c0_16 = arith.constant 0 : index
      %c0_17 = arith.constant 0 : index
      %30 = vector.load %arg7[%c0_16, %c0_17] : memref<64x784xf32, #tpu.memory_space<vmem>>, vector<64x784xf32>
      tpu.vector_store %arg7[%c0_16, %c0_17], %29 {strides = array<i32>} : memref<64x784xf32, #tpu.memory_space<vmem>>, vector<64x784xf32>,
    } else {
    }
    %c0_7 = arith.constant 0 : index
    %c0_8 = arith.constant 0 : index
    %20 = vector.load %arg7[%c0_7, %c0_8] : memref<64x784xf32, #tpu.memory_space<vmem>>, vector<64x784xf32>
    %21 = arith.truncf %16 : vector<64x1024xf32> to vector<64x1024xbf16>
    %c0_9 = arith.constant 0 : index
    %c0_10 = arith.constant 0 : index
    %22 = vector.load %arg4[%c0_9, %c0_10] : memref<1024x784xbf16, #tpu.memory_space<vmem>>, vector<1024x784xbf16>
    %cst_11 = arith.constant dense<0.000000e+00> : vector<64x784xf32>
    %23 = tpu.matmul %21, %22, %cst_11 {dimension_numbers = #tpu.dot_dimension_numbers<[1], [0], [0], [1], [0, 0, 1, 1], [], []>} : vector<64x1024xbf16>, vector<1024x784xbf16>, vector<64x784xf32> -> vector<64x784xf32>
    %24 = arith.addf %20, %23 : vector<64x784xf32>
    %c0_12 = arith.constant 0 : index
    %c0_13 = arith.constant 0 : index
    %25 = vector.load %arg7[%c0_12, %c0_13] : memref<64x784xf32, #tpu.memory_space<vmem>>, vector<64x784xf32>
    tpu.vector_store %arg7[%c0_12, %c0_13], %24 {strides = array<i32>} : memref<64x784xf32, #tpu.memory_space<vmem>>, vector<64x784xf32>,
    %c3_i32 = arith.constant 3 : i32
    %26 = arith.cmpi eq, %arg0, %c3_i32 : i32
    %27 = arith.extui %26 : i1 to i32
    %c0_i32_14 = arith.constant 0 : i32
    %28 = arith.cmpi ne, %27, %c0_i32_14 : i32
    scf.if %28 {
      %c0_15 = arith.constant 0 : index
      %c0_16 = arith.constant 0 : index
      %29 = vector.load %arg7[%c0_15, %c0_16] : memref<64x784xf32, #tpu.memory_space<vmem>>, vector<64x784xf32>
      %c0_17 = arith.constant 0 : index
      %c0_18 = arith.constant 0 : index
      %30 = vector.load %arg5[%c0_17, %c0_18] : memref<1x784xf32, #tpu.memory_space<vmem>>, vector<1x784xf32>
      %31 = vector.broadcast %30 : vector<1x784xf32> to vector<64x784xf32>
      %32 = arith.addf %29, %31 : vector<64x784xf32>
      %33 = math.tanh %32 : vector<64x784xf32>
      %c0_19 = arith.constant 0 : index
      %c0_20 = arith.constant 0 : index
      %34 = vector.load %arg6[%c0_19, %c0_20] : memref<64x784xf32, #tpu.memory_space<vmem>>, vector<64x784xf32>
      tpu.vector_store %arg6[%c0_19, %c0_20], %33 {strides = array<i32>} : memref<64x784xf32, #tpu.memory_space<vmem>>, vector<64x784xf32>,
    } else {
    }
    return
  }
  func.func @transform_0(%arg0: i32) -> (i32, i32) {
    %c0_i32 = arith.constant 0 : i32
    %c0_i32_0 = arith.constant 0 : i32
    %c0_i32_1 = arith.constant 0 : i32
    return %c0_i32, %c0_i32_0 : i32, i32
  }
  func.func @transform_1(%arg0: i32) -> (i32, i32) {
    %c0_i32 = arith.constant 0 : i32
    %c0_i32_0 = arith.constant 0 : i32
    return %c0_i32, %arg0 : i32, i32
  }
  func.func @transform_2(%arg0: i32) -> (i32, i32) {
    %c0_i32 = arith.constant 0 : i32
    %c0_i32_0 = arith.constant 0 : i32
    return %c0_i32, %arg0 : i32, i32
  }
  func.func @transform_3(%arg0: i32) -> (i32, i32) {
    %c0_i32 = arith.constant 0 : i32
    %c0_i32_0 = arith.constant 0 : i32
    return %arg0, %c0_i32 : i32, i32
  }
  func.func @transform_4(%arg0: i32) -> (i32, i32) {
    %c0_i32 = arith.constant 0 : i32
    %c0_i32_0 = arith.constant 0 : i32
    %c0_i32_1 = arith.constant 0 : i32
    return %c0_i32, %c0_i32_0 : i32, i32
  }
  func.func @transform_5(%arg0: i32) -> (i32, i32) {
    %c0_i32 = arith.constant 0 : i32
    %c0_i32_0 = arith.constant 0 : i32
    %c0_i32_1 = arith.constant 0 : i32
    return %c0_i32, %c0_i32_0 : i32, i32
  }
}

</mosaic_0001>

<llo_original>
// kernel: decoder_forward.1
$region0: #{decoder_forward.1}
  #allocation0 [shape = 'u32[]', space=smem, size = 0x4, offset = 0x4, fixed_abs, tag = 'smem constant byte address 0x4 - core index']
  #allocation1 [shape = 'u32[144,128]{1,0:T(1,128)}', space=vmem, size = 0x12000, scoped, tag = 'internal scratch']
  #allocation2 [shape = 'f32[64,784]{1,0:T(8,128)}', space=vmem, size = 0x38000, scoped, tag = 'scratch operand']
  %s0 = inlined_call_operand.vmem [shape: f32[64,2], index: 0, kind: input, shape index: {}]
  %s1 = inlined_call_operand.vmem [shape: f32[2,4096], index: 1, kind: input, shape index: {}]
  %s2 = inlined_call_operand.vmem [shape: f32[1,4096], index: 2, kind: input, shape index: {}]
  %s3 = inlined_call_operand.vmem [shape: bf16[4096,784], index: 3, kind: input, shape index: {}]
  %s4 = inlined_call_operand.vmem [shape: f32[1,784], index: 4, kind: input, shape index: {}]
  %s5 = inlined_call_operand.hbm [shape: f32[64,784], index: 5, kind: output, shape index: {}]
  %s6 = sld [smem:[#allocation0]]
  $region61: #{decoder_forward.1} parent=0
    _
  %s8 = ssub.s32 1, %s6
  %s9 = scalar_select 0, %s8, %s6
  $region1: #{decoder_forward.1} parent=0
    #allocation3 [shape = 'u8[229376]{0}', space=vmem, size = 0x38000, scoped, tag = 'output window, operand 0, single buffered']
    #allocation4 [shape = 's32[2]{0}', space=sflag, size = 0x8, scoped, tag = 'scoped memory for decoder_forward.1']
    %10 = vsyncpa [#allocation4], 0
    loop: start=0, step=1, limit=6
    $region2: #{decoder_forward.1} parent=1 // loop_pre_header
      _
    $region3: #{decoder_forward.1} parent=1 // loop_header
      %s12 = sphi 0, %s16
      %p13 = scmp.ge.s32.totalorder %s12, 6
      %s20 = sphi 0, %s20
      %s22 = sphi 0, %s20
      %s23 = sphi 0, %s22
      %s37 = sphi 0, %s23
      %s43 = sphi 0, %s45
      %s46 = sphi 0, %s43
      %s47 = sphi 0, %s46
      %s63 = sphi 0, %s47
      %s69 = sphi 0, %s71
      %s72 = sphi 0, %s69
      %s73 = sphi 0, %s72
      %s89 = sphi 0, %s73
      %s95 = sphi 0, %s97
      %s98 = sphi 0, %s95
      %s99 = sphi 0, %s98
      %s115 = sphi 0, %s99
      %s119 = sphi 0, %s119
      %s121 = sphi 0, %s119
      %s122 = sphi 0, %s121
      %s136 = sphi 0, %s122
      %s140 = sphi 0, %s140
      %s142 = sphi 0, %s140
      %s143 = sphi 0, %s142
      %s157 = sphi 0, %s143
    $region4: #{decoder_forward.1} parent=1 // loop_header_branch
      %15 = sbr.rel (%p13) target = $region8
    $region5: #{decoder_forward.1} parent=1 // loop_body
      %s17 = ssub.s32 %s12, 1
      %s18 = ssub.s32 %s12, 2
      %s19 = sadd.s32 %s12, 1
      %s21 = sadd.s32 %s20, 1
      %p24 = scmp.eq.s32.totalorder %s12, 3
      %p25 = scmp.ne.s32.totalorder %s20, %s22
      %p26 = scmp.eq.s32.totalorder %s12, 0
      %p27 = por %p25, %p26
      %p28 = scmp.ne.s32.totalorder %s20, %s22
      %p29 = scmp.eq.s32.totalorder %s17, 3
      %p30 = por %p28, %p29
      %p31 = scmp.ne.s32.totalorder %s22, %s23
      %p32 = scmp.eq.s32.totalorder %s17, 0
      %p33 = por %p31, %p32
      %p34 = scmp.ne.s32.totalorder %s22, %s23
      %p35 = scmp.eq.s32.totalorder %s18, 3
      %p36 = por %p34, %p35
      %p38 = scmp.ne.s32.totalorder %s23, %s37
      %p39 = scmp.eq.s32.totalorder %s18, 0
      %p40 = por %p38, %p39
      %s41 = ssub.s32 %s12, %s19
      %p42 = scmp.eq.s32.totalorder %s41, 0
      %s44 = sadd.s32 %s43, 1
      %s45 = scalar_select %p42, %s43, %s44
      %p48 = pneg %p42
      %p49 = scmp.eq.s32.totalorder %s12, 3
      %p50 = por %p48, %p49
      %p51 = scmp.ne.s32.totalorder %s43, %s46
      %p52 = scmp.eq.s32.totalorder %s12, 0
      %p53 = por %p51, %p52
      %p54 = scmp.ne.s32.totalorder %s43, %s46
      %p55 = scmp.eq.s32.totalorder %s17, 3
      %p56 = por %p54, %p55
      %p57 = scmp.ne.s32.totalorder %s46, %s47
      %p58 = scmp.eq.s32.totalorder %s17, 0
      %p59 = por %p57, %p58
      %p60 = scmp.ne.s32.totalorder %s46, %s47
      %p61 = scmp.eq.s32.totalorder %s18, 3
      %p62 = por %p60, %p61
      %p64 = scmp.ne.s32.totalorder %s47, %s63
      %p65 = scmp.eq.s32.totalorder %s18, 0
      %p66 = por %p64, %p65
      %s67 = ssub.s32 %s12, %s19
      %p68 = scmp.eq.s32.totalorder %s67, 0
      %s70 = sadd.s32 %s69, 1
      %s71 = scalar_select %p68, %s69, %s70
      %p74 = pneg %p68
      %p75 = scmp.eq.s32.totalorder %s12, 3
      %p76 = por %p74, %p75
      %p77 = scmp.ne.s32.totalorder %s69, %s72
      %p78 = scmp.eq.s32.totalorder %s12, 0
      %p79 = por %p77, %p78
      %p80 = scmp.ne.s32.totalorder %s69, %s72
      %p81 = scmp.eq.s32.totalorder %s17, 3
      %p82 = por %p80, %p81
      %p83 = scmp.ne.s32.totalorder %s72, %s73
      %p84 = scmp.eq.s32.totalorder %s17, 0
      %p85 = por %p83, %p84
      %p86 = scmp.ne.s32.totalorder %s72, %s73
      %p87 = scmp.eq.s32.totalorder %s18, 3
      %p88 = por %p86, %p87
      %p90 = scmp.ne.s32.totalorder %s73, %s89
      %p91 = scmp.eq.s32.totalorder %s18, 0
      %p92 = por %p90, %p91
      %s93 = ssub.s32 %s12, %s19
      %p94 = scmp.eq.s32.totalorder %s93, 0
      %s96 = sadd.s32 %s95, 1
      %s97 = scalar_select %p94, %s95, %s96
      %p100 = pneg %p94
      %p101 = scmp.eq.s32.totalorder %s12, 3
      %p102 = por %p100, %p101
      %p103 = scmp.ne.s32.totalorder %s95, %s98
      %p104 = scmp.eq.s32.totalorder %s12, 0
      %p105 = por %p103, %p104
      %p106 = scmp.ne.s32.totalorder %s95, %s98
      %p107 = scmp.eq.s32.totalorder %s17, 3
      %p108 = por %p106, %p107
      %p109 = scmp.ne.s32.totalorder %s98, %s99
      %p110 = scmp.eq.s32.totalorder %s17, 0
      %p111 = por %p109, %p110
      %p112 = scmp.ne.s32.totalorder %s98, %s99
      %p113 = scmp.eq.s32.totalorder %s18, 3
      %p114 = por %p112, %p113
      %p116 = scmp.ne.s32.totalorder %s99, %s115
      %p117 = scmp.eq.s32.totalorder %s18, 0
      %p118 = por %p116, %p117
      %s120 = sadd.s32 %s119, 1
      %p123 = scmp.eq.s32.totalorder %s12, 3
      %p124 = scmp.ne.s32.totalorder %s119, %s121
      %p125 = scmp.eq.s32.totalorder %s12, 0
      %p126 = por %p124, %p125
      %p127 = scmp.ne.s32.totalorder %s119, %s121
      %p128 = scmp.eq.s32.totalorder %s17, 3
      %p129 = por %p127, %p128
      %p130 = scmp.ne.s32.totalorder %s121, %s122
      %p131 = scmp.eq.s32.totalorder %s17, 0
      %p132 = por %p130, %p131
      %p133 = scmp.ne.s32.totalorder %s121, %s122
      %p134 = scmp.eq.s32.totalorder %s18, 3
      %p135 = por %p133, %p134
      %p137 = scmp.ne.s32.totalorder %s122, %s136
      %p138 = scmp.eq.s32.totalorder %s18, 0
      %p139 = por %p137, %p138
      %s141 = sadd.s32 %s140, 1
      %p144 = scmp.eq.s32.totalorder %s12, 3
      %p145 = scmp.ne.s32.totalorder %s140, %s142
      %p146 = scmp.eq.s32.totalorder %s12, 0
      %p147 = por %p145, %p146
      %p148 = scmp.ne.s32.totalorder %s140, %s142
      %p149 = scmp.eq.s32.totalorder %s17, 3
      %p150 = por %p148, %p149
      %p151 = scmp.ne.s32.totalorder %s142, %s143
      %p152 = scmp.eq.s32.totalorder %s17, 0
      %p153 = por %p151, %p152
      %p154 = scmp.ne.s32.totalorder %s142, %s143
      %p155 = scmp.eq.s32.totalorder %s18, 3
      %p156 = por %p154, %p155
      %p158 = scmp.ne.s32.totalorder %s143, %s157
      %p159 = scmp.eq.s32.totalorder %s18, 0
      %p160 = por %p158, %p159
      %p161 = scmp.le.s32.totalorder 1, %s12
      %p162 = scmp.lt.s32.totalorder %s12, 5
      %p163 = pnand %p161, %p162
      %p164 = pneg %p163
      // Predicated region
      $region9: #{decoder_forward.1} parent=5 // pred_check
        _
      $region10: #{decoder_forward.1} parent=5 // pred_check_branch
        %166 = sbr.rel (%p163) target = $region12
      $region11: #{decoder_forward.1} parent=5 // pred_region
        %s167 = ssub.s32 %s12, 1
        // Predicated region
        $region13: #{decoder_forward.1} parent=11 // pred_check
          %p168 = pneg %p33
        $region14: #{decoder_forward.1} parent=11 // pred_check_branch
          %170 = sbr.rel (%p168) target = $region16
        $region15: #{decoder_forward.1} parent=11 // pred_region
          _
        $region16: #{decoder_forward.1} parent=11 // pred_fallthru
          _
        // Predicated region
        $region17: #{decoder_forward.1} parent=11 // pred_check
          %p171 = pneg %p132
        $region18: #{decoder_forward.1} parent=11 // pred_check_branch
          %173 = sbr.rel (%p171) target = $region20
        $region19: #{decoder_forward.1} parent=11 // pred_region
          _
        $region20: #{decoder_forward.1} parent=11 // pred_fallthru
          _
      $region12: #{decoder_forward.1} parent=5 // pred_fallthru
        _
      %p174 = scmp.lt.s32.totalorder %s12, 4
      // Predicated region
      $region21: #{decoder_forward.1} parent=5 // pred_check
        %p175 = pneg %p174
      $region22: #{decoder_forward.1} parent=5 // pred_check_branch
        %177 = sbr.rel (%p175) target = $region24
      $region23: #{decoder_forward.1} parent=5 // pred_region
        // Predicated region
        $region25: #{decoder_forward.1} parent=23 // pred_check
          %p178 = pneg %p53
        $region26: #{decoder_forward.1} parent=23 // pred_check_branch
          %180 = sbr.rel (%p178) target = $region28
        $region27: #{decoder_forward.1} parent=23 // pred_region
          %s181 = smul.u32 8, %s12
          %p182 = scmp.lt.s32.totalorder %s181, 31
          %s183 = scalar_select %p182, %s181, 31
          %s184 = smul.addr %s183, 2
          %s185 = scalar_lea.vmem %s1, %s184
          %s186 = smul.u32 8, %s12
        $region28: #{decoder_forward.1} parent=23 // pred_fallthru
          _
        // Predicated region
        $region29: #{decoder_forward.1} parent=23 // pred_check
          %p187 = pneg %p79
        $region30: #{decoder_forward.1} parent=23 // pred_check_branch
          %189 = sbr.rel (%p187) target = $region32
        $region31: #{decoder_forward.1} parent=23 // pred_region
          %s190 = smul.u32 8, %s12
          %p191 = scmp.lt.s32.totalorder %s190, 31
          %s192 = scalar_select %p191, %s190, 31
          %s193 = scalar_lea.vmem %s2, %s192
          %s194 = smul.u32 8, %s12
        $region32: #{decoder_forward.1} parent=23 // pred_fallthru
          _
        // Predicated region
        $region33: #{decoder_forward.1} parent=23 // pred_check
          %p195 = pneg %p105
        $region34: #{decoder_forward.1} parent=23 // pred_check_branch
          %197 = sbr.rel (%p195) target = $region36
        $region35: #{decoder_forward.1} parent=23 // pred_region
          %s198 = smul.u32 128, %s12
          %p199 = scmp.lt.s32.totalorder %s198, 511
          %s200 = scalar_select %p199, %s198, 511
          %s201 = smul.addr %s200, 7
          %s202 = smul.addr %s201, 4
          %s203 = scalar_lea.vmem %s3, %s202
          %s204 = smul.u32 128, %s12
        $region36: #{decoder_forward.1} parent=23 // pred_fallthru
          _
      $region24: #{decoder_forward.1} parent=5 // pred_fallthru
        _
      %p205 = scmp.le.s32.totalorder 1, %s12
      %p206 = scmp.lt.s32.totalorder %s12, 5
      %p207 = pnand %p205, %p206
      %p208 = pneg %p207
      // Predicated region
      $region37: #{decoder_forward.1} parent=5 // pred_check
        _
      $region38: #{decoder_forward.1} parent=5 // pred_check_branch
        %210 = sbr.rel (%p207) target = $region40
      $region39: #{decoder_forward.1} parent=5 // pred_region
        %s211 = ssub.s32 %s12, 1
        %p212 = pneg %p33
        %p213 = pneg %p30
        %s214 = smul.u32 8, %s17
        %p215 = scmp.lt.s32.totalorder %s214, 31
        %s216 = scalar_select %p215, %s214, 31
        %s217 = smul.addr %s216, 2
        %s218 = scalar_lea.vmem %s1, %s217
        %p219 = pneg %p59
        %p220 = pneg %p56
        %s221 = smul.u32 8, %s17
        %p222 = scmp.lt.s32.totalorder %s221, 31
        %s223 = scalar_select %p222, %s221, 31
        %s224 = scalar_lea.vmem %s2, %s223
        %p225 = pneg %p85
        %p226 = pneg %p82
        %s227 = smul.u32 128, %s17
        %p228 = scmp.lt.s32.totalorder %s227, 511
        %s229 = scalar_select %p228, %s227, 511
        %s230 = smul.addr %s229, 7
        %s231 = smul.addr %s230, 4
        %s232 = scalar_lea.vmem %s3, %s231
        %p233 = pneg %p111
        %p234 = pneg %p108
        %p235 = pneg %p132
        %p236 = pneg %p129
        %p237 = pneg %p153
        %p238 = pneg %p150
        %s239 = smul.u32 8, %s17
        %p240 = scmp.lt.s32.totalorder %s239, 31
        %s241 = scalar_select %p240, %s239, 31
        %s242 = smul.addr %s241, 2
        %s243 = scalar_lea.vmem %s1, %s242
        %s244 = smul.u32 8, %s17
        %s245 = smul.u32 8, %s17
        %p246 = scmp.lt.s32.totalorder %s245, 31
        %s247 = scalar_select %p246, %s245, 31
        %s248 = scalar_lea.vmem %s2, %s247
        %s249 = smul.u32 8, %s17
        %s250 = smul.u32 128, %s17
        %p251 = scmp.lt.s32.totalorder %s250, 511
        %s252 = scalar_select %p251, %s250, 511
        %s253 = smul.addr %s252, 7
        %s254 = smul.addr %s253, 4
        %s255 = scalar_lea.vmem %s3, %s254
        %s256 = smul.u32 128, %s17
        %v258 = vld [vmem:[%s0] sm:$0xff]
        %v259 = vld [vmem:[%s0 + $0x8] sm:$0xff]
        %v260 = vld [vmem:[%s0 + $0x10] sm:$0xff]
        %v261 = vld [vmem:[%s0 + $0x18] sm:$0xff]
        %v262 = vld [vmem:[%s0 + $0x20] sm:$0xff]
        %v263 = vld [vmem:[%s0 + $0x28] sm:$0xff]
        %v264 = vld [vmem:[%s0 + $0x30] sm:$0xff]
        %v265 = vld [vmem:[%s0 + $0x38] sm:$0xff]
        %v266 = vld [vmem:[%s248] sm:$0xff]
        %v267 = vld [vmem:[%s243] ss:$2 sm:$0xff]
        %269 = vset.pattern.permute.xlu0 0
        %270 = vperm.xlu0 %269, %v258
        %v271 = vpop.permute.xlu0 %270
        %274 = vset.pattern.permute.xlu0 0
        %275 = vperm.xlu0 %274, %v259
        %v276 = vpop.permute.xlu0 %275
        %279 = vset.pattern.permute.xlu0 0
        %280 = vperm.xlu0 %279, %v260
        %v281 = vpop.permute.xlu0 %280
        %284 = vset.pattern.permute.xlu0 0
        %285 = vperm.xlu0 %284, %v261
        %v286 = vpop.permute.xlu0 %285
        %289 = vset.pattern.permute.xlu0 0
        %290 = vperm.xlu0 %289, %v262
        %v291 = vpop.permute.xlu0 %290
        %294 = vset.pattern.permute.xlu0 0
        %295 = vperm.xlu0 %294, %v263
        %v296 = vpop.permute.xlu0 %295
        %299 = vset.pattern.permute.xlu0 0
        %300 = vperm.xlu0 %299, %v264
        %v301 = vpop.permute.xlu0 %300
        %304 = vset.pattern.permute.xlu0 0
        %305 = vperm.xlu0 %304, %v265
        %v306 = vpop.permute.xlu0 %305
        %v309 = vlaneseq
        %v310 = vshrl.u32 %v309, 7
        %v311 = vsub.s32 0, %v310
        %v312 = vrot.slane %v267, %v311
        %v313 = vlaneseq
        %v314 = vshrl.u32 %v313, 7
        %v315 = vsub.s32 1, %v314
        %v316 = vrot.slane %v267, %v315
        %v317 = vlaneseq
        %v318 = vshrl.u32 %v317, 7
        %v319 = vsub.s32 2, %v318
        %v320 = vrot.slane %v267, %v319
        %v321 = vlaneseq
        %v322 = vshrl.u32 %v321, 7
        %v323 = vsub.s32 3, %v322
        %v324 = vrot.slane %v267, %v323
        %v325 = vlaneseq
        %v326 = vshrl.u32 %v325, 7
        %v327 = vsub.s32 4, %v326
        %v328 = vrot.slane %v267, %v327
        %v329 = vlaneseq
        %v330 = vshrl.u32 %v329, 7
        %v331 = vsub.s32 5, %v330
        %v332 = vrot.slane %v267, %v331
        %v333 = vlaneseq
        %v334 = vshrl.u32 %v333, 7
        %v335 = vsub.s32 6, %v334
        %v336 = vrot.slane %v267, %v335
        %v337 = vlaneseq
        %v338 = vshrl.u32 %v337, 7
        %v339 = vsub.s32 7, %v338
        %v340 = vrot.slane %v267, %v339
        %v349 = vmul.f32 %v271, %v312
        %v350 = vmul.f32 %v271, %v316
        %v351 = vmul.f32 %v271, %v320
        %v352 = vmul.f32 %v271, %v324
        %v353 = vmul.f32 %v271, %v328
        %v354 = vmul.f32 %v271, %v332
        %v355 = vmul.f32 %v271, %v336
        %v356 = vmul.f32 %v271, %v340
        %v357 = vmul.f32 %v276, %v312
        %v358 = vmul.f32 %v276, %v316
        %v359 = vmul.f32 %v276, %v320
        %v360 = vmul.f32 %v276, %v324
        %v361 = vmul.f32 %v276, %v328
        %v362 = vmul.f32 %v276, %v332
        %v363 = vmul.f32 %v276, %v336
        %v364 = vmul.f32 %v276, %v340
        %v365 = vmul.f32 %v281, %v312
        %v366 = vmul.f32 %v281, %v316
        %v367 = vmul.f32 %v281, %v320
        %v368 = vmul.f32 %v281, %v324
        %v369 = vmul.f32 %v281, %v328
        %v370 = vmul.f32 %v281, %v332
        %v371 = vmul.f32 %v281, %v336
        %v372 = vmul.f32 %v281, %v340
        %v373 = vmul.f32 %v286, %v312
        %v374 = vmul.f32 %v286, %v316
        %v375 = vmul.f32 %v286, %v320
        %v376 = vmul.f32 %v286, %v324
        %v377 = vmul.f32 %v286, %v328
        %v378 = vmul.f32 %v286, %v332
        %v379 = vmul.f32 %v286, %v336
        %v380 = vmul.f32 %v286, %v340
        %v381 = vmul.f32 %v291, %v312
        %v382 = vmul.f32 %v291, %v316
        %v383 = vmul.f32 %v291, %v320
        %v384 = vmul.f32 %v291, %v324
        %v385 = vmul.f32 %v291, %v328
        %v386 = vmul.f32 %v291, %v332
        %v387 = vmul.f32 %v291, %v336
        %v388 = vmul.f32 %v291, %v340
        %v389 = vmul.f32 %v296, %v312
        %v390 = vmul.f32 %v296, %v316
        %v391 = vmul.f32 %v296, %v320
        %v392 = vmul.f32 %v296, %v324
        %v393 = vmul.f32 %v296, %v328
        %v394 = vmul.f32 %v296, %v332
        %v395 = vmul.f32 %v296, %v336
        %v396 = vmul.f32 %v296, %v340
        %v397 = vmul.f32 %v301, %v312
        %v398 = vmul.f32 %v301, %v316
        %v399 = vmul.f32 %v301, %v320
        %v400 = vmul.f32 %v301, %v324
        %v401 = vmul.f32 %v301, %v328
        %v402 = vmul.f32 %v301, %v332
        %v403 = vmul.f32 %v301, %v336
        %v404 = vmul.f32 %v301, %v340
        %v405 = vmul.f32 %v306, %v312
        %v406 = vmul.f32 %v306, %v316
        %v407 = vmul.f32 %v306, %v320
        %v408 = vmul.f32 %v306, %v324
        %v409 = vmul.f32 %v306, %v328
        %v410 = vmul.f32 %v306, %v332
        %v411 = vmul.f32 %v306, %v336
        %v412 = vmul.f32 %v306, %v340
        %v414 = vlaneseq
        %v415 = vshrl.u32 %v414, 7
        %v416 = vsub.s32 0, %v415
        %v417 = vrot.slane %v266, %v416
        %v418 = vlaneseq
        %v419 = vshrl.u32 %v418, 7
        %v420 = vsub.s32 1, %v419
        %v421 = vrot.slane %v266, %v420
        %v422 = vlaneseq
        %v423 = vshrl.u32 %v422, 7
        %v424 = vsub.s32 2, %v423
        %v425 = vrot.slane %v266, %v424
        %v426 = vlaneseq
        %v427 = vshrl.u32 %v426, 7
        %v428 = vsub.s32 3, %v427
        %v429 = vrot.slane %v266, %v428
        %v430 = vlaneseq
        %v431 = vshrl.u32 %v430, 7
        %v432 = vsub.s32 4, %v431
        %v433 = vrot.slane %v266, %v432
        %v434 = vlaneseq
        %v435 = vshrl.u32 %v434, 7
        %v436 = vsub.s32 5, %v435
        %v437 = vrot.slane %v266, %v436
        %v438 = vlaneseq
        %v439 = vshrl.u32 %v438, 7
        %v440 = vsub.s32 6, %v439
        %v441 = vrot.slane %v266, %v440
        %v442 = vlaneseq
        %v443 = vshrl.u32 %v442, 7
        %v444 = vsub.s32 7, %v443
        %v445 = vrot.slane %v266, %v444
        %v454 = vadd.f32 %v417, %v349
        %v455 = vadd.f32 %v421, %v350
        %v456 = vadd.f32 %v425, %v351
        %v457 = vadd.f32 %v429, %v352
        %v458 = vadd.f32 %v433, %v353
        %v459 = vadd.f32 %v437, %v354
        %v460 = vadd.f32 %v441, %v355
        %v461 = vadd.f32 %v445, %v356
        %v462 = vadd.f32 %v417, %v357
        %v463 = vadd.f32 %v421, %v358
        %v464 = vadd.f32 %v425, %v359
        %v465 = vadd.f32 %v429, %v360
        %v466 = vadd.f32 %v433, %v361
        %v467 = vadd.f32 %v437, %v362
        %v468 = vadd.f32 %v441, %v363
        %v469 = vadd.f32 %v445, %v364
        %v470 = vadd.f32 %v417, %v365
        %v471 = vadd.f32 %v421, %v366
        %v472 = vadd.f32 %v425, %v367
        %v473 = vadd.f32 %v429, %v368
        %v474 = vadd.f32 %v433, %v369
        %v475 = vadd.f32 %v437, %v370
        %v476 = vadd.f32 %v441, %v371
        %v477 = vadd.f32 %v445, %v372
        %v478 = vadd.f32 %v417, %v373
        %v479 = vadd.f32 %v421, %v374
        %v480 = vadd.f32 %v425, %v375
        %v481 = vadd.f32 %v429, %v376
        %v482 = vadd.f32 %v433, %v377
        %v483 = vadd.f32 %v437, %v378
        %v484 = vadd.f32 %v441, %v379
        %v485 = vadd.f32 %v445, %v380
        %v486 = vadd.f32 %v417, %v381
        %v487 = vadd.f32 %v421, %v382
        %v488 = vadd.f32 %v425, %v383
        %v489 = vadd.f32 %v429, %v384
        %v490 = vadd.f32 %v433, %v385
        %v491 = vadd.f32 %v437, %v386
        %v492 = vadd.f32 %v441, %v387
        %v493 = vadd.f32 %v445, %v388
        %v494 = vadd.f32 %v417, %v389
        %v495 = vadd.f32 %v421, %v390
        %v496 = vadd.f32 %v425, %v391
        %v497 = vadd.f32 %v429, %v392
        %v498 = vadd.f32 %v433, %v393
        %v499 = vadd.f32 %v437, %v394
        %v500 = vadd.f32 %v441, %v395
        %v501 = vadd.f32 %v445, %v396
        %v502 = vadd.f32 %v417, %v397
        %v503 = vadd.f32 %v421, %v398
        %v504 = vadd.f32 %v425, %v399
        %v505 = vadd.f32 %v429, %v400
        %v506 = vadd.f32 %v433, %v401
        %v507 = vadd.f32 %v437, %v402
        %v508 = vadd.f32 %v441, %v403
        %v509 = vadd.f32 %v445, %v404
        %v510 = vadd.f32 %v417, %v405
        %v511 = vadd.f32 %v421, %v406
        %v512 = vadd.f32 %v425, %v407
        %v513 = vadd.f32 %v429, %v408
        %v514 = vadd.f32 %v433, %v409
        %v515 = vadd.f32 %v437, %v410
        %v516 = vadd.f32 %v441, %v411
        %v517 = vadd.f32 %v445, %v412
        %s518 = scalar_lea.vmem %s243, 1
        %v519 = vld [vmem:[%s518] ss:$2 sm:$0xff]
        %520 = vset.pattern.permute.xlu0 1
        %521 = vperm.xlu0 %520, %v258
        %v522 = vpop.permute.xlu0 %521
        %524 = vset.pattern.permute.xlu0 1
        %525 = vperm.xlu0 %524, %v259
        %v526 = vpop.permute.xlu0 %525
        %528 = vset.pattern.permute.xlu0 1
        %529 = vperm.xlu0 %528, %v260
        %v530 = vpop.permute.xlu0 %529
        %532 = vset.pattern.permute.xlu0 1
        %533 = vperm.xlu0 %532, %v261
        %v534 = vpop.permute.xlu0 %533
        %536 = vset.pattern.permute.xlu0 1
        %537 = vperm.xlu0 %536, %v262
        %v538 = vpop.permute.xlu0 %537
        %540 = vset.pattern.permute.xlu0 1
        %541 = vperm.xlu0 %540, %v263
        %v542 = vpop.permute.xlu0 %541
        %544 = vset.pattern.permute.xlu0 1
        %545 = vperm.xlu0 %544, %v264
        %v546 = vpop.permute.xlu0 %545
        %548 = vset.pattern.permute.xlu0 1
        %549 = vperm.xlu0 %548, %v265
        %v550 = vpop.permute.xlu0 %549
        %v553 = vlaneseq
        %v554 = vshrl.u32 %v553, 7
        %v555 = vsub.s32 0, %v554
        %v556 = vrot.slane %v519, %v555
        %v557 = vlaneseq
        %v558 = vshrl.u32 %v557, 7
        %v559 = vsub.s32 1, %v558
        %v560 = vrot.slane %v519, %v559
        %v561 = vlaneseq
        %v562 = vshrl.u32 %v561, 7
        %v563 = vsub.s32 2, %v562
        %v564 = vrot.slane %v519, %v563
        %v565 = vlaneseq
        %v566 = vshrl.u32 %v565, 7
        %v567 = vsub.s32 3, %v566
        %v568 = vrot.slane %v519, %v567
        %v569 = vlaneseq
        %v570 = vshrl.u32 %v569, 7
        %v571 = vsub.s32 4, %v570
        %v572 = vrot.slane %v519, %v571
        %v573 = vlaneseq
        %v574 = vshrl.u32 %v573, 7
        %v575 = vsub.s32 5, %v574
        %v576 = vrot.slane %v519, %v575
        %v577 = vlaneseq
        %v578 = vshrl.u32 %v577, 7
        %v579 = vsub.s32 6, %v578
        %v580 = vrot.slane %v519, %v579
        %v581 = vlaneseq
        %v582 = vshrl.u32 %v581, 7
        %v583 = vsub.s32 7, %v582
        %v584 = vrot.slane %v519, %v583
        %v593 = vmul.f32 %v522, %v556
        %v594 = vmul.f32 %v522, %v560
        %v595 = vmul.f32 %v522, %v564
        %v596 = vmul.f32 %v522, %v568
        %v597 = vmul.f32 %v522, %v572
        %v598 = vmul.f32 %v522, %v576
        %v599 = vmul.f32 %v522, %v580
        %v600 = vmul.f32 %v522, %v584
        %v601 = vmul.f32 %v526, %v556
        %v602 = vmul.f32 %v526, %v560
        %v603 = vmul.f32 %v526, %v564
        %v604 = vmul.f32 %v526, %v568
        %v605 = vmul.f32 %v526, %v572
        %v606 = vmul.f32 %v526, %v576
        %v607 = vmul.f32 %v526, %v580
        %v608 = vmul.f32 %v526, %v584
        %v609 = vmul.f32 %v530, %v556
        %v610 = vmul.f32 %v530, %v560
        %v611 = vmul.f32 %v530, %v564
        %v612 = vmul.f32 %v530, %v568
        %v613 = vmul.f32 %v530, %v572
        %v614 = vmul.f32 %v530, %v576
        %v615 = vmul.f32 %v530, %v580
        %v616 = vmul.f32 %v530, %v584
        %v617 = vmul.f32 %v534, %v556
        %v618 = vmul.f32 %v534, %v560
        %v619 = vmul.f32 %v534, %v564
        %v620 = vmul.f32 %v534, %v568
        %v621 = vmul.f32 %v534, %v572
        %v622 = vmul.f32 %v534, %v576
        %v623 = vmul.f32 %v534, %v580
        %v624 = vmul.f32 %v534, %v584
        %v625 = vmul.f32 %v538, %v556
        %v626 = vmul.f32 %v538, %v560
        %v627 = vmul.f32 %v538, %v564
        %v628 = vmul.f32 %v538, %v568
        %v629 = vmul.f32 %v538, %v572
        %v630 = vmul.f32 %v538, %v576
        %v631 = vmul.f32 %v538, %v580
        %v632 = vmul.f32 %v538, %v584
        %v633 = vmul.f32 %v542, %v556
        %v634 = vmul.f32 %v542, %v560
        %v635 = vmul.f32 %v542, %v564
        %v636 = vmul.f32 %v542, %v568
        %v637 = vmul.f32 %v542, %v572
        %v638 = vmul.f32 %v542, %v576
        %v639 = vmul.f32 %v542, %v580
        %v640 = vmul.f32 %v542, %v584
        %v641 = vmul.f32 %v546, %v556
        %v642 = vmul.f32 %v546, %v560
        %v643 = vmul.f32 %v546, %v564
        %v644 = vmul.f32 %v546, %v568
        %v645 = vmul.f32 %v546, %v572
        %v646 = vmul.f32 %v546, %v576
        %v647 = vmul.f32 %v546, %v580
        %v648 = vmul.f32 %v546, %v584
        %v649 = vmul.f32 %v550, %v556
        %v650 = vmul.f32 %v550, %v560
        %v651 = vmul.f32 %v550, %v564
        %v652 = vmul.f32 %v550, %v568
        %v653 = vmul.f32 %v550, %v572
        %v654 = vmul.f32 %v550, %v576
        %v655 = vmul.f32 %v550, %v580
        %v656 = vmul.f32 %v550, %v584
        %v657 = vadd.f32 %v454, %v593
        %v658 = vadd.f32 %v455, %v594
        %v659 = vadd.f32 %v456, %v595
        %v660 = vadd.f32 %v457, %v596
        %v661 = vadd.f32 %v458, %v597
        %v662 = vadd.f32 %v459, %v598
        %v663 = vadd.f32 %v460, %v599
        %v664 = vadd.f32 %v461, %v600
        %v665 = vadd.f32 %v462, %v601
        %v666 = vadd.f32 %v463, %v602
        %v667 = vadd.f32 %v464, %v603
        %v668 = vadd.f32 %v465, %v604
        %v669 = vadd.f32 %v466, %v605
        %v670 = vadd.f32 %v467, %v606
        %v671 = vadd.f32 %v468, %v607
        %v672 = vadd.f32 %v469, %v608
        %v673 = vadd.f32 %v470, %v609
        %v674 = vadd.f32 %v471, %v610
        %v675 = vadd.f32 %v472, %v611
        %v676 = vadd.f32 %v473, %v612
        %v677 = vadd.f32 %v474, %v613
        %v678 = vadd.f32 %v475, %v614
        %v679 = vadd.f32 %v476, %v615
        %v680 = vadd.f32 %v477, %v616
        %v681 = vadd.f32 %v478, %v617
        %v682 = vadd.f32 %v479, %v618
        %v683 = vadd.f32 %v480, %v619
        %v684 = vadd.f32 %v481, %v620
        %v685 = vadd.f32 %v482, %v621
        %v686 = vadd.f32 %v483, %v622
        %v687 = vadd.f32 %v484, %v623
        %v688 = vadd.f32 %v485, %v624
        %v689 = vadd.f32 %v486, %v625
        %v690 = vadd.f32 %v487, %v626
        %v691 = vadd.f32 %v488, %v627
        %v692 = vadd.f32 %v489, %v628
        %v693 = vadd.f32 %v490, %v629
        %v694 = vadd.f32 %v491, %v630
        %v695 = vadd.f32 %v492, %v631
        %v696 = vadd.f32 %v493, %v632
        %v697 = vadd.f32 %v494, %v633
        %v698 = vadd.f32 %v495, %v634
        %v699 = vadd.f32 %v496, %v635
        %v700 = vadd.f32 %v497, %v636
        %v701 = vadd.f32 %v498, %v637
        %v702 = vadd.f32 %v499, %v638
        %v703 = vadd.f32 %v500, %v639
        %v704 = vadd.f32 %v501, %v640
        %v705 = vadd.f32 %v502, %v641
        %v706 = vadd.f32 %v503, %v642
        %v707 = vadd.f32 %v504, %v643
        %v708 = vadd.f32 %v505, %v644
        %v709 = vadd.f32 %v506, %v645
        %v710 = vadd.f32 %v507, %v646
        %v711 = vadd.f32 %v508, %v647
        %v712 = vadd.f32 %v509, %v648
        %v713 = vadd.f32 %v510, %v649
        %v714 = vadd.f32 %v511, %v650
        %v715 = vadd.f32 %v512, %v651
        %v716 = vadd.f32 %v513, %v652
        %v717 = vadd.f32 %v514, %v653
        %v718 = vadd.f32 %v515, %v654
        %v719 = vadd.f32 %v516, %v655
        %v720 = vadd.f32 %v517, %v656
        %v721 = vmax.f32 %v657, 0.0
        %v722 = vmax.f32 %v658, 0.0
        %v723 = vmax.f32 %v659, 0.0
        %v724 = vmax.f32 %v660, 0.0
        %v725 = vmax.f32 %v661, 0.0
        %v726 = vmax.f32 %v662, 0.0
        %v727 = vmax.f32 %v663, 0.0
        %v728 = vmax.f32 %v664, 0.0
        %v729 = vmax.f32 %v665, 0.0
        %v730 = vmax.f32 %v666, 0.0
        %v731 = vmax.f32 %v667, 0.0
        %v732 = vmax.f32 %v668, 0.0
        %v733 = vmax.f32 %v669, 0.0
        %v734 = vmax.f32 %v670, 0.0
        %v735 = vmax.f32 %v671, 0.0
        %v736 = vmax.f32 %v672, 0.0
        %v737 = vmax.f32 %v673, 0.0
        %v738 = vmax.f32 %v674, 0.0
        %v739 = vmax.f32 %v675, 0.0
        %v740 = vmax.f32 %v676, 0.0
        %v741 = vmax.f32 %v677, 0.0
        %v742 = vmax.f32 %v678, 0.0
        %v743 = vmax.f32 %v679, 0.0
        %v744 = vmax.f32 %v680, 0.0
        %v745 = vmax.f32 %v681, 0.0
        %v746 = vmax.f32 %v682, 0.0
        %v747 = vmax.f32 %v683, 0.0
        %v748 = vmax.f32 %v684, 0.0
        %v749 = vmax.f32 %v685, 0.0
        %v750 = vmax.f32 %v686, 0.0
        %v751 = vmax.f32 %v687, 0.0
        %v752 = vmax.f32 %v688, 0.0
        %v753 = vmax.f32 %v689, 0.0
        %v754 = vmax.f32 %v690, 0.0
        %v755 = vmax.f32 %v691, 0.0
        %v756 = vmax.f32 %v692, 0.0
        %v757 = vmax.f32 %v693, 0.0
        %v758 = vmax.f32 %v694, 0.0
        %v759 = vmax.f32 %v695, 0.0
        %v760 = vmax.f32 %v696, 0.0
        %v761 = vmax.f32 %v697, 0.0
        %v762 = vmax.f32 %v698, 0.0
        %v763 = vmax.f32 %v699, 0.0
        %v764 = vmax.f32 %v700, 0.0
        %v765 = vmax.f32 %v701, 0.0
        %v766 = vmax.f32 %v702, 0.0
        %v767 = vmax.f32 %v703, 0.0
        %v768 = vmax.f32 %v704, 0.0
        %v769 = vmax.f32 %v705, 0.0
        %v770 = vmax.f32 %v706, 0.0
        %v771 = vmax.f32 %v707, 0.0
        %v772 = vmax.f32 %v708, 0.0
        %v773 = vmax.f32 %v709, 0.0
        %v774 = vmax.f32 %v710, 0.0
        %v775 = vmax.f32 %v711, 0.0
        %v776 = vmax.f32 %v712, 0.0
        %v777 = vmax.f32 %v713, 0.0
        %v778 = vmax.f32 %v714, 0.0
        %v779 = vmax.f32 %v715, 0.0
        %v780 = vmax.f32 %v716, 0.0
        %v781 = vmax.f32 %v717, 0.0
        %v782 = vmax.f32 %v718, 0.0
        %v783 = vmax.f32 %v719, 0.0
        %v784 = vmax.f32 %v720, 0.0
        %p785 = scmp.eq.s32.totalorder %s17, 0
        // Predicated region
        $region41: #{decoder_forward.1} parent=39 // pred_check
          %p786 = pneg %p785
        $region42: #{decoder_forward.1} parent=39 // pred_check_branch
          %788 = sbr.rel (%p786) target = $region44
        $region43: #{decoder_forward.1} parent=39 // pred_region
          %789 = vst [vmem:[#allocation2] sm:$0xff] 0.0
          %790 = vst [vmem:[#allocation2 + $0x8] sm:$0xff] 0.0
          %791 = vst [vmem:[#allocation2 + $0x10] sm:$0xff] 0.0
          %792 = vst [vmem:[#allocation2 + $0x18] sm:$0xff] 0.0
          %793 = vst [vmem:[#allocation2 + $0x20] sm:$0xff] 0.0
          %794 = vst [vmem:[#allocation2 + $0x28] sm:$0xff] 0.0
          %vm795 = vcmask 130048
          %796 = vst.msk [vmem:[#allocation2 + $0x30] sm:$0xff] %vm795, 0.0
          %797 = vst [vmem:[#allocation2 + $0x38] sm:$0xff] 0.0
          %798 = vst [vmem:[#allocation2 + $0x40] sm:$0xff] 0.0
          %799 = vst [vmem:[#allocation2 + $0x48] sm:$0xff] 0.0
          %800 = vst [vmem:[#allocation2 + $0x50] sm:$0xff] 0.0
          %801 = vst [vmem:[#allocation2 + $0x58] sm:$0xff] 0.0
          %802 = vst [vmem:[#allocation2 + $0x60] sm:$0xff] 0.0
          %803 = vst.msk [vmem:[#allocation2 + $0x68] sm:$0xff] %vm795, 0.0
          %804 = vst [vmem:[#allocation2 + $0x70] sm:$0xff] 0.0
          %805 = vst [vmem:[#allocation2 + $0x78] sm:$0xff] 0.0
          %806 = vst [vmem:[#allocation2 + $0x80] sm:$0xff] 0.0
          %807 = vst [vmem:[#allocation2 + $0x88] sm:$0xff] 0.0
          %808 = vst [vmem:[#allocation2 + $0x90] sm:$0xff] 0.0
          %809 = vst [vmem:[#allocation2 + $0x98] sm:$0xff] 0.0
          %810 = vst.msk [vmem:[#allocation2 + $0xa0] sm:$0xff] %vm795, 0.0
          %811 = vst [vmem:[#allocation2 + $0xa8] sm:$0xff] 0.0
          %812 = vst [vmem:[#allocation2 + $0xb0] sm:$0xff] 0.0
          %813 = vst [vmem:[#allocation2 + $0xb8] sm:$0xff] 0.0
          %814 = vst [vmem:[#allocation2 + $0xc0] sm:$0xff] 0.0
          %815 = vst [vmem:[#allocation2 + $0xc8] sm:$0xff] 0.0
          %816 = vst [vmem:[#allocation2 + $0xd0] sm:$0xff] 0.0
          %817 = vst.msk [vmem:[#allocation2 + $0xd8] sm:$0xff] %vm795, 0.0
          %818 = vst [vmem:[#allocation2 + $0xe0] sm:$0xff] 0.0
          %819 = vst [vmem:[#allocation2 + $0xe8] sm:$0xff] 0.0
          %820 = vst [vmem:[#allocation2 + $0xf0] sm:$0xff] 0.0
          %821 = vst [vmem:[#allocation2 + $0xf8] sm:$0xff] 0.0
          %822 = vst [vmem:[#allocation2 + $0x100] sm:$0xff] 0.0
          %823 = vst [vmem:[#allocation2 + $0x108] sm:$0xff] 0.0
          %824 = vst.msk [vmem:[#allocation2 + $0x110] sm:$0xff] %vm795, 0.0
          %825 = vst [vmem:[#allocation2 + $0x118] sm:$0xff] 0.0
          %826 = vst [vmem:[#allocation2 + $0x120] sm:$0xff] 0.0
          %827 = vst [vmem:[#allocation2 + $0x128] sm:$0xff] 0.0
          %828 = vst [vmem:[#allocation2 + $0x130] sm:$0xff] 0.0
          %829 = vst [vmem:[#allocation2 + $0x138] sm:$0xff] 0.0
          %830 = vst [vmem:[#allocation2 + $0x140] sm:$0xff] 0.0
          %831 = vst.msk [vmem:[#allocation2 + $0x148] sm:$0xff] %vm795, 0.0
          %832 = vst [vmem:[#allocation2 + $0x150] sm:$0xff] 0.0
          %833 = vst [vmem:[#allocation2 + $0x158] sm:$0xff] 0.0
          %834 = vst [vmem:[#allocation2 + $0x160] sm:$0xff] 0.0
          %835 = vst [vmem:[#allocation2 + $0x168] sm:$0xff] 0.0
          %836 = vst [vmem:[#allocation2 + $0x170] sm:$0xff] 0.0
          %837 = vst [vmem:[#allocation2 + $0x178] sm:$0xff] 0.0
          %838 = vst.msk [vmem:[#allocation2 + $0x180] sm:$0xff] %vm795, 0.0
          %839 = vst [vmem:[#allocation2 + $0x188] sm:$0xff] 0.0
          %840 = vst [vmem:[#allocation2 + $0x190] sm:$0xff] 0.0
          %841 = vst [vmem:[#allocation2 + $0x198] sm:$0xff] 0.0
          %842 = vst [vmem:[#allocation2 + $0x1a0] sm:$0xff] 0.0
          %843 = vst [vmem:[#allocation2 + $0x1a8] sm:$0xff] 0.0
          %844 = vst [vmem:[#allocation2 + $0x1b0] sm:$0xff] 0.0
          %845 = vst.msk [vmem:[#allocation2 + $0x1b8] sm:$0xff] %vm795, 0.0
        $region44: #{decoder_forward.1} parent=39 // pred_fallthru
          _
        %v846 = vld [vmem:[#allocation2] sm:$0xff]
        %v847 = vld [vmem:[#allocation2 + $0x8] sm:$0xff]
        %v848 = vld [vmem:[#allocation2 + $0x10] sm:$0xff]
        %v849 = vld [vmem:[#allocation2 + $0x18] sm:$0xff]
        %v850 = vld [vmem:[#allocation2 + $0x20] sm:$0xff]
        %v851 = vld [vmem:[#allocation2 + $0x28] sm:$0xff]
        %v852 = vld [vmem:[#allocation2 + $0x30] sm:$0xff]
        %v853 = vld [vmem:[#allocation2 + $0x38] sm:$0xff]
        %v854 = vld [vmem:[#allocation2 + $0x40] sm:$0xff]
        %v855 = vld [vmem:[#allocation2 + $0x48] sm:$0xff]
        %v856 = vld [vmem:[#allocation2 + $0x50] sm:$0xff]
        %v857 = vld [vmem:[#allocation2 + $0x58] sm:$0xff]
        %v858 = vld [vmem:[#allocation2 + $0x60] sm:$0xff]
        %v859 = vld [vmem:[#allocation2 + $0x68] sm:$0xff]
        %v860 = vld [vmem:[#allocation2 + $0x70] sm:$0xff]
        %v861 = vld [vmem:[#allocation2 + $0x78] sm:$0xff]
        %v862 = vld [vmem:[#allocation2 + $0x80] sm:$0xff]
        %v863 = vld [vmem:[#allocation2 + $0x88] sm:$0xff]
        %v864 = vld [vmem:[#allocation2 + $0x90] sm:$0xff]
        %v865 = vld [vmem:[#allocation2 + $0x98] sm:$0xff]
        %v866 = vld [vmem:[#allocation2 + $0xa0] sm:$0xff]
        %v867 = vld [vmem:[#allocation2 + $0xa8] sm:$0xff]
        %v868 = vld [vmem:[#allocation2 + $0xb0] sm:$0xff]
        %v869 = vld [vmem:[#allocation2 + $0xb8] sm:$0xff]
        %v870 = vld [vmem:[#allocation2 + $0xc0] sm:$0xff]
        %v871 = vld [vmem:[#allocation2 + $0xc8] sm:$0xff]
        %v872 = vld [vmem:[#allocation2 + $0xd0] sm:$0xff]
        %v873 = vld [vmem:[#allocation2 + $0xd8] sm:$0xff]
        %v874 = vld [vmem:[#allocation2 + $0xe0] sm:$0xff]
        %v875 = vld [vmem:[#allocation2 + $0xe8] sm:$0xff]
        %v876 = vld [vmem:[#allocation2 + $0xf0] sm:$0xff]
        %v877 = vld [vmem:[#allocation2 + $0xf8] sm:$0xff]
        %v878 = vld [vmem:[#allocation2 + $0x100] sm:$0xff]
        %v879 = vld [vmem:[#allocation2 + $0x108] sm:$0xff]
        %v880 = vld [vmem:[#allocation2 + $0x110] sm:$0xff]
        %v881 = vld [vmem:[#allocation2 + $0x118] sm:$0xff]
        %v882 = vld [vmem:[#allocation2 + $0x120] sm:$0xff]
        %v883 = vld [vmem:[#allocation2 + $0x128] sm:$0xff]
        %v884 = vld [vmem:[#allocation2 + $0x130] sm:$0xff]
        %v885 = vld [vmem:[#allocation2 + $0x138] sm:$0xff]
        %v886 = vld [vmem:[#allocation2 + $0x140] sm:$0xff]
        %v887 = vld [vmem:[#allocation2 + $0x148] sm:$0xff]
        %v888 = vld [vmem:[#allocation2 + $0x150] sm:$0xff]
        %v889 = vld [vmem:[#allocation2 + $0x158] sm:$0xff]
        %v890 = vld [vmem:[#allocation2 + $0x160] sm:$0xff]
        %v891 = vld [vmem:[#allocation2 + $0x168] sm:$0xff]
        %v892 = vld [vmem:[#allocation2 + $0x170] sm:$0xff]
        %v893 = vld [vmem:[#allocation2 + $0x178] sm:$0xff]
        %v894 = vld [vmem:[#allocation2 + $0x180] sm:$0xff]
        %v895 = vld [vmem:[#allocation2 + $0x188] sm:$0xff]
        %v896 = vld [vmem:[#allocation2 + $0x190] sm:$0xff]
        %v897 = vld [vmem:[#allocation2 + $0x198] sm:$0xff]
        %v898 = vld [vmem:[#allocation2 + $0x1a0] sm:$0xff]
        %v899 = vld [vmem:[#allocation2 + $0x1a8] sm:$0xff]
        %v900 = vld [vmem:[#allocation2 + $0x1b0] sm:$0xff]
        %v901 = vld [vmem:[#allocation2 + $0x1b8] sm:$0xff]
        %v902 = vpack.c.bf16 %v729, %v721
        %v903 = vpack.c.bf16 %v730, %v722
        %v904 = vpack.c.bf16 %v731, %v723
        %v905 = vpack.c.bf16 %v732, %v724
        %v906 = vpack.c.bf16 %v733, %v725
        %v907 = vpack.c.bf16 %v734, %v726
        %v908 = vpack.c.bf16 %v735, %v727
        %v909 = vpack.c.bf16 %v736, %v728
        %v910 = vpack.c.bf16 %v745, %v737
        %v911 = vpack.c.bf16 %v746, %v738
        %v912 = vpack.c.bf16 %v747, %v739
        %v913 = vpack.c.bf16 %v748, %v740
        %v914 = vpack.c.bf16 %v749, %v741
        %v915 = vpack.c.bf16 %v750, %v742
        %v916 = vpack.c.bf16 %v751, %v743
        %v917 = vpack.c.bf16 %v752, %v744
        %v918 = vpack.c.bf16 %v761, %v753
        %v919 = vpack.c.bf16 %v762, %v754
        %v920 = vpack.c.bf16 %v763, %v755
        %v921 = vpack.c.bf16 %v764, %v756
        %v922 = vpack.c.bf16 %v765, %v757
        %v923 = vpack.c.bf16 %v766, %v758
        %v924 = vpack.c.bf16 %v767, %v759
        %v925 = vpack.c.bf16 %v768, %v760
        %v926 = vpack.c.bf16 %v777, %v769
        %v927 = vpack.c.bf16 %v778, %v770
        %v928 = vpack.c.bf16 %v779, %v771
        %v929 = vpack.c.bf16 %v780, %v772
        %v930 = vpack.c.bf16 %v781, %v773
        %v931 = vpack.c.bf16 %v782, %v774
        %v932 = vpack.c.bf16 %v783, %v775
        %v933 = vpack.c.bf16 %v784, %v776
        %v934 = vld [vmem:[%s255] sm:$0xff]
        %v935 = vld [vmem:[%s255 + $0x8] sm:$0xff]
        %v936 = vld [vmem:[%s255 + $0x10] sm:$0xff]
        %v937 = vld [vmem:[%s255 + $0x18] sm:$0xf]
        %v938 = vld [vmem:[%s255 + $0x1c] sm:$0xff]
        %v939 = vld [vmem:[%s255 + $0x24] sm:$0xff]
        %v940 = vld [vmem:[%s255 + $0x2c] sm:$0xff]
        %v941 = vld [vmem:[%s255 + $0x34] sm:$0xf]
        %v942 = vld [vmem:[%s255 + $0x38] sm:$0xff]
        %v943 = vld [vmem:[%s255 + $0x40] sm:$0xff]
        %v944 = vld [vmem:[%s255 + $0x48] sm:$0xff]
        %v945 = vld [vmem:[%s255 + $0x50] sm:$0xf]
        %v946 = vld [vmem:[%s255 + $0x54] sm:$0xff]
        %v947 = vld [vmem:[%s255 + $0x5c] sm:$0xff]
        %v948 = vld [vmem:[%s255 + $0x64] sm:$0xff]
        %v949 = vld [vmem:[%s255 + $0x6c] sm:$0xf]
        %v950 = vld [vmem:[%s255 + $0x70] sm:$0xff]
        %v951 = vld [vmem:[%s255 + $0x78] sm:$0xff]
        %v952 = vld [vmem:[%s255 + $0x80] sm:$0xff]
        %v953 = vld [vmem:[%s255 + $0x88] sm:$0xf]
        %v954 = vld [vmem:[%s255 + $0x8c] sm:$0xff]
        %v955 = vld [vmem:[%s255 + $0x94] sm:$0xff]
        %v956 = vld [vmem:[%s255 + $0x9c] sm:$0xff]
        %v957 = vld [vmem:[%s255 + $0xa4] sm:$0xf]
        %v958 = vld [vmem:[%s255 + $0xa8] sm:$0xff]
        %v959 = vld [vmem:[%s255 + $0xb0] sm:$0xff]
        %v960 = vld [vmem:[%s255 + $0xb8] sm:$0xff]
        %v961 = vld [vmem:[%s255 + $0xc0] sm:$0xf]
        %v962 = vld [vmem:[%s255 + $0xc4] sm:$0xff]
        %v963 = vld [vmem:[%s255 + $0xcc] sm:$0xff]
        %v964 = vld [vmem:[%s255 + $0xd4] sm:$0xff]
        %v965 = vld [vmem:[%s255 + $0xdc] sm:$0xf]
        %v966 = vld [vmem:[%s255 + $0xe0] sm:$0xff]
        %v967 = vld [vmem:[%s255 + $0xe8] sm:$0xff]
        %v968 = vld [vmem:[%s255 + $0xf0] sm:$0xff]
        %v969 = vld [vmem:[%s255 + $0xf8] sm:$0xf]
        %v970 = vld [vmem:[%s255 + $0xfc] sm:$0xff]
        %v971 = vld [vmem:[%s255 + $0x104] sm:$0xff]
        %v972 = vld [vmem:[%s255 + $0x10c] sm:$0xff]
        %v973 = vld [vmem:[%s255 + $0x114] sm:$0xf]
        %v974 = vld [vmem:[%s255 + $0x118] sm:$0xff]
        %v975 = vld [vmem:[%s255 + $0x120] sm:$0xff]
        %v976 = vld [vmem:[%s255 + $0x128] sm:$0xff]
        %v977 = vld [vmem:[%s255 + $0x130] sm:$0xf]
        %v978 = vld [vmem:[%s255 + $0x134] sm:$0xff]
        %v979 = vld [vmem:[%s255 + $0x13c] sm:$0xff]
        %v980 = vld [vmem:[%s255 + $0x144] sm:$0xff]
        %v981 = vld [vmem:[%s255 + $0x14c] sm:$0xf]
        %v982 = vld [vmem:[%s255 + $0x150] sm:$0xff]
        %v983 = vld [vmem:[%s255 + $0x158] sm:$0xff]
        %v984 = vld [vmem:[%s255 + $0x160] sm:$0xff]
        %v985 = vld [vmem:[%s255 + $0x168] sm:$0xf]
        %v986 = vld [vmem:[%s255 + $0x16c] sm:$0xff]
        %v987 = vld [vmem:[%s255 + $0x174] sm:$0xff]
        %v988 = vld [vmem:[%s255 + $0x17c] sm:$0xff]
        %v989 = vld [vmem:[%s255 + $0x184] sm:$0xf]
        %v990 = vld [vmem:[%s255 + $0x188] sm:$0xff]
        %v991 = vld [vmem:[%s255 + $0x190] sm:$0xff]
        %v992 = vld [vmem:[%s255 + $0x198] sm:$0xff]
        %v993 = vld [vmem:[%s255 + $0x1a0] sm:$0xf]
        %v994 = vld [vmem:[%s255 + $0x1a4] sm:$0xff]
        %v995 = vld [vmem:[%s255 + $0x1ac] sm:$0xff]
        %v996 = vld [vmem:[%s255 + $0x1b4] sm:$0xff]
        %v997 = vld [vmem:[%s255 + $0x1bc] sm:$0xf]
        %v998 = vld [vmem:[%s255 + $0x1c0] sm:$0xff]
        %v999 = vld [vmem:[%s255 + $0x1c8] sm:$0xff]
        %v1000 = vld [vmem:[%s255 + $0x1d0] sm:$0xff]
        %v1001 = vld [vmem:[%s255 + $0x1d8] sm:$0xf]
        %v1002 = vld [vmem:[%s255 + $0x1dc] sm:$0xff]
        %v1003 = vld [vmem:[%s255 + $0x1e4] sm:$0xff]
        %v1004 = vld [vmem:[%s255 + $0x1ec] sm:$0xff]
        %v1005 = vld [vmem:[%s255 + $0x1f4] sm:$0xf]
        %v1006 = vld [vmem:[%s255 + $0x1f8] sm:$0xff]
        %v1007 = vld [vmem:[%s255 + $0x200] sm:$0xff]
        %v1008 = vld [vmem:[%s255 + $0x208] sm:$0xff]
        %v1009 = vld [vmem:[%s255 + $0x210] sm:$0xf]
        %v1010 = vld [vmem:[%s255 + $0x214] sm:$0xff]
        %v1011 = vld [vmem:[%s255 + $0x21c] sm:$0xff]
        %v1012 = vld [vmem:[%s255 + $0x224] sm:$0xff]
        %v1013 = vld [vmem:[%s255 + $0x22c] sm:$0xf]
        %v1014 = vld [vmem:[%s255 + $0x230] sm:$0xff]
        %v1015 = vld [vmem:[%s255 + $0x238] sm:$0xff]
        %v1016 = vld [vmem:[%s255 + $0x240] sm:$0xff]
        %v1017 = vld [vmem:[%s255 + $0x248] sm:$0xf]
        %v1018 = vld [vmem:[%s255 + $0x24c] sm:$0xff]
        %v1019 = vld [vmem:[%s255 + $0x254] sm:$0xff]
        %v1020 = vld [vmem:[%s255 + $0x25c] sm:$0xff]
        %v1021 = vld [vmem:[%s255 + $0x264] sm:$0xf]
        %v1022 = vld [vmem:[%s255 + $0x268] sm:$0xff]
        %v1023 = vld [vmem:[%s255 + $0x270] sm:$0xff]
        %v1024 = vld [vmem:[%s255 + $0x278] sm:$0xff]
        %v1025 = vld [vmem:[%s255 + $0x280] sm:$0xf]
        %v1026 = vld [vmem:[%s255 + $0x284] sm:$0xff]
        %v1027 = vld [vmem:[%s255 + $0x28c] sm:$0xff]
        %v1028 = vld [vmem:[%s255 + $0x294] sm:$0xff]
        %v1029 = vld [vmem:[%s255 + $0x29c] sm:$0xf]
        %v1030 = vld [vmem:[%s255 + $0x2a0] sm:$0xff]
        %v1031 = vld [vmem:[%s255 + $0x2a8] sm:$0xff]
        %v1032 = vld [vmem:[%s255 + $0x2b0] sm:$0xff]
        %v1033 = vld [vmem:[%s255 + $0x2b8] sm:$0xf]
        %v1034 = vld [vmem:[%s255 + $0x2bc] sm:$0xff]
        %v1035 = vld [vmem:[%s255 + $0x2c4] sm:$0xff]
        %v1036 = vld [vmem:[%s255 + $0x2cc] sm:$0xff]
        %v1037 = vld [vmem:[%s255 + $0x2d4] sm:$0xf]
        %v1038 = vld [vmem:[%s255 + $0x2d8] sm:$0xff]
        %v1039 = vld [vmem:[%s255 + $0x2e0] sm:$0xff]
        %v1040 = vld [vmem:[%s255 + $0x2e8] sm:$0xff]
        %v1041 = vld [vmem:[%s255 + $0x2f0] sm:$0xf]
        %v1042 = vld [vmem:[%s255 + $0x2f4] sm:$0xff]
        %v1043 = vld [vmem:[%s255 + $0x2fc] sm:$0xff]
        %v1044 = vld [vmem:[%s255 + $0x304] sm:$0xff]
        %v1045 = vld [vmem:[%s255 + $0x30c] sm:$0xf]
        %v1046 = vld [vmem:[%s255 + $0x310] sm:$0xff]
        %v1047 = vld [vmem:[%s255 + $0x318] sm:$0xff]
        %v1048 = vld [vmem:[%s255 + $0x320] sm:$0xff]
        %v1049 = vld [vmem:[%s255 + $0x328] sm:$0xf]
        %v1050 = vld [vmem:[%s255 + $0x32c] sm:$0xff]
        %v1051 = vld [vmem:[%s255 + $0x334] sm:$0xff]
        %v1052 = vld [vmem:[%s255 + $0x33c] sm:$0xff]
        %v1053 = vld [vmem:[%s255 + $0x344] sm:$0xf]
        %v1054 = vld [vmem:[%s255 + $0x348] sm:$0xff]
        %v1055 = vld [vmem:[%s255 + $0x350] sm:$0xff]
        %v1056 = vld [vmem:[%s255 + $0x358] sm:$0xff]
        %v1057 = vld [vmem:[%s255 + $0x360] sm:$0xf]
        %v1058 = vld [vmem:[%s255 + $0x364] sm:$0xff]
        %v1059 = vld [vmem:[%s255 + $0x36c] sm:$0xff]
        %v1060 = vld [vmem:[%s255 + $0x374] sm:$0xff]
        %v1061 = vld [vmem:[%s255 + $0x37c] sm:$0xf]
        %v1062 = vld [vmem:[%s255 + $0x380] sm:$0xff]
        %v1063 = vld [vmem:[%s255 + $0x388] sm:$0xff]
        %v1064 = vld [vmem:[%s255 + $0x390] sm:$0xff]
        %v1065 = vld [vmem:[%s255 + $0x398] sm:$0xf]
        %v1066 = vld [vmem:[%s255 + $0x39c] sm:$0xff]
        %v1067 = vld [vmem:[%s255 + $0x3a4] sm:$0xff]
        %v1068 = vld [vmem:[%s255 + $0x3ac] sm:$0xff]
        %v1069 = vld [vmem:[%s255 + $0x3b4] sm:$0xf]
        %v1070 = vld [vmem:[%s255 + $0x3b8] sm:$0xff]
        %v1071 = vld [vmem:[%s255 + $0x3c0] sm:$0xff]
        %v1072 = vld [vmem:[%s255 + $0x3c8] sm:$0xff]
        %v1073 = vld [vmem:[%s255 + $0x3d0] sm:$0xf]
        %v1074 = vld [vmem:[%s255 + $0x3d4] sm:$0xff]
        %v1075 = vld [vmem:[%s255 + $0x3dc] sm:$0xff]
        %v1076 = vld [vmem:[%s255 + $0x3e4] sm:$0xff]
        %v1077 = vld [vmem:[%s255 + $0x3ec] sm:$0xf]
        %v1078 = vld [vmem:[%s255 + $0x3f0] sm:$0xff]
        %v1079 = vld [vmem:[%s255 + $0x3f8] sm:$0xff]
        %v1080 = vld [vmem:[%s255 + $0x400] sm:$0xff]
        %v1081 = vld [vmem:[%s255 + $0x408] sm:$0xf]
        %v1082 = vld [vmem:[%s255 + $0x40c] sm:$0xff]
        %v1083 = vld [vmem:[%s255 + $0x414] sm:$0xff]
        %v1084 = vld [vmem:[%s255 + $0x41c] sm:$0xff]
        %v1085 = vld [vmem:[%s255 + $0x424] sm:$0xf]
        %v1086 = vld [vmem:[%s255 + $0x428] sm:$0xff]
        %v1087 = vld [vmem:[%s255 + $0x430] sm:$0xff]
        %v1088 = vld [vmem:[%s255 + $0x438] sm:$0xff]
        %v1089 = vld [vmem:[%s255 + $0x440] sm:$0xf]
        %v1090 = vld [vmem:[%s255 + $0x444] sm:$0xff]
        %v1091 = vld [vmem:[%s255 + $0x44c] sm:$0xff]
        %v1092 = vld [vmem:[%s255 + $0x454] sm:$0xff]
        %v1093 = vld [vmem:[%s255 + $0x45c] sm:$0xf]
        %v1094 = vld [vmem:[%s255 + $0x460] sm:$0xff]
        %v1095 = vld [vmem:[%s255 + $0x468] sm:$0xff]
        %v1096 = vld [vmem:[%s255 + $0x470] sm:$0xff]
        %v1097 = vld [vmem:[%s255 + $0x478] sm:$0xf]
        %v1098 = vld [vmem:[%s255 + $0x47c] sm:$0xff]
        %v1099 = vld [vmem:[%s255 + $0x484] sm:$0xff]
        %v1100 = vld [vmem:[%s255 + $0x48c] sm:$0xff]
        %v1101 = vld [vmem:[%s255 + $0x494] sm:$0xf]
        %v1102 = vld [vmem:[%s255 + $0x498] sm:$0xff]
        %v1103 = vld [vmem:[%s255 + $0x4a0] sm:$0xff]
        %v1104 = vld [vmem:[%s255 + $0x4a8] sm:$0xff]
        %v1105 = vld [vmem:[%s255 + $0x4b0] sm:$0xf]
        %v1106 = vld [vmem:[%s255 + $0x4b4] sm:$0xff]
        %v1107 = vld [vmem:[%s255 + $0x4bc] sm:$0xff]
        %v1108 = vld [vmem:[%s255 + $0x4c4] sm:$0xff]
        %v1109 = vld [vmem:[%s255 + $0x4cc] sm:$0xf]
        %v1110 = vld [vmem:[%s255 + $0x4d0] sm:$0xff]
        %v1111 = vld [vmem:[%s255 + $0x4d8] sm:$0xff]
        %v1112 = vld [vmem:[%s255 + $0x4e0] sm:$0xff]
        %v1113 = vld [vmem:[%s255 + $0x4e8] sm:$0xf]
        %v1114 = vld [vmem:[%s255 + $0x4ec] sm:$0xff]
        %v1115 = vld [vmem:[%s255 + $0x4f4] sm:$0xff]
        %v1116 = vld [vmem:[%s255 + $0x4fc] sm:$0xff]
        %v1117 = vld [vmem:[%s255 + $0x504] sm:$0xf]
        %v1118 = vld [vmem:[%s255 + $0x508] sm:$0xff]
        %v1119 = vld [vmem:[%s255 + $0x510] sm:$0xff]
        %v1120 = vld [vmem:[%s255 + $0x518] sm:$0xff]
        %v1121 = vld [vmem:[%s255 + $0x520] sm:$0xf]
        %v1122 = vld [vmem:[%s255 + $0x524] sm:$0xff]
        %v1123 = vld [vmem:[%s255 + $0x52c] sm:$0xff]
        %v1124 = vld [vmem:[%s255 + $0x534] sm:$0xff]
        %v1125 = vld [vmem:[%s255 + $0x53c] sm:$0xf]
        %v1126 = vld [vmem:[%s255 + $0x540] sm:$0xff]
        %v1127 = vld [vmem:[%s255 + $0x548] sm:$0xff]
        %v1128 = vld [vmem:[%s255 + $0x550] sm:$0xff]
        %v1129 = vld [vmem:[%s255 + $0x558] sm:$0xf]
        %v1130 = vld [vmem:[%s255 + $0x55c] sm:$0xff]
        %v1131 = vld [vmem:[%s255 + $0x564] sm:$0xff]
        %v1132 = vld [vmem:[%s255 + $0x56c] sm:$0xff]
        %v1133 = vld [vmem:[%s255 + $0x574] sm:$0xf]
        %v1134 = vld [vmem:[%s255 + $0x578] sm:$0xff]
        %v1135 = vld [vmem:[%s255 + $0x580] sm:$0xff]
        %v1136 = vld [vmem:[%s255 + $0x588] sm:$0xff]
        %v1137 = vld [vmem:[%s255 + $0x590] sm:$0xf]
        %v1138 = vld [vmem:[%s255 + $0x594] sm:$0xff]
        %v1139 = vld [vmem:[%s255 + $0x59c] sm:$0xff]
        %v1140 = vld [vmem:[%s255 + $0x5a4] sm:$0xff]
        %v1141 = vld [vmem:[%s255 + $0x5ac] sm:$0xf]
        %v1142 = vld [vmem:[%s255 + $0x5b0] sm:$0xff]
        %v1143 = vld [vmem:[%s255 + $0x5b8] sm:$0xff]
        %v1144 = vld [vmem:[%s255 + $0x5c0] sm:$0xff]
        %v1145 = vld [vmem:[%s255 + $0x5c8] sm:$0xf]
        %v1146 = vld [vmem:[%s255 + $0x5cc] sm:$0xff]
        %v1147 = vld [vmem:[%s255 + $0x5d4] sm:$0xff]
        %v1148 = vld [vmem:[%s255 + $0x5dc] sm:$0xff]
        %v1149 = vld [vmem:[%s255 + $0x5e4] sm:$0xf]
        %v1150 = vld [vmem:[%s255 + $0x5e8] sm:$0xff]
        %v1151 = vld [vmem:[%s255 + $0x5f0] sm:$0xff]
        %v1152 = vld [vmem:[%s255 + $0x5f8] sm:$0xff]
        %v1153 = vld [vmem:[%s255 + $0x600] sm:$0xf]
        %v1154 = vld [vmem:[%s255 + $0x604] sm:$0xff]
        %v1155 = vld [vmem:[%s255 + $0x60c] sm:$0xff]
        %v1156 = vld [vmem:[%s255 + $0x614] sm:$0xff]
        %v1157 = vld [vmem:[%s255 + $0x61c] sm:$0xf]
        %v1158 = vld [vmem:[%s255 + $0x620] sm:$0xff]
        %v1159 = vld [vmem:[%s255 + $0x628] sm:$0xff]
        %v1160 = vld [vmem:[%s255 + $0x630] sm:$0xff]
        %v1161 = vld [vmem:[%s255 + $0x638] sm:$0xf]
        %v1162 = vld [vmem:[%s255 + $0x63c] sm:$0xff]
        %v1163 = vld [vmem:[%s255 + $0x644] sm:$0xff]
        %v1164 = vld [vmem:[%s255 + $0x64c] sm:$0xff]
        %v1165 = vld [vmem:[%s255 + $0x654] sm:$0xf]
        %v1166 = vld [vmem:[%s255 + $0x658] sm:$0xff]
        %v1167 = vld [vmem:[%s255 + $0x660] sm:$0xff]
        %v1168 = vld [vmem:[%s255 + $0x668] sm:$0xff]
        %v1169 = vld [vmem:[%s255 + $0x670] sm:$0xf]
        %v1170 = vld [vmem:[%s255 + $0x674] sm:$0xff]
        %v1171 = vld [vmem:[%s255 + $0x67c] sm:$0xff]
        %v1172 = vld [vmem:[%s255 + $0x684] sm:$0xff]
        %v1173 = vld [vmem:[%s255 + $0x68c] sm:$0xf]
        %v1174 = vld [vmem:[%s255 + $0x690] sm:$0xff]
        %v1175 = vld [vmem:[%s255 + $0x698] sm:$0xff]
        %v1176 = vld [vmem:[%s255 + $0x6a0] sm:$0xff]
        %v1177 = vld [vmem:[%s255 + $0x6a8] sm:$0xf]
        %v1178 = vld [vmem:[%s255 + $0x6ac] sm:$0xff]
        %v1179 = vld [vmem:[%s255 + $0x6b4] sm:$0xff]
        %v1180 = vld [vmem:[%s255 + $0x6bc] sm:$0xff]
        %v1181 = vld [vmem:[%s255 + $0x6c4] sm:$0xf]
        %v1182 = vld [vmem:[%s255 + $0x6c8] sm:$0xff]
        %v1183 = vld [vmem:[%s255 + $0x6d0] sm:$0xff]
        %v1184 = vld [vmem:[%s255 + $0x6d8] sm:$0xff]
        %v1185 = vld [vmem:[%s255 + $0x6e0] sm:$0xf]
        %v1186 = vld [vmem:[%s255 + $0x6e4] sm:$0xff]
        %v1187 = vld [vmem:[%s255 + $0x6ec] sm:$0xff]
        %v1188 = vld [vmem:[%s255 + $0x6f4] sm:$0xff]
        %v1189 = vld [vmem:[%s255 + $0x6fc] sm:$0xf]
        %v1190 = vld [vmem:[%s255 + $0x700] sm:$0xff]
        %v1191 = vld [vmem:[%s255 + $0x708] sm:$0xff]
        %v1192 = vld [vmem:[%s255 + $0x710] sm:$0xff]
        %v1193 = vld [vmem:[%s255 + $0x718] sm:$0xf]
        %v1194 = vld [vmem:[%s255 + $0x71c] sm:$0xff]
        %v1195 = vld [vmem:[%s255 + $0x724] sm:$0xff]
        %v1196 = vld [vmem:[%s255 + $0x72c] sm:$0xff]
        %v1197 = vld [vmem:[%s255 + $0x734] sm:$0xf]
        %v1198 = vld [vmem:[%s255 + $0x738] sm:$0xff]
        %v1199 = vld [vmem:[%s255 + $0x740] sm:$0xff]
        %v1200 = vld [vmem:[%s255 + $0x748] sm:$0xff]
        %v1201 = vld [vmem:[%s255 + $0x750] sm:$0xf]
        %v1202 = vld [vmem:[%s255 + $0x754] sm:$0xff]
        %v1203 = vld [vmem:[%s255 + $0x75c] sm:$0xff]
        %v1204 = vld [vmem:[%s255 + $0x764] sm:$0xff]
        %v1205 = vld [vmem:[%s255 + $0x76c] sm:$0xf]
        %v1206 = vld [vmem:[%s255 + $0x770] sm:$0xff]
        %v1207 = vld [vmem:[%s255 + $0x778] sm:$0xff]
        %v1208 = vld [vmem:[%s255 + $0x780] sm:$0xff]
        %v1209 = vld [vmem:[%s255 + $0x788] sm:$0xf]
        %v1210 = vld [vmem:[%s255 + $0x78c] sm:$0xff]
        %v1211 = vld [vmem:[%s255 + $0x794] sm:$0xff]
        %v1212 = vld [vmem:[%s255 + $0x79c] sm:$0xff]
        %v1213 = vld [vmem:[%s255 + $0x7a4] sm:$0xf]
        %v1214 = vld [vmem:[%s255 + $0x7a8] sm:$0xff]
        %v1215 = vld [vmem:[%s255 + $0x7b0] sm:$0xff]
        %v1216 = vld [vmem:[%s255 + $0x7b8] sm:$0xff]
        %v1217 = vld [vmem:[%s255 + $0x7c0] sm:$0xf]
        %v1218 = vld [vmem:[%s255 + $0x7c4] sm:$0xff]
        %v1219 = vld [vmem:[%s255 + $0x7cc] sm:$0xff]
        %v1220 = vld [vmem:[%s255 + $0x7d4] sm:$0xff]
        %v1221 = vld [vmem:[%s255 + $0x7dc] sm:$0xf]
        %v1222 = vld [vmem:[%s255 + $0x7e0] sm:$0xff]
        %v1223 = vld [vmem:[%s255 + $0x7e8] sm:$0xff]
        %v1224 = vld [vmem:[%s255 + $0x7f0] sm:$0xff]
        %v1225 = vld [vmem:[%s255 + $0x7f8] sm:$0xf]
        %v1226 = vld [vmem:[%s255 + $0x7fc] sm:$0xff]
        %v1227 = vld [vmem:[%s255 + $0x804] sm:$0xff]
        %v1228 = vld [vmem:[%s255 + $0x80c] sm:$0xff]
        %v1229 = vld [vmem:[%s255 + $0x814] sm:$0xf]
        %v1230 = vld [vmem:[%s255 + $0x818] sm:$0xff]
        %v1231 = vld [vmem:[%s255 + $0x820] sm:$0xff]
        %v1232 = vld [vmem:[%s255 + $0x828] sm:$0xff]
        %v1233 = vld [vmem:[%s255 + $0x830] sm:$0xf]
        %v1234 = vld [vmem:[%s255 + $0x834] sm:$0xff]
        %v1235 = vld [vmem:[%s255 + $0x83c] sm:$0xff]
        %v1236 = vld [vmem:[%s255 + $0x844] sm:$0xff]
        %v1237 = vld [vmem:[%s255 + $0x84c] sm:$0xf]
        %v1238 = vld [vmem:[%s255 + $0x850] sm:$0xff]
        %v1239 = vld [vmem:[%s255 + $0x858] sm:$0xff]
        %v1240 = vld [vmem:[%s255 + $0x860] sm:$0xff]
        %v1241 = vld [vmem:[%s255 + $0x868] sm:$0xf]
        %v1242 = vld [vmem:[%s255 + $0x86c] sm:$0xff]
        %v1243 = vld [vmem:[%s255 + $0x874] sm:$0xff]
        %v1244 = vld [vmem:[%s255 + $0x87c] sm:$0xff]
        %v1245 = vld [vmem:[%s255 + $0x884] sm:$0xf]
        %v1246 = vld [vmem:[%s255 + $0x888] sm:$0xff]
        %v1247 = vld [vmem:[%s255 + $0x890] sm:$0xff]
        %v1248 = vld [vmem:[%s255 + $0x898] sm:$0xff]
        %v1249 = vld [vmem:[%s255 + $0x8a0] sm:$0xf]
        %v1250 = vld [vmem:[%s255 + $0x8a4] sm:$0xff]
        %v1251 = vld [vmem:[%s255 + $0x8ac] sm:$0xff]
        %v1252 = vld [vmem:[%s255 + $0x8b4] sm:$0xff]
        %v1253 = vld [vmem:[%s255 + $0x8bc] sm:$0xf]
        %v1254 = vld [vmem:[%s255 + $0x8c0] sm:$0xff]
        %v1255 = vld [vmem:[%s255 + $0x8c8] sm:$0xff]
        %v1256 = vld [vmem:[%s255 + $0x8d0] sm:$0xff]
        %v1257 = vld [vmem:[%s255 + $0x8d8] sm:$0xf]
        %v1258 = vld [vmem:[%s255 + $0x8dc] sm:$0xff]
        %v1259 = vld [vmem:[%s255 + $0x8e4] sm:$0xff]
        %v1260 = vld [vmem:[%s255 + $0x8ec] sm:$0xff]
        %v1261 = vld [vmem:[%s255 + $0x8f4] sm:$0xf]
        %v1262 = vld [vmem:[%s255 + $0x8f8] sm:$0xff]
        %v1263 = vld [vmem:[%s255 + $0x900] sm:$0xff]
        %v1264 = vld [vmem:[%s255 + $0x908] sm:$0xff]
        %v1265 = vld [vmem:[%s255 + $0x910] sm:$0xf]
        %v1266 = vld [vmem:[%s255 + $0x914] sm:$0xff]
        %v1267 = vld [vmem:[%s255 + $0x91c] sm:$0xff]
        %v1268 = vld [vmem:[%s255 + $0x924] sm:$0xff]
        %v1269 = vld [vmem:[%s255 + $0x92c] sm:$0xf]
        %v1270 = vld [vmem:[%s255 + $0x930] sm:$0xff]
        %v1271 = vld [vmem:[%s255 + $0x938] sm:$0xff]
        %v1272 = vld [vmem:[%s255 + $0x940] sm:$0xff]
        %v1273 = vld [vmem:[%s255 + $0x948] sm:$0xf]
        %v1274 = vld [vmem:[%s255 + $0x94c] sm:$0xff]
        %v1275 = vld [vmem:[%s255 + $0x954] sm:$0xff]
        %v1276 = vld [vmem:[%s255 + $0x95c] sm:$0xff]
        %v1277 = vld [vmem:[%s255 + $0x964] sm:$0xf]
        %v1278 = vld [vmem:[%s255 + $0x968] sm:$0xff]
        %v1279 = vld [vmem:[%s255 + $0x970] sm:$0xff]
        %v1280 = vld [vmem:[%s255 + $0x978] sm:$0xff]
        %v1281 = vld [vmem:[%s255 + $0x980] sm:$0xf]
        %v1282 = vld [vmem:[%s255 + $0x984] sm:$0xff]
        %v1283 = vld [vmem:[%s255 + $0x98c] sm:$0xff]
        %v1284 = vld [vmem:[%s255 + $0x994] sm:$0xff]
        %v1285 = vld [vmem:[%s255 + $0x99c] sm:$0xf]
        %v1286 = vld [vmem:[%s255 + $0x9a0] sm:$0xff]
        %v1287 = vld [vmem:[%s255 + $0x9a8] sm:$0xff]
        %v1288 = vld [vmem:[%s255 + $0x9b0] sm:$0xff]
        %v1289 = vld [vmem:[%s255 + $0x9b8] sm:$0xf]
        %v1290 = vld [vmem:[%s255 + $0x9bc] sm:$0xff]
        %v1291 = vld [vmem:[%s255 + $0x9c4] sm:$0xff]
        %v1292 = vld [vmem:[%s255 + $0x9cc] sm:$0xff]
        %v1293 = vld [vmem:[%s255 + $0x9d4] sm:$0xf]
        %v1294 = vld [vmem:[%s255 + $0x9d8] sm:$0xff]
        %v1295 = vld [vmem:[%s255 + $0x9e0] sm:$0xff]
        %v1296 = vld [vmem:[%s255 + $0x9e8] sm:$0xff]
        %v1297 = vld [vmem:[%s255 + $0x9f0] sm:$0xf]
        %v1298 = vld [vmem:[%s255 + $0x9f4] sm:$0xff]
        %v1299 = vld [vmem:[%s255 + $0x9fc] sm:$0xff]
        %v1300 = vld [vmem:[%s255 + $0xa04] sm:$0xff]
        %v1301 = vld [vmem:[%s255 + $0xa0c] sm:$0xf]
        %v1302 = vld [vmem:[%s255 + $0xa10] sm:$0xff]
        %v1303 = vld [vmem:[%s255 + $0xa18] sm:$0xff]
        %v1304 = vld [vmem:[%s255 + $0xa20] sm:$0xff]
        %v1305 = vld [vmem:[%s255 + $0xa28] sm:$0xf]
        %v1306 = vld [vmem:[%s255 + $0xa2c] sm:$0xff]
        %v1307 = vld [vmem:[%s255 + $0xa34] sm:$0xff]
        %v1308 = vld [vmem:[%s255 + $0xa3c] sm:$0xff]
        %v1309 = vld [vmem:[%s255 + $0xa44] sm:$0xf]
        %v1310 = vld [vmem:[%s255 + $0xa48] sm:$0xff]
        %v1311 = vld [vmem:[%s255 + $0xa50] sm:$0xff]
        %v1312 = vld [vmem:[%s255 + $0xa58] sm:$0xff]
        %v1313 = vld [vmem:[%s255 + $0xa60] sm:$0xf]
        %v1314 = vld [vmem:[%s255 + $0xa64] sm:$0xff]
        %v1315 = vld [vmem:[%s255 + $0xa6c] sm:$0xff]
        %v1316 = vld [vmem:[%s255 + $0xa74] sm:$0xff]
        %v1317 = vld [vmem:[%s255 + $0xa7c] sm:$0xf]
        %v1318 = vld [vmem:[%s255 + $0xa80] sm:$0xff]
        %v1319 = vld [vmem:[%s255 + $0xa88] sm:$0xff]
        %v1320 = vld [vmem:[%s255 + $0xa90] sm:$0xff]
        %v1321 = vld [vmem:[%s255 + $0xa98] sm:$0xf]
        %v1322 = vld [vmem:[%s255 + $0xa9c] sm:$0xff]
        %v1323 = vld [vmem:[%s255 + $0xaa4] sm:$0xff]
        %v1324 = vld [vmem:[%s255 + $0xaac] sm:$0xff]
        %v1325 = vld [vmem:[%s255 + $0xab4] sm:$0xf]
        %v1326 = vld [vmem:[%s255 + $0xab8] sm:$0xff]
        %v1327 = vld [vmem:[%s255 + $0xac0] sm:$0xff]
        %v1328 = vld [vmem:[%s255 + $0xac8] sm:$0xff]
        %v1329 = vld [vmem:[%s255 + $0xad0] sm:$0xf]
        %v1330 = vld [vmem:[%s255 + $0xad4] sm:$0xff]
        %v1331 = vld [vmem:[%s255 + $0xadc] sm:$0xff]
        %v1332 = vld [vmem:[%s255 + $0xae4] sm:$0xff]
        %v1333 = vld [vmem:[%s255 + $0xaec] sm:$0xf]
        %v1334 = vld [vmem:[%s255 + $0xaf0] sm:$0xff]
        %v1335 = vld [vmem:[%s255 + $0xaf8] sm:$0xff]
        %v1336 = vld [vmem:[%s255 + $0xb00] sm:$0xff]
        %v1337 = vld [vmem:[%s255 + $0xb08] sm:$0xf]
        %v1338 = vld [vmem:[%s255 + $0xb0c] sm:$0xff]
        %v1339 = vld [vmem:[%s255 + $0xb14] sm:$0xff]
        %v1340 = vld [vmem:[%s255 + $0xb1c] sm:$0xff]
        %v1341 = vld [vmem:[%s255 + $0xb24] sm:$0xf]
        %v1342 = vld [vmem:[%s255 + $0xb28] sm:$0xff]
        %v1343 = vld [vmem:[%s255 + $0xb30] sm:$0xff]
        %v1344 = vld [vmem:[%s255 + $0xb38] sm:$0xff]
        %v1345 = vld [vmem:[%s255 + $0xb40] sm:$0xf]
        %v1346 = vld [vmem:[%s255 + $0xb44] sm:$0xff]
        %v1347 = vld [vmem:[%s255 + $0xb4c] sm:$0xff]
        %v1348 = vld [vmem:[%s255 + $0xb54] sm:$0xff]
        %v1349 = vld [vmem:[%s255 + $0xb5c] sm:$0xf]
        %v1350 = vld [vmem:[%s255 + $0xb60] sm:$0xff]
        %v1351 = vld [vmem:[%s255 + $0xb68] sm:$0xff]
        %v1352 = vld [vmem:[%s255 + $0xb70] sm:$0xff]
        %v1353 = vld [vmem:[%s255 + $0xb78] sm:$0xf]
        %v1354 = vld [vmem:[%s255 + $0xb7c] sm:$0xff]
        %v1355 = vld [vmem:[%s255 + $0xb84] sm:$0xff]
        %v1356 = vld [vmem:[%s255 + $0xb8c] sm:$0xff]
        %v1357 = vld [vmem:[%s255 + $0xb94] sm:$0xf]
        %v1358 = vld [vmem:[%s255 + $0xb98] sm:$0xff]
        %v1359 = vld [vmem:[%s255 + $0xba0] sm:$0xff]
        %v1360 = vld [vmem:[%s255 + $0xba8] sm:$0xff]
        %v1361 = vld [vmem:[%s255 + $0xbb0] sm:$0xf]
        %v1362 = vld [vmem:[%s255 + $0xbb4] sm:$0xff]
        %v1363 = vld [vmem:[%s255 + $0xbbc] sm:$0xff]
        %v1364 = vld [vmem:[%s255 + $0xbc4] sm:$0xff]
        %v1365 = vld [vmem:[%s255 + $0xbcc] sm:$0xf]
        %v1366 = vld [vmem:[%s255 + $0xbd0] sm:$0xff]
        %v1367 = vld [vmem:[%s255 + $0xbd8] sm:$0xff]
        %v1368 = vld [vmem:[%s255 + $0xbe0] sm:$0xff]
        %v1369 = vld [vmem:[%s255 + $0xbe8] sm:$0xf]
        %v1370 = vld [vmem:[%s255 + $0xbec] sm:$0xff]
        %v1371 = vld [vmem:[%s255 + $0xbf4] sm:$0xff]
        %v1372 = vld [vmem:[%s255 + $0xbfc] sm:$0xff]
        %v1373 = vld [vmem:[%s255 + $0xc04] sm:$0xf]
        %v1374 = vld [vmem:[%s255 + $0xc08] sm:$0xff]
        %v1375 = vld [vmem:[%s255 + $0xc10] sm:$0xff]
        %v1376 = vld [vmem:[%s255 + $0xc18] sm:$0xff]
        %v1377 = vld [vmem:[%s255 + $0xc20] sm:$0xf]
        %v1378 = vld [vmem:[%s255 + $0xc24] sm:$0xff]
        %v1379 = vld [vmem:[%s255 + $0xc2c] sm:$0xff]
        %v1380 = vld [vmem:[%s255 + $0xc34] sm:$0xff]
        %v1381 = vld [vmem:[%s255 + $0xc3c] sm:$0xf]
        %v1382 = vld [vmem:[%s255 + $0xc40] sm:$0xff]
        %v1383 = vld [vmem:[%s255 + $0xc48] sm:$0xff]
        %v1384 = vld [vmem:[%s255 + $0xc50] sm:$0xff]
        %v1385 = vld [vmem:[%s255 + $0xc58] sm:$0xf]
        %v1386 = vld [vmem:[%s255 + $0xc5c] sm:$0xff]
        %v1387 = vld [vmem:[%s255 + $0xc64] sm:$0xff]
        %v1388 = vld [vmem:[%s255 + $0xc6c] sm:$0xff]
        %v1389 = vld [vmem:[%s255 + $0xc74] sm:$0xf]
        %v1390 = vld [vmem:[%s255 + $0xc78] sm:$0xff]
        %v1391 = vld [vmem:[%s255 + $0xc80] sm:$0xff]
        %v1392 = vld [vmem:[%s255 + $0xc88] sm:$0xff]
        %v1393 = vld [vmem:[%s255 + $0xc90] sm:$0xf]
        %v1394 = vld [vmem:[%s255 + $0xc94] sm:$0xff]
        %v1395 = vld [vmem:[%s255 + $0xc9c] sm:$0xff]
        %v1396 = vld [vmem:[%s255 + $0xca4] sm:$0xff]
        %v1397 = vld [vmem:[%s255 + $0xcac] sm:$0xf]
        %v1398 = vld [vmem:[%s255 + $0xcb0] sm:$0xff]
        %v1399 = vld [vmem:[%s255 + $0xcb8] sm:$0xff]
        %v1400 = vld [vmem:[%s255 + $0xcc0] sm:$0xff]
        %v1401 = vld [vmem:[%s255 + $0xcc8] sm:$0xf]
        %v1402 = vld [vmem:[%s255 + $0xccc] sm:$0xff]
        %v1403 = vld [vmem:[%s255 + $0xcd4] sm:$0xff]
        %v1404 = vld [vmem:[%s255 + $0xcdc] sm:$0xff]
        %v1405 = vld [vmem:[%s255 + $0xce4] sm:$0xf]
        %v1406 = vld [vmem:[%s255 + $0xce8] sm:$0xff]
        %v1407 = vld [vmem:[%s255 + $0xcf0] sm:$0xff]
        %v1408 = vld [vmem:[%s255 + $0xcf8] sm:$0xff]
        %v1409 = vld [vmem:[%s255 + $0xd00] sm:$0xf]
        %v1410 = vld [vmem:[%s255 + $0xd04] sm:$0xff]
        %v1411 = vld [vmem:[%s255 + $0xd0c] sm:$0xff]
        %v1412 = vld [vmem:[%s255 + $0xd14] sm:$0xff]
        %v1413 = vld [vmem:[%s255 + $0xd1c] sm:$0xf]
        %v1414 = vld [vmem:[%s255 + $0xd20] sm:$0xff]
        %v1415 = vld [vmem:[%s255 + $0xd28] sm:$0xff]
        %v1416 = vld [vmem:[%s255 + $0xd30] sm:$0xff]
        %v1417 = vld [vmem:[%s255 + $0xd38] sm:$0xf]
        %v1418 = vld [vmem:[%s255 + $0xd3c] sm:$0xff]
        %v1419 = vld [vmem:[%s255 + $0xd44] sm:$0xff]
        %v1420 = vld [vmem:[%s255 + $0xd4c] sm:$0xff]
        %v1421 = vld [vmem:[%s255 + $0xd54] sm:$0xf]
        %v1422 = vld [vmem:[%s255 + $0xd58] sm:$0xff]
        %v1423 = vld [vmem:[%s255 + $0xd60] sm:$0xff]
        %v1424 = vld [vmem:[%s255 + $0xd68] sm:$0xff]
        %v1425 = vld [vmem:[%s255 + $0xd70] sm:$0xf]
        %v1426 = vld [vmem:[%s255 + $0xd74] sm:$0xff]
        %v1427 = vld [vmem:[%s255 + $0xd7c] sm:$0xff]
        %v1428 = vld [vmem:[%s255 + $0xd84] sm:$0xff]
        %v1429 = vld [vmem:[%s255 + $0xd8c] sm:$0xf]
        %v1430 = vld [vmem:[%s255 + $0xd90] sm:$0xff]
        %v1431 = vld [vmem:[%s255 + $0xd98] sm:$0xff]
        %v1432 = vld [vmem:[%s255 + $0xda0] sm:$0xff]
        %v1433 = vld [vmem:[%s255 + $0xda8] sm:$0xf]
        %v1434 = vld [vmem:[%s255 + $0xdac] sm:$0xff]
        %v1435 = vld [vmem:[%s255 + $0xdb4] sm:$0xff]
        %v1436 = vld [vmem:[%s255 + $0xdbc] sm:$0xff]
        %v1437 = vld [vmem:[%s255 + $0xdc4] sm:$0xf]
        %v1438 = vld [vmem:[%s255 + $0xdc8] sm:$0xff]
        %v1439 = vld [vmem:[%s255 + $0xdd0] sm:$0xff]
        %v1440 = vld [vmem:[%s255 + $0xdd8] sm:$0xff]
        %v1441 = vld [vmem:[%s255 + $0xde0] sm:$0xf]
        %v1442 = vld [vmem:[%s255 + $0xde4] sm:$0xff]
        %v1443 = vld [vmem:[%s255 + $0xdec] sm:$0xff]
        %v1444 = vld [vmem:[%s255 + $0xdf4] sm:$0xff]
        %v1445 = vld [vmem:[%s255 + $0xdfc] sm:$0xf]
        %v1958 = vunpack.c.l.b16 %v934
        %v1959 = vunpack.c.h.b16 %v934
        %v1960 = vunpack.c.l.b16 %v935
        %v1961 = vunpack.c.h.b16 %v935
        %v1962 = vunpack.c.l.b16 %v936
        %v1963 = vunpack.c.h.b16 %v936
        %v1964 = vunpack.c.l.b16 %v937
        %v1965 = vunpack.c.l.b16 %v938
        %v1966 = vunpack.c.h.b16 %v938
        %v1967 = vunpack.c.l.b16 %v939
        %v1968 = vunpack.c.h.b16 %v939
        %v1969 = vunpack.c.l.b16 %v940
        %v1970 = vunpack.c.h.b16 %v940
        %v1971 = vunpack.c.l.b16 %v941
        %v1972 = vunpack.c.l.b16 %v942
        %v1973 = vunpack.c.h.b16 %v942
        %v1974 = vunpack.c.l.b16 %v943
        %v1975 = vunpack.c.h.b16 %v943
        %v1976 = vunpack.c.l.b16 %v944
        %v1977 = vunpack.c.h.b16 %v944
        %v1978 = vunpack.c.l.b16 %v945
        %v1979 = vunpack.c.l.b16 %v946
        %v1980 = vunpack.c.h.b16 %v946
        %v1981 = vunpack.c.l.b16 %v947
        %v1982 = vunpack.c.h.b16 %v947
        %v1983 = vunpack.c.l.b16 %v948
        %v1984 = vunpack.c.h.b16 %v948
        %v1985 = vunpack.c.l.b16 %v949
        %v1986 = vunpack.c.l.b16 %v950
        %v1987 = vunpack.c.h.b16 %v950
        %v1988 = vunpack.c.l.b16 %v951
        %v1989 = vunpack.c.h.b16 %v951
        %v1990 = vunpack.c.l.b16 %v952
        %v1991 = vunpack.c.h.b16 %v952
        %v1992 = vunpack.c.l.b16 %v953
        %v1993 = vunpack.c.l.b16 %v954
        %v1994 = vunpack.c.h.b16 %v954
        %v1995 = vunpack.c.l.b16 %v955
        %v1996 = vunpack.c.h.b16 %v955
        %v1997 = vunpack.c.l.b16 %v956
        %v1998 = vunpack.c.h.b16 %v956
        %v1999 = vunpack.c.l.b16 %v957
        %v2000 = vunpack.c.l.b16 %v958
        %v2001 = vunpack.c.h.b16 %v958
        %v2002 = vunpack.c.l.b16 %v959
        %v2003 = vunpack.c.h.b16 %v959
        %v2004 = vunpack.c.l.b16 %v960
        %v2005 = vunpack.c.h.b16 %v960
        %v2006 = vunpack.c.l.b16 %v961
        %v2007 = vunpack.c.l.b16 %v962
        %v2008 = vunpack.c.h.b16 %v962
        %v2009 = vunpack.c.l.b16 %v963
        %v2010 = vunpack.c.h.b16 %v963
        %v2011 = vunpack.c.l.b16 %v964
        %v2012 = vunpack.c.h.b16 %v964
        %v2013 = vunpack.c.l.b16 %v965
        %v2014 = vunpack.c.l.b16 %v966
        %v2015 = vunpack.c.h.b16 %v966
        %v2016 = vunpack.c.l.b16 %v967
        %v2017 = vunpack.c.h.b16 %v967
        %v2018 = vunpack.c.l.b16 %v968
        %v2019 = vunpack.c.h.b16 %v968
        %v2020 = vunpack.c.l.b16 %v969
        %v2021 = vunpack.c.l.b16 %v970
        %v2022 = vunpack.c.h.b16 %v970
        %v2023 = vunpack.c.l.b16 %v971
        %v2024 = vunpack.c.h.b16 %v971
        %v2025 = vunpack.c.l.b16 %v972
        %v2026 = vunpack.c.h.b16 %v972
        %v2027 = vunpack.c.l.b16 %v973
        %v2028 = vunpack.c.l.b16 %v974
        %v2029 = vunpack.c.h.b16 %v974
        %v2030 = vunpack.c.l.b16 %v975
        %v2031 = vunpack.c.h.b16 %v975
        %v2032 = vunpack.c.l.b16 %v976
        %v2033 = vunpack.c.h.b16 %v976
        %v2034 = vunpack.c.l.b16 %v977
        %v2035 = vunpack.c.l.b16 %v978
        %v2036 = vunpack.c.h.b16 %v978
        %v2037 = vunpack.c.l.b16 %v979
        %v2038 = vunpack.c.h.b16 %v979
        %v2039 = vunpack.c.l.b16 %v980
        %v2040 = vunpack.c.h.b16 %v980
        %v2041 = vunpack.c.l.b16 %v981
        %v2042 = vunpack.c.l.b16 %v982
        %v2043 = vunpack.c.h.b16 %v982
        %v2044 = vunpack.c.l.b16 %v983
        %v2045 = vunpack.c.h.b16 %v983
        %v2046 = vunpack.c.l.b16 %v984
        %v2047 = vunpack.c.h.b16 %v984
        %v2048 = vunpack.c.l.b16 %v985
        %v2049 = vunpack.c.l.b16 %v986
        %v2050 = vunpack.c.h.b16 %v986
        %v2051 = vunpack.c.l.b16 %v987
        %v2052 = vunpack.c.h.b16 %v987
        %v2053 = vunpack.c.l.b16 %v988
        %v2054 = vunpack.c.h.b16 %v988
        %v2055 = vunpack.c.l.b16 %v989
        %v2056 = vunpack.c.l.b16 %v990
        %v2057 = vunpack.c.h.b16 %v990
        %v2058 = vunpack.c.l.b16 %v991
        %v2059 = vunpack.c.h.b16 %v991
        %v2060 = vunpack.c.l.b16 %v992
        %v2061 = vunpack.c.h.b16 %v992
        %v2062 = vunpack.c.l.b16 %v993
        %v2063 = vunpack.c.l.b16 %v994
        %v2064 = vunpack.c.h.b16 %v994
        %v2065 = vunpack.c.l.b16 %v995
        %v2066 = vunpack.c.h.b16 %v995
        %v2067 = vunpack.c.l.b16 %v996
        %v2068 = vunpack.c.h.b16 %v996
        %v2069 = vunpack.c.l.b16 %v997
        %v2070 = vunpack.c.l.b16 %v998
        %v2071 = vunpack.c.h.b16 %v998
        %v2072 = vunpack.c.l.b16 %v999
        %v2073 = vunpack.c.h.b16 %v999
        %v2074 = vunpack.c.l.b16 %v1000
        %v2075 = vunpack.c.h.b16 %v1000
        %v2076 = vunpack.c.l.b16 %v1001
        %v2077 = vunpack.c.l.b16 %v1002
        %v2078 = vunpack.c.h.b16 %v1002
        %v2079 = vunpack.c.l.b16 %v1003
        %v2080 = vunpack.c.h.b16 %v1003
        %v2081 = vunpack.c.l.b16 %v1004
        %v2082 = vunpack.c.h.b16 %v1004
        %v2083 = vunpack.c.l.b16 %v1005
        %v2084 = vunpack.c.l.b16 %v1006
        %v2085 = vunpack.c.h.b16 %v1006
        %v2086 = vunpack.c.l.b16 %v1007
        %v2087 = vunpack.c.h.b16 %v1007
        %v2088 = vunpack.c.l.b16 %v1008
        %v2089 = vunpack.c.h.b16 %v1008
        %v2090 = vunpack.c.l.b16 %v1009
        %v2091 = vunpack.c.l.b16 %v1010
        %v2092 = vunpack.c.h.b16 %v1010
        %v2093 = vunpack.c.l.b16 %v1011
        %v2094 = vunpack.c.h.b16 %v1011
        %v2095 = vunpack.c.l.b16 %v1012
        %v2096 = vunpack.c.h.b16 %v1012
        %v2097 = vunpack.c.l.b16 %v1013
        %v2098 = vunpack.c.l.b16 %v1014
        %v2099 = vunpack.c.h.b16 %v1014
        %v2100 = vunpack.c.l.b16 %v1015
        %v2101 = vunpack.c.h.b16 %v1015
        %v2102 = vunpack.c.l.b16 %v1016
        %v2103 = vunpack.c.h.b16 %v1016
        %v2104 = vunpack.c.l.b16 %v1017
        %v2105 = vunpack.c.l.b16 %v1018
        %v2106 = vunpack.c.h.b16 %v1018
        %v2107 = vunpack.c.l.b16 %v1019
        %v2108 = vunpack.c.h.b16 %v1019
        %v2109 = vunpack.c.l.b16 %v1020
        %v2110 = vunpack.c.h.b16 %v1020
        %v2111 = vunpack.c.l.b16 %v1021
        %v2112 = vunpack.c.l.b16 %v1022
        %v2113 = vunpack.c.h.b16 %v1022
        %v2114 = vunpack.c.l.b16 %v1023
        %v2115 = vunpack.c.h.b16 %v1023
        %v2116 = vunpack.c.l.b16 %v1024
        %v2117 = vunpack.c.h.b16 %v1024
        %v2118 = vunpack.c.l.b16 %v1025
        %v2119 = vunpack.c.l.b16 %v1026
        %v2120 = vunpack.c.h.b16 %v1026
        %v2121 = vunpack.c.l.b16 %v1027
        %v2122 = vunpack.c.h.b16 %v1027
        %v2123 = vunpack.c.l.b16 %v1028
        %v2124 = vunpack.c.h.b16 %v1028
        %v2125 = vunpack.c.l.b16 %v1029
        %v2126 = vunpack.c.l.b16 %v1030
        %v2127 = vunpack.c.h.b16 %v1030
        %v2128 = vunpack.c.l.b16 %v1031
        %v2129 = vunpack.c.h.b16 %v1031
        %v2130 = vunpack.c.l.b16 %v1032
        %v2131 = vunpack.c.h.b16 %v1032
        %v2132 = vunpack.c.l.b16 %v1033
        %v2133 = vunpack.c.l.b16 %v1034
        %v2134 = vunpack.c.h.b16 %v1034
        %v2135 = vunpack.c.l.b16 %v1035
        %v2136 = vunpack.c.h.b16 %v1035
        %v2137 = vunpack.c.l.b16 %v1036
        %v2138 = vunpack.c.h.b16 %v1036
        %v2139 = vunpack.c.l.b16 %v1037
        %v2140 = vunpack.c.l.b16 %v1038
        %v2141 = vunpack.c.h.b16 %v1038
        %v2142 = vunpack.c.l.b16 %v1039
        %v2143 = vunpack.c.h.b16 %v1039
        %v2144 = vunpack.c.l.b16 %v1040
        %v2145 = vunpack.c.h.b16 %v1040
        %v2146 = vunpack.c.l.b16 %v1041
        %v2147 = vunpack.c.l.b16 %v1042
        %v2148 = vunpack.c.h.b16 %v1042
        %v2149 = vunpack.c.l.b16 %v1043
        %v2150 = vunpack.c.h.b16 %v1043
        %v2151 = vunpack.c.l.b16 %v1044
        %v2152 = vunpack.c.h.b16 %v1044
        %v2153 = vunpack.c.l.b16 %v1045
        %v2154 = vunpack.c.l.b16 %v1046
        %v2155 = vunpack.c.h.b16 %v1046
        %v2156 = vunpack.c.l.b16 %v1047
        %v2157 = vunpack.c.h.b16 %v1047
        %v2158 = vunpack.c.l.b16 %v1048
        %v2159 = vunpack.c.h.b16 %v1048
        %v2160 = vunpack.c.l.b16 %v1049
        %v2161 = vunpack.c.l.b16 %v1050
        %v2162 = vunpack.c.h.b16 %v1050
        %v2163 = vunpack.c.l.b16 %v1051
        %v2164 = vunpack.c.h.b16 %v1051
        %v2165 = vunpack.c.l.b16 %v1052
        %v2166 = vunpack.c.h.b16 %v1052
        %v2167 = vunpack.c.l.b16 %v1053
        %v2168 = vunpack.c.l.b16 %v1054
        %v2169 = vunpack.c.h.b16 %v1054
        %v2170 = vunpack.c.l.b16 %v1055
        %v2171 = vunpack.c.h.b16 %v1055
        %v2172 = vunpack.c.l.b16 %v1056
        %v2173 = vunpack.c.h.b16 %v1056
        %v2174 = vunpack.c.l.b16 %v1057
        %v2175 = vunpack.c.l.b16 %v1058
        %v2176 = vunpack.c.h.b16 %v1058
        %v2177 = vunpack.c.l.b16 %v1059
        %v2178 = vunpack.c.h.b16 %v1059
        %v2179 = vunpack.c.l.b16 %v1060
        %v2180 = vunpack.c.h.b16 %v1060
        %v2181 = vunpack.c.l.b16 %v1061
        %v2182 = vunpack.c.l.b16 %v1062
        %v2183 = vunpack.c.h.b16 %v1062
        %v2184 = vunpack.c.l.b16 %v1063
        %v2185 = vunpack.c.h.b16 %v1063
        %v2186 = vunpack.c.l.b16 %v1064
        %v2187 = vunpack.c.h.b16 %v1064
        %v2188 = vunpack.c.l.b16 %v1065
        %v2189 = vunpack.c.l.b16 %v1066
        %v2190 = vunpack.c.h.b16 %v1066
        %v2191 = vunpack.c.l.b16 %v1067
        %v2192 = vunpack.c.h.b16 %v1067
        %v2193 = vunpack.c.l.b16 %v1068
        %v2194 = vunpack.c.h.b16 %v1068
        %v2195 = vunpack.c.l.b16 %v1069
        %v2196 = vunpack.c.l.b16 %v1070
        %v2197 = vunpack.c.h.b16 %v1070
        %v2198 = vunpack.c.l.b16 %v1071
        %v2199 = vunpack.c.h.b16 %v1071
        %v2200 = vunpack.c.l.b16 %v1072
        %v2201 = vunpack.c.h.b16 %v1072
        %v2202 = vunpack.c.l.b16 %v1073
        %v2203 = vunpack.c.l.b16 %v1074
        %v2204 = vunpack.c.h.b16 %v1074
        %v2205 = vunpack.c.l.b16 %v1075
        %v2206 = vunpack.c.h.b16 %v1075
        %v2207 = vunpack.c.l.b16 %v1076
        %v2208 = vunpack.c.h.b16 %v1076
        %v2209 = vunpack.c.l.b16 %v1077
        %v2210 = vunpack.c.l.b16 %v1078
        %v2211 = vunpack.c.h.b16 %v1078
        %v2212 = vunpack.c.l.b16 %v1079
        %v2213 = vunpack.c.h.b16 %v1079
        %v2214 = vunpack.c.l.b16 %v1080
        %v2215 = vunpack.c.h.b16 %v1080
        %v2216 = vunpack.c.l.b16 %v1081
        %v2217 = vunpack.c.l.b16 %v1082
        %v2218 = vunpack.c.h.b16 %v1082
        %v2219 = vunpack.c.l.b16 %v1083
        %v2220 = vunpack.c.h.b16 %v1083
        %v2221 = vunpack.c.l.b16 %v1084
        %v2222 = vunpack.c.h.b16 %v1084
        %v2223 = vunpack.c.l.b16 %v1085
        %v2224 = vunpack.c.l.b16 %v1086
        %v2225 = vunpack.c.h.b16 %v1086
        %v2226 = vunpack.c.l.b16 %v1087
        %v2227 = vunpack.c.h.b16 %v1087
        %v2228 = vunpack.c.l.b16 %v1088
        %v2229 = vunpack.c.h.b16 %v1088
        %v2230 = vunpack.c.l.b16 %v1089
        %v2231 = vunpack.c.l.b16 %v1090
        %v2232 = vunpack.c.h.b16 %v1090
        %v2233 = vunpack.c.l.b16 %v1091
        %v2234 = vunpack.c.h.b16 %v1091
        %v2235 = vunpack.c.l.b16 %v1092
        %v2236 = vunpack.c.h.b16 %v1092
        %v2237 = vunpack.c.l.b16 %v1093
        %v2238 = vunpack.c.l.b16 %v1094
        %v2239 = vunpack.c.h.b16 %v1094
        %v2240 = vunpack.c.l.b16 %v1095
        %v2241 = vunpack.c.h.b16 %v1095
        %v2242 = vunpack.c.l.b16 %v1096
        %v2243 = vunpack.c.h.b16 %v1096
        %v2244 = vunpack.c.l.b16 %v1097
        %v2245 = vunpack.c.l.b16 %v1098
        %v2246 = vunpack.c.h.b16 %v1098
        %v2247 = vunpack.c.l.b16 %v1099
        %v2248 = vunpack.c.h.b16 %v1099
        %v2249 = vunpack.c.l.b16 %v1100
        %v2250 = vunpack.c.h.b16 %v1100
        %v2251 = vunpack.c.l.b16 %v1101
        %v2252 = vunpack.c.l.b16 %v1102
        %v2253 = vunpack.c.h.b16 %v1102
        %v2254 = vunpack.c.l.b16 %v1103
        %v2255 = vunpack.c.h.b16 %v1103
        %v2256 = vunpack.c.l.b16 %v1104
        %v2257 = vunpack.c.h.b16 %v1104
        %v2258 = vunpack.c.l.b16 %v1105
        %v2259 = vunpack.c.l.b16 %v1106
        %v2260 = vunpack.c.h.b16 %v1106
        %v2261 = vunpack.c.l.b16 %v1107
        %v2262 = vunpack.c.h.b16 %v1107
        %v2263 = vunpack.c.l.b16 %v1108
        %v2264 = vunpack.c.h.b16 %v1108
        %v2265 = vunpack.c.l.b16 %v1109
        %v2266 = vunpack.c.l.b16 %v1110
        %v2267 = vunpack.c.h.b16 %v1110
        %v2268 = vunpack.c.l.b16 %v1111
        %v2269 = vunpack.c.h.b16 %v1111
        %v2270 = vunpack.c.l.b16 %v1112
        %v2271 = vunpack.c.h.b16 %v1112
        %v2272 = vunpack.c.l.b16 %v1113
        %v2273 = vunpack.c.l.b16 %v1114
        %v2274 = vunpack.c.h.b16 %v1114
        %v2275 = vunpack.c.l.b16 %v1115
        %v2276 = vunpack.c.h.b16 %v1115
        %v2277 = vunpack.c.l.b16 %v1116
        %v2278 = vunpack.c.h.b16 %v1116
        %v2279 = vunpack.c.l.b16 %v1117
        %v2280 = vunpack.c.l.b16 %v1118
        %v2281 = vunpack.c.h.b16 %v1118
        %v2282 = vunpack.c.l.b16 %v1119
        %v2283 = vunpack.c.h.b16 %v1119
        %v2284 = vunpack.c.l.b16 %v1120
        %v2285 = vunpack.c.h.b16 %v1120
        %v2286 = vunpack.c.l.b16 %v1121
        %v2287 = vunpack.c.l.b16 %v1122
        %v2288 = vunpack.c.h.b16 %v1122
        %v2289 = vunpack.c.l.b16 %v1123
        %v2290 = vunpack.c.h.b16 %v1123
        %v2291 = vunpack.c.l.b16 %v1124
        %v2292 = vunpack.c.h.b16 %v1124
        %v2293 = vunpack.c.l.b16 %v1125
        %v2294 = vunpack.c.l.b16 %v1126
        %v2295 = vunpack.c.h.b16 %v1126
        %v2296 = vunpack.c.l.b16 %v1127
        %v2297 = vunpack.c.h.b16 %v1127
        %v2298 = vunpack.c.l.b16 %v1128
        %v2299 = vunpack.c.h.b16 %v1128
        %v2300 = vunpack.c.l.b16 %v1129
        %v2301 = vunpack.c.l.b16 %v1130
        %v2302 = vunpack.c.h.b16 %v1130
        %v2303 = vunpack.c.l.b16 %v1131
        %v2304 = vunpack.c.h.b16 %v1131
        %v2305 = vunpack.c.l.b16 %v1132
        %v2306 = vunpack.c.h.b16 %v1132
        %v2307 = vunpack.c.l.b16 %v1133
        %v2308 = vunpack.c.l.b16 %v1134
        %v2309 = vunpack.c.h.b16 %v1134
        %v2310 = vunpack.c.l.b16 %v1135
        %v2311 = vunpack.c.h.b16 %v1135
        %v2312 = vunpack.c.l.b16 %v1136
        %v2313 = vunpack.c.h.b16 %v1136
        %v2314 = vunpack.c.l.b16 %v1137
        %v2315 = vunpack.c.l.b16 %v1138
        %v2316 = vunpack.c.h.b16 %v1138
        %v2317 = vunpack.c.l.b16 %v1139
        %v2318 = vunpack.c.h.b16 %v1139
        %v2319 = vunpack.c.l.b16 %v1140
        %v2320 = vunpack.c.h.b16 %v1140
        %v2321 = vunpack.c.l.b16 %v1141
        %v2322 = vunpack.c.l.b16 %v1142
        %v2323 = vunpack.c.h.b16 %v1142
        %v2324 = vunpack.c.l.b16 %v1143
        %v2325 = vunpack.c.h.b16 %v1143
        %v2326 = vunpack.c.l.b16 %v1144
        %v2327 = vunpack.c.h.b16 %v1144
        %v2328 = vunpack.c.l.b16 %v1145
        %v2329 = vunpack.c.l.b16 %v1146
        %v2330 = vunpack.c.h.b16 %v1146
        %v2331 = vunpack.c.l.b16 %v1147
        %v2332 = vunpack.c.h.b16 %v1147
        %v2333 = vunpack.c.l.b16 %v1148
        %v2334 = vunpack.c.h.b16 %v1148
        %v2335 = vunpack.c.l.b16 %v1149
        %v2336 = vunpack.c.l.b16 %v1150
        %v2337 = vunpack.c.h.b16 %v1150
        %v2338 = vunpack.c.l.b16 %v1151
        %v2339 = vunpack.c.h.b16 %v1151
        %v2340 = vunpack.c.l.b16 %v1152
        %v2341 = vunpack.c.h.b16 %v1152
        %v2342 = vunpack.c.l.b16 %v1153
        %v2343 = vunpack.c.l.b16 %v1154
        %v2344 = vunpack.c.h.b16 %v1154
        %v2345 = vunpack.c.l.b16 %v1155
        %v2346 = vunpack.c.h.b16 %v1155
        %v2347 = vunpack.c.l.b16 %v1156
        %v2348 = vunpack.c.h.b16 %v1156
        %v2349 = vunpack.c.l.b16 %v1157
        %v2350 = vunpack.c.l.b16 %v1158
        %v2351 = vunpack.c.h.b16 %v1158
        %v2352 = vunpack.c.l.b16 %v1159
        %v2353 = vunpack.c.h.b16 %v1159
        %v2354 = vunpack.c.l.b16 %v1160
        %v2355 = vunpack.c.h.b16 %v1160
        %v2356 = vunpack.c.l.b16 %v1161
        %v2357 = vunpack.c.l.b16 %v1162
        %v2358 = vunpack.c.h.b16 %v1162
        %v2359 = vunpack.c.l.b16 %v1163
        %v2360 = vunpack.c.h.b16 %v1163
        %v2361 = vunpack.c.l.b16 %v1164
        %v2362 = vunpack.c.h.b16 %v1164
        %v2363 = vunpack.c.l.b16 %v1165
        %v2364 = vunpack.c.l.b16 %v1166
        %v2365 = vunpack.c.h.b16 %v1166
        %v2366 = vunpack.c.l.b16 %v1167
        %v2367 = vunpack.c.h.b16 %v1167
        %v2368 = vunpack.c.l.b16 %v1168
        %v2369 = vunpack.c.h.b16 %v1168
        %v2370 = vunpack.c.l.b16 %v1169
        %v2371 = vunpack.c.l.b16 %v1170
        %v2372 = vunpack.c.h.b16 %v1170
        %v2373 = vunpack.c.l.b16 %v1171
        %v2374 = vunpack.c.h.b16 %v1171
        %v2375 = vunpack.c.l.b16 %v1172
        %v2376 = vunpack.c.h.b16 %v1172
        %v2377 = vunpack.c.l.b16 %v1173
        %v2378 = vunpack.c.l.b16 %v1174
        %v2379 = vunpack.c.h.b16 %v1174
        %v2380 = vunpack.c.l.b16 %v1175
        %v2381 = vunpack.c.h.b16 %v1175
        %v2382 = vunpack.c.l.b16 %v1176
        %v2383 = vunpack.c.h.b16 %v1176
        %v2384 = vunpack.c.l.b16 %v1177
        %v2385 = vunpack.c.l.b16 %v1178
        %v2386 = vunpack.c.h.b16 %v1178
        %v2387 = vunpack.c.l.b16 %v1179
        %v2388 = vunpack.c.h.b16 %v1179
        %v2389 = vunpack.c.l.b16 %v1180
        %v2390 = vunpack.c.h.b16 %v1180
        %v2391 = vunpack.c.l.b16 %v1181
        %v2392 = vunpack.c.l.b16 %v1182
        %v2393 = vunpack.c.h.b16 %v1182
        %v2394 = vunpack.c.l.b16 %v1183
        %v2395 = vunpack.c.h.b16 %v1183
        %v2396 = vunpack.c.l.b16 %v1184
        %v2397 = vunpack.c.h.b16 %v1184
        %v2398 = vunpack.c.l.b16 %v1185
        %v2399 = vunpack.c.l.b16 %v1186
        %v2400 = vunpack.c.h.b16 %v1186
        %v2401 = vunpack.c.l.b16 %v1187
        %v2402 = vunpack.c.h.b16 %v1187
        %v2403 = vunpack.c.l.b16 %v1188
        %v2404 = vunpack.c.h.b16 %v1188
        %v2405 = vunpack.c.l.b16 %v1189
        %v2406 = vunpack.c.l.b16 %v1190
        %v2407 = vunpack.c.h.b16 %v1190
        %v2408 = vunpack.c.l.b16 %v1191
        %v2409 = vunpack.c.h.b16 %v1191
        %v2410 = vunpack.c.l.b16 %v1192
        %v2411 = vunpack.c.h.b16 %v1192
        %v2412 = vunpack.c.l.b16 %v1193
        %v2413 = vunpack.c.l.b16 %v1194
        %v2414 = vunpack.c.h.b16 %v1194
        %v2415 = vunpack.c.l.b16 %v1195
        %v2416 = vunpack.c.h.b16 %v1195
        %v2417 = vunpack.c.l.b16 %v1196
        %v2418 = vunpack.c.h.b16 %v1196
        %v2419 = vunpack.c.l.b16 %v1197
        %v2420 = vunpack.c.l.b16 %v1198
        %v2421 = vunpack.c.h.b16 %v1198
        %v2422 = vunpack.c.l.b16 %v1199
        %v2423 = vunpack.c.h.b16 %v1199
        %v2424 = vunpack.c.l.b16 %v1200
        %v2425 = vunpack.c.h.b16 %v1200
        %v2426 = vunpack.c.l.b16 %v1201
        %v2427 = vunpack.c.l.b16 %v1202
        %v2428 = vunpack.c.h.b16 %v1202
        %v2429 = vunpack.c.l.b16 %v1203
        %v2430 = vunpack.c.h.b16 %v1203
        %v2431 = vunpack.c.l.b16 %v1204
        %v2432 = vunpack.c.h.b16 %v1204
        %v2433 = vunpack.c.l.b16 %v1205
        %v2434 = vunpack.c.l.b16 %v1206
        %v2435 = vunpack.c.h.b16 %v1206
        %v2436 = vunpack.c.l.b16 %v1207
        %v2437 = vunpack.c.h.b16 %v1207
        %v2438 = vunpack.c.l.b16 %v1208
        %v2439 = vunpack.c.h.b16 %v1208
        %v2440 = vunpack.c.l.b16 %v1209
        %v2441 = vunpack.c.l.b16 %v1210
        %v2442 = vunpack.c.h.b16 %v1210
        %v2443 = vunpack.c.l.b16 %v1211
        %v2444 = vunpack.c.h.b16 %v1211
        %v2445 = vunpack.c.l.b16 %v1212
        %v2446 = vunpack.c.h.b16 %v1212
        %v2447 = vunpack.c.l.b16 %v1213
        %v2448 = vunpack.c.l.b16 %v1214
        %v2449 = vunpack.c.h.b16 %v1214
        %v2450 = vunpack.c.l.b16 %v1215
        %v2451 = vunpack.c.h.b16 %v1215
        %v2452 = vunpack.c.l.b16 %v1216
        %v2453 = vunpack.c.h.b16 %v1216
        %v2454 = vunpack.c.l.b16 %v1217
        %v2455 = vunpack.c.l.b16 %v1218
        %v2456 = vunpack.c.h.b16 %v1218
        %v2457 = vunpack.c.l.b16 %v1219
        %v2458 = vunpack.c.h.b16 %v1219
        %v2459 = vunpack.c.l.b16 %v1220
        %v2460 = vunpack.c.h.b16 %v1220
        %v2461 = vunpack.c.l.b16 %v1221
        %v2462 = vunpack.c.l.b16 %v1222
        %v2463 = vunpack.c.h.b16 %v1222
        %v2464 = vunpack.c.l.b16 %v1223
        %v2465 = vunpack.c.h.b16 %v1223
        %v2466 = vunpack.c.l.b16 %v1224
        %v2467 = vunpack.c.h.b16 %v1224
        %v2468 = vunpack.c.l.b16 %v1225
        %v2469 = vunpack.c.l.b16 %v1226
        %v2470 = vunpack.c.h.b16 %v1226
        %v2471 = vunpack.c.l.b16 %v1227
        %v2472 = vunpack.c.h.b16 %v1227
        %v2473 = vunpack.c.l.b16 %v1228
        %v2474 = vunpack.c.h.b16 %v1228
        %v2475 = vunpack.c.l.b16 %v1229
        %v2476 = vunpack.c.l.b16 %v1230
        %v2477 = vunpack.c.h.b16 %v1230
        %v2478 = vunpack.c.l.b16 %v1231
        %v2479 = vunpack.c.h.b16 %v1231
        %v2480 = vunpack.c.l.b16 %v1232
        %v2481 = vunpack.c.h.b16 %v1232
        %v2482 = vunpack.c.l.b16 %v1233
        %v2483 = vunpack.c.l.b16 %v1234
        %v2484 = vunpack.c.h.b16 %v1234
        %v2485 = vunpack.c.l.b16 %v1235
        %v2486 = vunpack.c.h.b16 %v1235
        %v2487 = vunpack.c.l.b16 %v1236
        %v2488 = vunpack.c.h.b16 %v1236
        %v2489 = vunpack.c.l.b16 %v1237
        %v2490 = vunpack.c.l.b16 %v1238
        %v2491 = vunpack.c.h.b16 %v1238
        %v2492 = vunpack.c.l.b16 %v1239
        %v2493 = vunpack.c.h.b16 %v1239
        %v2494 = vunpack.c.l.b16 %v1240
        %v2495 = vunpack.c.h.b16 %v1240
        %v2496 = vunpack.c.l.b16 %v1241
        %v2497 = vunpack.c.l.b16 %v1242
        %v2498 = vunpack.c.h.b16 %v1242
        %v2499 = vunpack.c.l.b16 %v1243
        %v2500 = vunpack.c.h.b16 %v1243
        %v2501 = vunpack.c.l.b16 %v1244
        %v2502 = vunpack.c.h.b16 %v1244
        %v2503 = vunpack.c.l.b16 %v1245
        %v2504 = vunpack.c.l.b16 %v1246
        %v2505 = vunpack.c.h.b16 %v1246
        %v2506 = vunpack.c.l.b16 %v1247
        %v2507 = vunpack.c.h.b16 %v1247
        %v2508 = vunpack.c.l.b16 %v1248
        %v2509 = vunpack.c.h.b16 %v1248
        %v2510 = vunpack.c.l.b16 %v1249
        %v2511 = vunpack.c.l.b16 %v1250
        %v2512 = vunpack.c.h.b16 %v1250
        %v2513 = vunpack.c.l.b16 %v1251
        %v2514 = vunpack.c.h.b16 %v1251
        %v2515 = vunpack.c.l.b16 %v1252
        %v2516 = vunpack.c.h.b16 %v1252
        %v2517 = vunpack.c.l.b16 %v1253
        %v2518 = vunpack.c.l.b16 %v1254
        %v2519 = vunpack.c.h.b16 %v1254
        %v2520 = vunpack.c.l.b16 %v1255
        %v2521 = vunpack.c.h.b16 %v1255
        %v2522 = vunpack.c.l.b16 %v1256
        %v2523 = vunpack.c.h.b16 %v1256
        %v2524 = vunpack.c.l.b16 %v1257
        %v2525 = vunpack.c.l.b16 %v1258
        %v2526 = vunpack.c.h.b16 %v1258
        %v2527 = vunpack.c.l.b16 %v1259
        %v2528 = vunpack.c.h.b16 %v1259
        %v2529 = vunpack.c.l.b16 %v1260
        %v2530 = vunpack.c.h.b16 %v1260
        %v2531 = vunpack.c.l.b16 %v1261
        %v2532 = vunpack.c.l.b16 %v1262
        %v2533 = vunpack.c.h.b16 %v1262
        %v2534 = vunpack.c.l.b16 %v1263
        %v2535 = vunpack.c.h.b16 %v1263
        %v2536 = vunpack.c.l.b16 %v1264
        %v2537 = vunpack.c.h.b16 %v1264
        %v2538 = vunpack.c.l.b16 %v1265
        %v2539 = vunpack.c.l.b16 %v1266
        %v2540 = vunpack.c.h.b16 %v1266
        %v2541 = vunpack.c.l.b16 %v1267
        %v2542 = vunpack.c.h.b16 %v1267
        %v2543 = vunpack.c.l.b16 %v1268
        %v2544 = vunpack.c.h.b16 %v1268
        %v2545 = vunpack.c.l.b16 %v1269
        %v2546 = vunpack.c.l.b16 %v1270
        %v2547 = vunpack.c.h.b16 %v1270
        %v2548 = vunpack.c.l.b16 %v1271
        %v2549 = vunpack.c.h.b16 %v1271
        %v2550 = vunpack.c.l.b16 %v1272
        %v2551 = vunpack.c.h.b16 %v1272
        %v2552 = vunpack.c.l.b16 %v1273
        %v2553 = vunpack.c.l.b16 %v1274
        %v2554 = vunpack.c.h.b16 %v1274
        %v2555 = vunpack.c.l.b16 %v1275
        %v2556 = vunpack.c.h.b16 %v1275
        %v2557 = vunpack.c.l.b16 %v1276
        %v2558 = vunpack.c.h.b16 %v1276
        %v2559 = vunpack.c.l.b16 %v1277
        %v2560 = vunpack.c.l.b16 %v1278
        %v2561 = vunpack.c.h.b16 %v1278
        %v2562 = vunpack.c.l.b16 %v1279
        %v2563 = vunpack.c.h.b16 %v1279
        %v2564 = vunpack.c.l.b16 %v1280
        %v2565 = vunpack.c.h.b16 %v1280
        %v2566 = vunpack.c.l.b16 %v1281
        %v2567 = vunpack.c.l.b16 %v1282
        %v2568 = vunpack.c.h.b16 %v1282
        %v2569 = vunpack.c.l.b16 %v1283
        %v2570 = vunpack.c.h.b16 %v1283
        %v2571 = vunpack.c.l.b16 %v1284
        %v2572 = vunpack.c.h.b16 %v1284
        %v2573 = vunpack.c.l.b16 %v1285
        %v2574 = vunpack.c.l.b16 %v1286
        %v2575 = vunpack.c.h.b16 %v1286
        %v2576 = vunpack.c.l.b16 %v1287
        %v2577 = vunpack.c.h.b16 %v1287
        %v2578 = vunpack.c.l.b16 %v1288
        %v2579 = vunpack.c.h.b16 %v1288
        %v2580 = vunpack.c.l.b16 %v1289
        %v2581 = vunpack.c.l.b16 %v1290
        %v2582 = vunpack.c.h.b16 %v1290
        %v2583 = vunpack.c.l.b16 %v1291
        %v2584 = vunpack.c.h.b16 %v1291
        %v2585 = vunpack.c.l.b16 %v1292
        %v2586 = vunpack.c.h.b16 %v1292
        %v2587 = vunpack.c.l.b16 %v1293
        %v2588 = vunpack.c.l.b16 %v1294
        %v2589 = vunpack.c.h.b16 %v1294
        %v2590 = vunpack.c.l.b16 %v1295
        %v2591 = vunpack.c.h.b16 %v1295
        %v2592 = vunpack.c.l.b16 %v1296
        %v2593 = vunpack.c.h.b16 %v1296
        %v2594 = vunpack.c.l.b16 %v1297
        %v2595 = vunpack.c.l.b16 %v1298
        %v2596 = vunpack.c.h.b16 %v1298
        %v2597 = vunpack.c.l.b16 %v1299
        %v2598 = vunpack.c.h.b16 %v1299
        %v2599 = vunpack.c.l.b16 %v1300
        %v2600 = vunpack.c.h.b16 %v1300
        %v2601 = vunpack.c.l.b16 %v1301
        %v2602 = vunpack.c.l.b16 %v1302
        %v2603 = vunpack.c.h.b16 %v1302
        %v2604 = vunpack.c.l.b16 %v1303
        %v2605 = vunpack.c.h.b16 %v1303
        %v2606 = vunpack.c.l.b16 %v1304
        %v2607 = vunpack.c.h.b16 %v1304
        %v2608 = vunpack.c.l.b16 %v1305
        %v2609 = vunpack.c.l.b16 %v1306
        %v2610 = vunpack.c.h.b16 %v1306
        %v2611 = vunpack.c.l.b16 %v1307
        %v2612 = vunpack.c.h.b16 %v1307
        %v2613 = vunpack.c.l.b16 %v1308
        %v2614 = vunpack.c.h.b16 %v1308
        %v2615 = vunpack.c.l.b16 %v1309
        %v2616 = vunpack.c.l.b16 %v1310
        %v2617 = vunpack.c.h.b16 %v1310
        %v2618 = vunpack.c.l.b16 %v1311
        %v2619 = vunpack.c.h.b16 %v1311
        %v2620 = vunpack.c.l.b16 %v1312
        %v2621 = vunpack.c.h.b16 %v1312
        %v2622 = vunpack.c.l.b16 %v1313
        %v2623 = vunpack.c.l.b16 %v1314
        %v2624 = vunpack.c.h.b16 %v1314
        %v2625 = vunpack.c.l.b16 %v1315
        %v2626 = vunpack.c.h.b16 %v1315
        %v2627 = vunpack.c.l.b16 %v1316
        %v2628 = vunpack.c.h.b16 %v1316
        %v2629 = vunpack.c.l.b16 %v1317
        %v2630 = vunpack.c.l.b16 %v1318
        %v2631 = vunpack.c.h.b16 %v1318
        %v2632 = vunpack.c.l.b16 %v1319
        %v2633 = vunpack.c.h.b16 %v1319
        %v2634 = vunpack.c.l.b16 %v1320
        %v2635 = vunpack.c.h.b16 %v1320
        %v2636 = vunpack.c.l.b16 %v1321
        %v2637 = vunpack.c.l.b16 %v1322
        %v2638 = vunpack.c.h.b16 %v1322
        %v2639 = vunpack.c.l.b16 %v1323
        %v2640 = vunpack.c.h.b16 %v1323
        %v2641 = vunpack.c.l.b16 %v1324
        %v2642 = vunpack.c.h.b16 %v1324
        %v2643 = vunpack.c.l.b16 %v1325
        %v2644 = vunpack.c.l.b16 %v1326
        %v2645 = vunpack.c.h.b16 %v1326
        %v2646 = vunpack.c.l.b16 %v1327
        %v2647 = vunpack.c.h.b16 %v1327
        %v2648 = vunpack.c.l.b16 %v1328
        %v2649 = vunpack.c.h.b16 %v1328
        %v2650 = vunpack.c.l.b16 %v1329
        %v2651 = vunpack.c.l.b16 %v1330
        %v2652 = vunpack.c.h.b16 %v1330
        %v2653 = vunpack.c.l.b16 %v1331
        %v2654 = vunpack.c.h.b16 %v1331
        %v2655 = vunpack.c.l.b16 %v1332
        %v2656 = vunpack.c.h.b16 %v1332
        %v2657 = vunpack.c.l.b16 %v1333
        %v2658 = vunpack.c.l.b16 %v1334
        %v2659 = vunpack.c.h.b16 %v1334
        %v2660 = vunpack.c.l.b16 %v1335
        %v2661 = vunpack.c.h.b16 %v1335
        %v2662 = vunpack.c.l.b16 %v1336
        %v2663 = vunpack.c.h.b16 %v1336
        %v2664 = vunpack.c.l.b16 %v1337
        %v2665 = vunpack.c.l.b16 %v1338
        %v2666 = vunpack.c.h.b16 %v1338
        %v2667 = vunpack.c.l.b16 %v1339
        %v2668 = vunpack.c.h.b16 %v1339
        %v2669 = vunpack.c.l.b16 %v1340
        %v2670 = vunpack.c.h.b16 %v1340
        %v2671 = vunpack.c.l.b16 %v1341
        %v2672 = vunpack.c.l.b16 %v1342
        %v2673 = vunpack.c.h.b16 %v1342
        %v2674 = vunpack.c.l.b16 %v1343
        %v2675 = vunpack.c.h.b16 %v1343
        %v2676 = vunpack.c.l.b16 %v1344
        %v2677 = vunpack.c.h.b16 %v1344
        %v2678 = vunpack.c.l.b16 %v1345
        %v2679 = vunpack.c.l.b16 %v1346
        %v2680 = vunpack.c.h.b16 %v1346
        %v2681 = vunpack.c.l.b16 %v1347
        %v2682 = vunpack.c.h.b16 %v1347
        %v2683 = vunpack.c.l.b16 %v1348
        %v2684 = vunpack.c.h.b16 %v1348
        %v2685 = vunpack.c.l.b16 %v1349
        %v2686 = vunpack.c.l.b16 %v1350
        %v2687 = vunpack.c.h.b16 %v1350
        %v2688 = vunpack.c.l.b16 %v1351
        %v2689 = vunpack.c.h.b16 %v1351
        %v2690 = vunpack.c.l.b16 %v1352
        %v2691 = vunpack.c.h.b16 %v1352
        %v2692 = vunpack.c.l.b16 %v1353
        %v2693 = vunpack.c.l.b16 %v1354
        %v2694 = vunpack.c.h.b16 %v1354
        %v2695 = vunpack.c.l.b16 %v1355
        %v2696 = vunpack.c.h.b16 %v1355
        %v2697 = vunpack.c.l.b16 %v1356
        %v2698 = vunpack.c.h.b16 %v1356
        %v2699 = vunpack.c.l.b16 %v1357
        %v2700 = vunpack.c.l.b16 %v1358
        %v2701 = vunpack.c.h.b16 %v1358
        %v2702 = vunpack.c.l.b16 %v1359
        %v2703 = vunpack.c.h.b16 %v1359
        %v2704 = vunpack.c.l.b16 %v1360
        %v2705 = vunpack.c.h.b16 %v1360
        %v2706 = vunpack.c.l.b16 %v1361
        %v2707 = vunpack.c.l.b16 %v1362
        %v2708 = vunpack.c.h.b16 %v1362
        %v2709 = vunpack.c.l.b16 %v1363
        %v2710 = vunpack.c.h.b16 %v1363
        %v2711 = vunpack.c.l.b16 %v1364
        %v2712 = vunpack.c.h.b16 %v1364
        %v2713 = vunpack.c.l.b16 %v1365
        %v2714 = vunpack.c.l.b16 %v1366
        %v2715 = vunpack.c.h.b16 %v1366
        %v2716 = vunpack.c.l.b16 %v1367
        %v2717 = vunpack.c.h.b16 %v1367
        %v2718 = vunpack.c.l.b16 %v1368
        %v2719 = vunpack.c.h.b16 %v1368
        %v2720 = vunpack.c.l.b16 %v1369
        %v2721 = vunpack.c.l.b16 %v1370
        %v2722 = vunpack.c.h.b16 %v1370
        %v2723 = vunpack.c.l.b16 %v1371
        %v2724 = vunpack.c.h.b16 %v1371
        %v2725 = vunpack.c.l.b16 %v1372
        %v2726 = vunpack.c.h.b16 %v1372
        %v2727 = vunpack.c.l.b16 %v1373
        %v2728 = vunpack.c.l.b16 %v1374
        %v2729 = vunpack.c.h.b16 %v1374
        %v2730 = vunpack.c.l.b16 %v1375
        %v2731 = vunpack.c.h.b16 %v1375
        %v2732 = vunpack.c.l.b16 %v1376
        %v2733 = vunpack.c.h.b16 %v1376
        %v2734 = vunpack.c.l.b16 %v1377
        %v2735 = vunpack.c.l.b16 %v1378
        %v2736 = vunpack.c.h.b16 %v1378
        %v2737 = vunpack.c.l.b16 %v1379
        %v2738 = vunpack.c.h.b16 %v1379
        %v2739 = vunpack.c.l.b16 %v1380
        %v2740 = vunpack.c.h.b16 %v1380
        %v2741 = vunpack.c.l.b16 %v1381
        %v2742 = vunpack.c.l.b16 %v1382
        %v2743 = vunpack.c.h.b16 %v1382
        %v2744 = vunpack.c.l.b16 %v1383
        %v2745 = vunpack.c.h.b16 %v1383
        %v2746 = vunpack.c.l.b16 %v1384
        %v2747 = vunpack.c.h.b16 %v1384
        %v2748 = vunpack.c.l.b16 %v1385
        %v2749 = vunpack.c.l.b16 %v1386
        %v2750 = vunpack.c.h.b16 %v1386
        %v2751 = vunpack.c.l.b16 %v1387
        %v2752 = vunpack.c.h.b16 %v1387
        %v2753 = vunpack.c.l.b16 %v1388
        %v2754 = vunpack.c.h.b16 %v1388
        %v2755 = vunpack.c.l.b16 %v1389
        %v2756 = vunpack.c.l.b16 %v1390
        %v2757 = vunpack.c.h.b16 %v1390
        %v2758 = vunpack.c.l.b16 %v1391
        %v2759 = vunpack.c.h.b16 %v1391
        %v2760 = vunpack.c.l.b16 %v1392
        %v2761 = vunpack.c.h.b16 %v1392
        %v2762 = vunpack.c.l.b16 %v1393
        %v2763 = vunpack.c.l.b16 %v1394
        %v2764 = vunpack.c.h.b16 %v1394
        %v2765 = vunpack.c.l.b16 %v1395
        %v2766 = vunpack.c.h.b16 %v1395
        %v2767 = vunpack.c.l.b16 %v1396
        %v2768 = vunpack.c.h.b16 %v1396
        %v2769 = vunpack.c.l.b16 %v1397
        %v2770 = vunpack.c.l.b16 %v1398
        %v2771 = vunpack.c.h.b16 %v1398
        %v2772 = vunpack.c.l.b16 %v1399
        %v2773 = vunpack.c.h.b16 %v1399
        %v2774 = vunpack.c.l.b16 %v1400
        %v2775 = vunpack.c.h.b16 %v1400
        %v2776 = vunpack.c.l.b16 %v1401
        %v2777 = vunpack.c.l.b16 %v1402
        %v2778 = vunpack.c.h.b16 %v1402
        %v2779 = vunpack.c.l.b16 %v1403
        %v2780 = vunpack.c.h.b16 %v1403
        %v2781 = vunpack.c.l.b16 %v1404
        %v2782 = vunpack.c.h.b16 %v1404
        %v2783 = vunpack.c.l.b16 %v1405
        %v2784 = vunpack.c.l.b16 %v1406
        %v2785 = vunpack.c.h.b16 %v1406
        %v2786 = vunpack.c.l.b16 %v1407
        %v2787 = vunpack.c.h.b16 %v1407
        %v2788 = vunpack.c.l.b16 %v1408
        %v2789 = vunpack.c.h.b16 %v1408
        %v2790 = vunpack.c.l.b16 %v1409
        %v2791 = vunpack.c.l.b16 %v1410
        %v2792 = vunpack.c.h.b16 %v1410
        %v2793 = vunpack.c.l.b16 %v1411
        %v2794 = vunpack.c.h.b16 %v1411
        %v2795 = vunpack.c.l.b16 %v1412
        %v2796 = vunpack.c.h.b16 %v1412
        %v2797 = vunpack.c.l.b16 %v1413
        %v2798 = vunpack.c.l.b16 %v1414
        %v2799 = vunpack.c.h.b16 %v1414
        %v2800 = vunpack.c.l.b16 %v1415
        %v2801 = vunpack.c.h.b16 %v1415
        %v2802 = vunpack.c.l.b16 %v1416
        %v2803 = vunpack.c.h.b16 %v1416
        %v2804 = vunpack.c.l.b16 %v1417
        %v2805 = vunpack.c.l.b16 %v1418
        %v2806 = vunpack.c.h.b16 %v1418
        %v2807 = vunpack.c.l.b16 %v1419
        %v2808 = vunpack.c.h.b16 %v1419
        %v2809 = vunpack.c.l.b16 %v1420
        %v2810 = vunpack.c.h.b16 %v1420
        %v2811 = vunpack.c.l.b16 %v1421
        %v2812 = vunpack.c.l.b16 %v1422
        %v2813 = vunpack.c.h.b16 %v1422
        %v2814 = vunpack.c.l.b16 %v1423
        %v2815 = vunpack.c.h.b16 %v1423
        %v2816 = vunpack.c.l.b16 %v1424
        %v2817 = vunpack.c.h.b16 %v1424
        %v2818 = vunpack.c.l.b16 %v1425
        %v2819 = vunpack.c.l.b16 %v1426
        %v2820 = vunpack.c.h.b16 %v1426
        %v2821 = vunpack.c.l.b16 %v1427
        %v2822 = vunpack.c.h.b16 %v1427
        %v2823 = vunpack.c.l.b16 %v1428
        %v2824 = vunpack.c.h.b16 %v1428
        %v2825 = vunpack.c.l.b16 %v1429
        %v2826 = vunpack.c.l.b16 %v1430
        %v2827 = vunpack.c.h.b16 %v1430
        %v2828 = vunpack.c.l.b16 %v1431
        %v2829 = vunpack.c.h.b16 %v1431
        %v2830 = vunpack.c.l.b16 %v1432
        %v2831 = vunpack.c.h.b16 %v1432
        %v2832 = vunpack.c.l.b16 %v1433
        %v2833 = vunpack.c.l.b16 %v1434
        %v2834 = vunpack.c.h.b16 %v1434
        %v2835 = vunpack.c.l.b16 %v1435
        %v2836 = vunpack.c.h.b16 %v1435
        %v2837 = vunpack.c.l.b16 %v1436
        %v2838 = vunpack.c.h.b16 %v1436
        %v2839 = vunpack.c.l.b16 %v1437
        %v2840 = vunpack.c.l.b16 %v1438
        %v2841 = vunpack.c.h.b16 %v1438
        %v2842 = vunpack.c.l.b16 %v1439
        %v2843 = vunpack.c.h.b16 %v1439
        %v2844 = vunpack.c.l.b16 %v1440
        %v2845 = vunpack.c.h.b16 %v1440
        %v2846 = vunpack.c.l.b16 %v1441
        %v2847 = vunpack.c.l.b16 %v1442
        %v2848 = vunpack.c.h.b16 %v1442
        %v2849 = vunpack.c.l.b16 %v1443
        %v2850 = vunpack.c.h.b16 %v1443
        %v2851 = vunpack.c.l.b16 %v1444
        %v2852 = vunpack.c.h.b16 %v1444
        %v2853 = vunpack.c.l.b16 %v1445
        %v2854 = vpack.c.b16 %v1965, %v1958
        %v2855 = vpack.c.b16 %v1966, %v1959
        %v2856 = vpack.c.b16 %v1967, %v1960
        %v2857 = vpack.c.b16 %v1968, %v1961
        %v2858 = vpack.c.b16 %v1969, %v1962
        %v2859 = vpack.c.b16 %v1970, %v1963
        %v2860 = vpack.c.b16 %v1971, %v1964
        %v2861 = vpack.c.b16 %v1979, %v1972
        %v2862 = vpack.c.b16 %v1980, %v1973
        %v2863 = vpack.c.b16 %v1981, %v1974
        %v2864 = vpack.c.b16 %v1982, %v1975
        %v2865 = vpack.c.b16 %v1983, %v1976
        %v2866 = vpack.c.b16 %v1984, %v1977
        %v2867 = vpack.c.b16 %v1985, %v1978
        %v2868 = vpack.c.b16 %v1993, %v1986
        %v2869 = vpack.c.b16 %v1994, %v1987
        %v2870 = vpack.c.b16 %v1995, %v1988
        %v2871 = vpack.c.b16 %v1996, %v1989
        %v2872 = vpack.c.b16 %v1997, %v1990
        %v2873 = vpack.c.b16 %v1998, %v1991
        %v2874 = vpack.c.b16 %v1999, %v1992
        %v2875 = vpack.c.b16 %v2007, %v2000
        %v2876 = vpack.c.b16 %v2008, %v2001
        %v2877 = vpack.c.b16 %v2009, %v2002
        %v2878 = vpack.c.b16 %v2010, %v2003
        %v2879 = vpack.c.b16 %v2011, %v2004
        %v2880 = vpack.c.b16 %v2012, %v2005
        %v2881 = vpack.c.b16 %v2013, %v2006
        %v2882 = vpack.c.b16 %v2021, %v2014
        %v2883 = vpack.c.b16 %v2022, %v2015
        %v2884 = vpack.c.b16 %v2023, %v2016
        %v2885 = vpack.c.b16 %v2024, %v2017
        %v2886 = vpack.c.b16 %v2025, %v2018
        %v2887 = vpack.c.b16 %v2026, %v2019
        %v2888 = vpack.c.b16 %v2027, %v2020
        %v2889 = vpack.c.b16 %v2035, %v2028
        %v2890 = vpack.c.b16 %v2036, %v2029
        %v2891 = vpack.c.b16 %v2037, %v2030
        %v2892 = vpack.c.b16 %v2038, %v2031
        %v2893 = vpack.c.b16 %v2039, %v2032
        %v2894 = vpack.c.b16 %v2040, %v2033
        %v2895 = vpack.c.b16 %v2041, %v2034
        %v2896 = vpack.c.b16 %v2049, %v2042
        %v2897 = vpack.c.b16 %v2050, %v2043
        %v2898 = vpack.c.b16 %v2051, %v2044
        %v2899 = vpack.c.b16 %v2052, %v2045
        %v2900 = vpack.c.b16 %v2053, %v2046
        %v2901 = vpack.c.b16 %v2054, %v2047
        %v2902 = vpack.c.b16 %v2055, %v2048
        %v2903 = vpack.c.b16 %v2063, %v2056
        %v2904 = vpack.c.b16 %v2064, %v2057
        %v2905 = vpack.c.b16 %v2065, %v2058
        %v2906 = vpack.c.b16 %v2066, %v2059
        %v2907 = vpack.c.b16 %v2067, %v2060
        %v2908 = vpack.c.b16 %v2068, %v2061
        %v2909 = vpack.c.b16 %v2069, %v2062
        %v2910 = vpack.c.b16 %v2077, %v2070
        %v2911 = vpack.c.b16 %v2078, %v2071
        %v2912 = vpack.c.b16 %v2079, %v2072
        %v2913 = vpack.c.b16 %v2080, %v2073
        %v2914 = vpack.c.b16 %v2081, %v2074
        %v2915 = vpack.c.b16 %v2082, %v2075
        %v2916 = vpack.c.b16 %v2083, %v2076
        %v2917 = vpack.c.b16 %v2091, %v2084
        %v2918 = vpack.c.b16 %v2092, %v2085
        %v2919 = vpack.c.b16 %v2093, %v2086
        %v2920 = vpack.c.b16 %v2094, %v2087
        %v2921 = vpack.c.b16 %v2095, %v2088
        %v2922 = vpack.c.b16 %v2096, %v2089
        %v2923 = vpack.c.b16 %v2097, %v2090
        %v2924 = vpack.c.b16 %v2105, %v2098
        %v2925 = vpack.c.b16 %v2106, %v2099
        %v2926 = vpack.c.b16 %v2107, %v2100
        %v2927 = vpack.c.b16 %v2108, %v2101
        %v2928 = vpack.c.b16 %v2109, %v2102
        %v2929 = vpack.c.b16 %v2110, %v2103
        %v2930 = vpack.c.b16 %v2111, %v2104
        %v2931 = vpack.c.b16 %v2119, %v2112
        %v2932 = vpack.c.b16 %v2120, %v2113
        %v2933 = vpack.c.b16 %v2121, %v2114
        %v2934 = vpack.c.b16 %v2122, %v2115
        %v2935 = vpack.c.b16 %v2123, %v2116
        %v2936 = vpack.c.b16 %v2124, %v2117
        %v2937 = vpack.c.b16 %v2125, %v2118
        %v2938 = vpack.c.b16 %v2133, %v2126
        %v2939 = vpack.c.b16 %v2134, %v2127
        %v2940 = vpack.c.b16 %v2135, %v2128
        %v2941 = vpack.c.b16 %v2136, %v2129
        %v2942 = vpack.c.b16 %v2137, %v2130
        %v2943 = vpack.c.b16 %v2138, %v2131
        %v2944 = vpack.c.b16 %v2139, %v2132
        %v2945 = vpack.c.b16 %v2147, %v2140
        %v2946 = vpack.c.b16 %v2148, %v2141
        %v2947 = vpack.c.b16 %v2149, %v2142
        %v2948 = vpack.c.b16 %v2150, %v2143
        %v2949 = vpack.c.b16 %v2151, %v2144
        %v2950 = vpack.c.b16 %v2152, %v2145
        %v2951 = vpack.c.b16 %v2153, %v2146
        %v2952 = vpack.c.b16 %v2161, %v2154
        %v2953 = vpack.c.b16 %v2162, %v2155
        %v2954 = vpack.c.b16 %v2163, %v2156
        %v2955 = vpack.c.b16 %v2164, %v2157
        %v2956 = vpack.c.b16 %v2165, %v2158
        %v2957 = vpack.c.b16 %v2166, %v2159
        %v2958 = vpack.c.b16 %v2167, %v2160
        %v2959 = vpack.c.b16 %v2175, %v2168
        %v2960 = vpack.c.b16 %v2176, %v2169
        %v2961 = vpack.c.b16 %v2177, %v2170
        %v2962 = vpack.c.b16 %v2178, %v2171
        %v2963 = vpack.c.b16 %v2179, %v2172
        %v2964 = vpack.c.b16 %v2180, %v2173
        %v2965 = vpack.c.b16 %v2181, %v2174
        %v2966 = vpack.c.b16 %v2189, %v2182
        %v2967 = vpack.c.b16 %v2190, %v2183
        %v2968 = vpack.c.b16 %v2191, %v2184
        %v2969 = vpack.c.b16 %v2192, %v2185
        %v2970 = vpack.c.b16 %v2193, %v2186
        %v2971 = vpack.c.b16 %v2194, %v2187
        %v2972 = vpack.c.b16 %v2195, %v2188
        %v2973 = vpack.c.b16 %v2203, %v2196
        %v2974 = vpack.c.b16 %v2204, %v2197
        %v2975 = vpack.c.b16 %v2205, %v2198
        %v2976 = vpack.c.b16 %v2206, %v2199
        %v2977 = vpack.c.b16 %v2207, %v2200
        %v2978 = vpack.c.b16 %v2208, %v2201
        %v2979 = vpack.c.b16 %v2209, %v2202
        %v2980 = vpack.c.b16 %v2217, %v2210
        %v2981 = vpack.c.b16 %v2218, %v2211
        %v2982 = vpack.c.b16 %v2219, %v2212
        %v2983 = vpack.c.b16 %v2220, %v2213
        %v2984 = vpack.c.b16 %v2221, %v2214
        %v2985 = vpack.c.b16 %v2222, %v2215
        %v2986 = vpack.c.b16 %v2223, %v2216
        %v2987 = vpack.c.b16 %v2231, %v2224
        %v2988 = vpack.c.b16 %v2232, %v2225
        %v2989 = vpack.c.b16 %v2233, %v2226
        %v2990 = vpack.c.b16 %v2234, %v2227
        %v2991 = vpack.c.b16 %v2235, %v2228
        %v2992 = vpack.c.b16 %v2236, %v2229
        %v2993 = vpack.c.b16 %v2237, %v2230
        %v2994 = vpack.c.b16 %v2245, %v2238
        %v2995 = vpack.c.b16 %v2246, %v2239
        %v2996 = vpack.c.b16 %v2247, %v2240
        %v2997 = vpack.c.b16 %v2248, %v2241
        %v2998 = vpack.c.b16 %v2249, %v2242
        %v2999 = vpack.c.b16 %v2250, %v2243
        %v3000 = vpack.c.b16 %v2251, %v2244
        %v3001 = vpack.c.b16 %v2259, %v2252
        %v3002 = vpack.c.b16 %v2260, %v2253
        %v3003 = vpack.c.b16 %v2261, %v2254
        %v3004 = vpack.c.b16 %v2262, %v2255
        %v3005 = vpack.c.b16 %v2263, %v2256
        %v3006 = vpack.c.b16 %v2264, %v2257
        %v3007 = vpack.c.b16 %v2265, %v2258
        %v3008 = vpack.c.b16 %v2273, %v2266
        %v3009 = vpack.c.b16 %v2274, %v2267
        %v3010 = vpack.c.b16 %v2275, %v2268
        %v3011 = vpack.c.b16 %v2276, %v2269
        %v3012 = vpack.c.b16 %v2277, %v2270
        %v3013 = vpack.c.b16 %v2278, %v2271
        %v3014 = vpack.c.b16 %v2279, %v2272
        %v3015 = vpack.c.b16 %v2287, %v2280
        %v3016 = vpack.c.b16 %v2288, %v2281
        %v3017 = vpack.c.b16 %v2289, %v2282
        %v3018 = vpack.c.b16 %v2290, %v2283
        %v3019 = vpack.c.b16 %v2291, %v2284
        %v3020 = vpack.c.b16 %v2292, %v2285
        %v3021 = vpack.c.b16 %v2293, %v2286
        %v3022 = vpack.c.b16 %v2301, %v2294
        %v3023 = vpack.c.b16 %v2302, %v2295
        %v3024 = vpack.c.b16 %v2303, %v2296
        %v3025 = vpack.c.b16 %v2304, %v2297
        %v3026 = vpack.c.b16 %v2305, %v2298
        %v3027 = vpack.c.b16 %v2306, %v2299
        %v3028 = vpack.c.b16 %v2307, %v2300
        %v3029 = vpack.c.b16 %v2315, %v2308
        %v3030 = vpack.c.b16 %v2316, %v2309
        %v3031 = vpack.c.b16 %v2317, %v2310
        %v3032 = vpack.c.b16 %v2318, %v2311
        %v3033 = vpack.c.b16 %v2319, %v2312
        %v3034 = vpack.c.b16 %v2320, %v2313
        %v3035 = vpack.c.b16 %v2321, %v2314
        %v3036 = vpack.c.b16 %v2329, %v2322
        %v3037 = vpack.c.b16 %v2330, %v2323
        %v3038 = vpack.c.b16 %v2331, %v2324
        %v3039 = vpack.c.b16 %v2332, %v2325
        %v3040 = vpack.c.b16 %v2333, %v2326
        %v3041 = vpack.c.b16 %v2334, %v2327
        %v3042 = vpack.c.b16 %v2335, %v2328
        %v3043 = vpack.c.b16 %v2343, %v2336
        %v3044 = vpack.c.b16 %v2344, %v2337
        %v3045 = vpack.c.b16 %v2345, %v2338
        %v3046 = vpack.c.b16 %v2346, %v2339
        %v3047 = vpack.c.b16 %v2347, %v2340
        %v3048 = vpack.c.b16 %v2348, %v2341
        %v3049 = vpack.c.b16 %v2349, %v2342
        %v3050 = vpack.c.b16 %v2357, %v2350
        %v3051 = vpack.c.b16 %v2358, %v2351
        %v3052 = vpack.c.b16 %v2359, %v2352
        %v3053 = vpack.c.b16 %v2360, %v2353
        %v3054 = vpack.c.b16 %v2361, %v2354
        %v3055 = vpack.c.b16 %v2362, %v2355
        %v3056 = vpack.c.b16 %v2363, %v2356
        %v3057 = vpack.c.b16 %v2371, %v2364
        %v3058 = vpack.c.b16 %v2372, %v2365
        %v3059 = vpack.c.b16 %v2373, %v2366
        %v3060 = vpack.c.b16 %v2374, %v2367
        %v3061 = vpack.c.b16 %v2375, %v2368
        %v3062 = vpack.c.b16 %v2376, %v2369
        %v3063 = vpack.c.b16 %v2377, %v2370
        %v3064 = vpack.c.b16 %v2385, %v2378
        %v3065 = vpack.c.b16 %v2386, %v2379
        %v3066 = vpack.c.b16 %v2387, %v2380
        %v3067 = vpack.c.b16 %v2388, %v2381
        %v3068 = vpack.c.b16 %v2389, %v2382
        %v3069 = vpack.c.b16 %v2390, %v2383
        %v3070 = vpack.c.b16 %v2391, %v2384
        %v3071 = vpack.c.b16 %v2399, %v2392
        %v3072 = vpack.c.b16 %v2400, %v2393
        %v3073 = vpack.c.b16 %v2401, %v2394
        %v3074 = vpack.c.b16 %v2402, %v2395
        %v3075 = vpack.c.b16 %v2403, %v2396
        %v3076 = vpack.c.b16 %v2404, %v2397
        %v3077 = vpack.c.b16 %v2405, %v2398
        %v3078 = vpack.c.b16 %v2413, %v2406
        %v3079 = vpack.c.b16 %v2414, %v2407
        %v3080 = vpack.c.b16 %v2415, %v2408
        %v3081 = vpack.c.b16 %v2416, %v2409
        %v3082 = vpack.c.b16 %v2417, %v2410
        %v3083 = vpack.c.b16 %v2418, %v2411
        %v3084 = vpack.c.b16 %v2419, %v2412
        %v3085 = vpack.c.b16 %v2427, %v2420
        %v3086 = vpack.c.b16 %v2428, %v2421
        %v3087 = vpack.c.b16 %v2429, %v2422
        %v3088 = vpack.c.b16 %v2430, %v2423
        %v3089 = vpack.c.b16 %v2431, %v2424
        %v3090 = vpack.c.b16 %v2432, %v2425
        %v3091 = vpack.c.b16 %v2433, %v2426
        %v3092 = vpack.c.b16 %v2441, %v2434
        %v3093 = vpack.c.b16 %v2442, %v2435
        %v3094 = vpack.c.b16 %v2443, %v2436
        %v3095 = vpack.c.b16 %v2444, %v2437
        %v3096 = vpack.c.b16 %v2445, %v2438
        %v3097 = vpack.c.b16 %v2446, %v2439
        %v3098 = vpack.c.b16 %v2447, %v2440
        %v3099 = vpack.c.b16 %v2455, %v2448
        %v3100 = vpack.c.b16 %v2456, %v2449
        %v3101 = vpack.c.b16 %v2457, %v2450
        %v3102 = vpack.c.b16 %v2458, %v2451
        %v3103 = vpack.c.b16 %v2459, %v2452
        %v3104 = vpack.c.b16 %v2460, %v2453
        %v3105 = vpack.c.b16 %v2461, %v2454
        %v3106 = vpack.c.b16 %v2469, %v2462
        %v3107 = vpack.c.b16 %v2470, %v2463
        %v3108 = vpack.c.b16 %v2471, %v2464
        %v3109 = vpack.c.b16 %v2472, %v2465
        %v3110 = vpack.c.b16 %v2473, %v2466
        %v3111 = vpack.c.b16 %v2474, %v2467
        %v3112 = vpack.c.b16 %v2475, %v2468
        %v3113 = vpack.c.b16 %v2483, %v2476
        %v3114 = vpack.c.b16 %v2484, %v2477
        %v3115 = vpack.c.b16 %v2485, %v2478
        %v3116 = vpack.c.b16 %v2486, %v2479
        %v3117 = vpack.c.b16 %v2487, %v2480
        %v3118 = vpack.c.b16 %v2488, %v2481
        %v3119 = vpack.c.b16 %v2489, %v2482
        %v3120 = vpack.c.b16 %v2497, %v2490
        %v3121 = vpack.c.b16 %v2498, %v2491
        %v3122 = vpack.c.b16 %v2499, %v2492
        %v3123 = vpack.c.b16 %v2500, %v2493
        %v3124 = vpack.c.b16 %v2501, %v2494
        %v3125 = vpack.c.b16 %v2502, %v2495
        %v3126 = vpack.c.b16 %v2503, %v2496
        %v3127 = vpack.c.b16 %v2511, %v2504
        %v3128 = vpack.c.b16 %v2512, %v2505
        %v3129 = vpack.c.b16 %v2513, %v2506
        %v3130 = vpack.c.b16 %v2514, %v2507
        %v3131 = vpack.c.b16 %v2515, %v2508
        %v3132 = vpack.c.b16 %v2516, %v2509
        %v3133 = vpack.c.b16 %v2517, %v2510
        %v3134 = vpack.c.b16 %v2525, %v2518
        %v3135 = vpack.c.b16 %v2526, %v2519
        %v3136 = vpack.c.b16 %v2527, %v2520
        %v3137 = vpack.c.b16 %v2528, %v2521
        %v3138 = vpack.c.b16 %v2529, %v2522
        %v3139 = vpack.c.b16 %v2530, %v2523
        %v3140 = vpack.c.b16 %v2531, %v2524
        %v3141 = vpack.c.b16 %v2539, %v2532
        %v3142 = vpack.c.b16 %v2540, %v2533
        %v3143 = vpack.c.b16 %v2541, %v2534
        %v3144 = vpack.c.b16 %v2542, %v2535
        %v3145 = vpack.c.b16 %v2543, %v2536
        %v3146 = vpack.c.b16 %v2544, %v2537
        %v3147 = vpack.c.b16 %v2545, %v2538
        %v3148 = vpack.c.b16 %v2553, %v2546
        %v3149 = vpack.c.b16 %v2554, %v2547
        %v3150 = vpack.c.b16 %v2555, %v2548
        %v3151 = vpack.c.b16 %v2556, %v2549
        %v3152 = vpack.c.b16 %v2557, %v2550
        %v3153 = vpack.c.b16 %v2558, %v2551
        %v3154 = vpack.c.b16 %v2559, %v2552
        %v3155 = vpack.c.b16 %v2567, %v2560
        %v3156 = vpack.c.b16 %v2568, %v2561
        %v3157 = vpack.c.b16 %v2569, %v2562
        %v3158 = vpack.c.b16 %v2570, %v2563
        %v3159 = vpack.c.b16 %v2571, %v2564
        %v3160 = vpack.c.b16 %v2572, %v2565
        %v3161 = vpack.c.b16 %v2573, %v2566
        %v3162 = vpack.c.b16 %v2581, %v2574
        %v3163 = vpack.c.b16 %v2582, %v2575
        %v3164 = vpack.c.b16 %v2583, %v2576
        %v3165 = vpack.c.b16 %v2584, %v2577
        %v3166 = vpack.c.b16 %v2585, %v2578
        %v3167 = vpack.c.b16 %v2586, %v2579
        %v3168 = vpack.c.b16 %v2587, %v2580
        %v3169 = vpack.c.b16 %v2595, %v2588
        %v3170 = vpack.c.b16 %v2596, %v2589
        %v3171 = vpack.c.b16 %v2597, %v2590
        %v3172 = vpack.c.b16 %v2598, %v2591
        %v3173 = vpack.c.b16 %v2599, %v2592
        %v3174 = vpack.c.b16 %v2600, %v2593
        %v3175 = vpack.c.b16 %v2601, %v2594
        %v3176 = vpack.c.b16 %v2609, %v2602
        %v3177 = vpack.c.b16 %v2610, %v2603
        %v3178 = vpack.c.b16 %v2611, %v2604
        %v3179 = vpack.c.b16 %v2612, %v2605
        %v3180 = vpack.c.b16 %v2613, %v2606
        %v3181 = vpack.c.b16 %v2614, %v2607
        %v3182 = vpack.c.b16 %v2615, %v2608
        %v3183 = vpack.c.b16 %v2623, %v2616
        %v3184 = vpack.c.b16 %v2624, %v2617
        %v3185 = vpack.c.b16 %v2625, %v2618
        %v3186 = vpack.c.b16 %v2626, %v2619
        %v3187 = vpack.c.b16 %v2627, %v2620
        %v3188 = vpack.c.b16 %v2628, %v2621
        %v3189 = vpack.c.b16 %v2629, %v2622
        %v3190 = vpack.c.b16 %v2637, %v2630
        %v3191 = vpack.c.b16 %v2638, %v2631
        %v3192 = vpack.c.b16 %v2639, %v2632
        %v3193 = vpack.c.b16 %v2640, %v2633
        %v3194 = vpack.c.b16 %v2641, %v2634
        %v3195 = vpack.c.b16 %v2642, %v2635
        %v3196 = vpack.c.b16 %v2643, %v2636
        %v3197 = vpack.c.b16 %v2651, %v2644
        %v3198 = vpack.c.b16 %v2652, %v2645
        %v3199 = vpack.c.b16 %v2653, %v2646
        %v3200 = vpack.c.b16 %v2654, %v2647
        %v3201 = vpack.c.b16 %v2655, %v2648
        %v3202 = vpack.c.b16 %v2656, %v2649
        %v3203 = vpack.c.b16 %v2657, %v2650
        %v3204 = vpack.c.b16 %v2665, %v2658
        %v3205 = vpack.c.b16 %v2666, %v2659
        %v3206 = vpack.c.b16 %v2667, %v2660
        %v3207 = vpack.c.b16 %v2668, %v2661
        %v3208 = vpack.c.b16 %v2669, %v2662
        %v3209 = vpack.c.b16 %v2670, %v2663
        %v3210 = vpack.c.b16 %v2671, %v2664
        %v3211 = vpack.c.b16 %v2679, %v2672
        %v3212 = vpack.c.b16 %v2680, %v2673
        %v3213 = vpack.c.b16 %v2681, %v2674
        %v3214 = vpack.c.b16 %v2682, %v2675
        %v3215 = vpack.c.b16 %v2683, %v2676
        %v3216 = vpack.c.b16 %v2684, %v2677
        %v3217 = vpack.c.b16 %v2685, %v2678
        %v3218 = vpack.c.b16 %v2693, %v2686
        %v3219 = vpack.c.b16 %v2694, %v2687
        %v3220 = vpack.c.b16 %v2695, %v2688
        %v3221 = vpack.c.b16 %v2696, %v2689
        %v3222 = vpack.c.b16 %v2697, %v2690
        %v3223 = vpack.c.b16 %v2698, %v2691
        %v3224 = vpack.c.b16 %v2699, %v2692
        %v3225 = vpack.c.b16 %v2707, %v2700
        %v3226 = vpack.c.b16 %v2708, %v2701
        %v3227 = vpack.c.b16 %v2709, %v2702
        %v3228 = vpack.c.b16 %v2710, %v2703
        %v3229 = vpack.c.b16 %v2711, %v2704
        %v3230 = vpack.c.b16 %v2712, %v2705
        %v3231 = vpack.c.b16 %v2713, %v2706
        %v3232 = vpack.c.b16 %v2721, %v2714
        %v3233 = vpack.c.b16 %v2722, %v2715
        %v3234 = vpack.c.b16 %v2723, %v2716
        %v3235 = vpack.c.b16 %v2724, %v2717
        %v3236 = vpack.c.b16 %v2725, %v2718
        %v3237 = vpack.c.b16 %v2726, %v2719
        %v3238 = vpack.c.b16 %v2727, %v2720
        %v3239 = vpack.c.b16 %v2735, %v2728
        %v3240 = vpack.c.b16 %v2736, %v2729
        %v3241 = vpack.c.b16 %v2737, %v2730
        %v3242 = vpack.c.b16 %v2738, %v2731
        %v3243 = vpack.c.b16 %v2739, %v2732
        %v3244 = vpack.c.b16 %v2740, %v2733
        %v3245 = vpack.c.b16 %v2741, %v2734
        %v3246 = vpack.c.b16 %v2749, %v2742
        %v3247 = vpack.c.b16 %v2750, %v2743
        %v3248 = vpack.c.b16 %v2751, %v2744
        %v3249 = vpack.c.b16 %v2752, %v2745
        %v3250 = vpack.c.b16 %v2753, %v2746
        %v3251 = vpack.c.b16 %v2754, %v2747
        %v3252 = vpack.c.b16 %v2755, %v2748
        %v3253 = vpack.c.b16 %v2763, %v2756
        %v3254 = vpack.c.b16 %v2764, %v2757
        %v3255 = vpack.c.b16 %v2765, %v2758
        %v3256 = vpack.c.b16 %v2766, %v2759
        %v3257 = vpack.c.b16 %v2767, %v2760
        %v3258 = vpack.c.b16 %v2768, %v2761
        %v3259 = vpack.c.b16 %v2769, %v2762
        %v3260 = vpack.c.b16 %v2777, %v2770
        %v3261 = vpack.c.b16 %v2778, %v2771
        %v3262 = vpack.c.b16 %v2779, %v2772
        %v3263 = vpack.c.b16 %v2780, %v2773
        %v3264 = vpack.c.b16 %v2781, %v2774
        %v3265 = vpack.c.b16 %v2782, %v2775
        %v3266 = vpack.c.b16 %v2783, %v2776
        %v3267 = vpack.c.b16 %v2791, %v2784
        %v3268 = vpack.c.b16 %v2792, %v2785
        %v3269 = vpack.c.b16 %v2793, %v2786
        %v3270 = vpack.c.b16 %v2794, %v2787
        %v3271 = vpack.c.b16 %v2795, %v2788
        %v3272 = vpack.c.b16 %v2796, %v2789
        %v3273 = vpack.c.b16 %v2797, %v2790
        %v3274 = vpack.c.b16 %v2805, %v2798
        %v3275 = vpack.c.b16 %v2806, %v2799
        %v3276 = vpack.c.b16 %v2807, %v2800
        %v3277 = vpack.c.b16 %v2808, %v2801
        %v3278 = vpack.c.b16 %v2809, %v2802
        %v3279 = vpack.c.b16 %v2810, %v2803
        %v3280 = vpack.c.b16 %v2811, %v2804
        %v3281 = vpack.c.b16 %v2819, %v2812
        %v3282 = vpack.c.b16 %v2820, %v2813
        %v3283 = vpack.c.b16 %v2821, %v2814
        %v3284 = vpack.c.b16 %v2822, %v2815
        %v3285 = vpack.c.b16 %v2823, %v2816
        %v3286 = vpack.c.b16 %v2824, %v2817
        %v3287 = vpack.c.b16 %v2825, %v2818
        %v3288 = vpack.c.b16 %v2833, %v2826
        %v3289 = vpack.c.b16 %v2834, %v2827
        %v3290 = vpack.c.b16 %v2835, %v2828
        %v3291 = vpack.c.b16 %v2836, %v2829
        %v3292 = vpack.c.b16 %v2837, %v2830
        %v3293 = vpack.c.b16 %v2838, %v2831
        %v3294 = vpack.c.b16 %v2839, %v2832
        %v3295 = vpack.c.b16 %v2847, %v2840
        %v3296 = vpack.c.b16 %v2848, %v2841
        %v3297 = vpack.c.b16 %v2849, %v2842
        %v3298 = vpack.c.b16 %v2850, %v2843
        %v3299 = vpack.c.b16 %v2851, %v2844
        %v3300 = vpack.c.b16 %v2852, %v2845
        %v3301 = vpack.c.b16 %v2853, %v2846
        %3750 = vmatprep.subr.bf16.mxu0 %v2904
        %3751 = vmatpush1.bf16.msra.mxu0 %v2903
        %3752 = vmatprep.subr.bf16.mxu0 %v2897
        %3753 = vmatpush1.bf16.msra.mxu0 %v2896
        %3754 = vmatprep.subr.bf16.mxu0 %v2890
        %3755 = vmatpush1.bf16.msra.mxu0 %v2889
        %3756 = vmatprep.subr.bf16.mxu0 %v2883
        %3757 = vmatpush1.bf16.msra.mxu0 %v2882
        %3758 = vmatprep.subr.bf16.mxu0 %v2876
        %3759 = vmatpush1.bf16.msra.mxu0 %v2875
        %3760 = vmatprep.subr.bf16.mxu0 %v2869
        %3761 = vmatpush1.bf16.msra.mxu0 %v2868
        %3762 = vmatprep.subr.bf16.mxu0 %v2862
        %3763 = vmatpush1.bf16.msra.mxu0 %v2861
        %3764 = vmatprep.subr.bf16.mxu0 %v2855
        %3765 = vmatpush1.bf16.msra.mxu0 %v2854
        %3766 = vmatprep.subr.bf16.mxu0 %v2960
        %3767 = vmatpush2.bf16.msra.mxu0 %v2959
        %3768 = vmatprep.subr.bf16.mxu0 %v2953
        %3769 = vmatpush2.bf16.msra.mxu0 %v2952
        %3770 = vmatprep.subr.bf16.mxu0 %v2946
        %3771 = vmatpush2.bf16.msra.mxu0 %v2945
        %3772 = vmatprep.subr.bf16.mxu0 %v2939
        %3773 = vmatpush2.bf16.msra.mxu0 %v2938
        %3774 = vmatprep.subr.bf16.mxu0 %v2932
        %3775 = vmatpush2.bf16.msra.mxu0 %v2931
        %3776 = vmatprep.subr.bf16.mxu0 %v2925
        %3777 = vmatpush2.bf16.msra.mxu0 %v2924
        %3778 = vmatprep.subr.bf16.mxu0 %v2918
        %3779 = vmatpush2.bf16.msra.mxu0 %v2917
        %3780 = vmatprep.subr.bf16.mxu0 %v2911
        %3781 = vmatpush2.bf16.msra.mxu0 %v2910
        %3782 = vmatprep.mubr.bf16.mxu0 %v903
        %3783 = vmatmul.mubr.bf16.gmra.mxu0 %v902
        %v3784 = vpop.f32.mrf.mxu0
        %v3785 = vadd.f32 0.0, %v3784
        %v3786 = vpop.f32.mrf.mxu0
        %v3787 = vadd.f32 0.0, %v3786
        %v3788 = vpop.f32.mrf.mxu0
        %v3789 = vadd.f32 0.0, %v3788
        %v3790 = vpop.f32.mrf.mxu0
        %v3791 = vadd.f32 0.0, %v3790
        %3792 = vmatprep.mubr.bf16.mxu0 %v911
        %3793 = vmatmul.mubr.bf16.gmra.mxu0 %v910
        %v3794 = vpop.f32.mrf.mxu0
        %v3795 = vadd.f32 0.0, %v3794
        %v3796 = vpop.f32.mrf.mxu0
        %v3797 = vadd.f32 0.0, %v3796
        %v3798 = vpop.f32.mrf.mxu0
        %v3799 = vadd.f32 0.0, %v3798
        %v3800 = vpop.f32.mrf.mxu0
        %v3801 = vadd.f32 0.0, %v3800
        %3802 = vmatprep.mubr.bf16.mxu0 %v919
        %3803 = vmatmul.mubr.bf16.gmra.mxu0 %v918
        %v3804 = vpop.f32.mrf.mxu0
        %v3805 = vadd.f32 0.0, %v3804
        %v3806 = vpop.f32.mrf.mxu0
        %v3807 = vadd.f32 0.0, %v3806
        %v3808 = vpop.f32.mrf.mxu0
        %v3809 = vadd.f32 0.0, %v3808
        %v3810 = vpop.f32.mrf.mxu0
        %v3811 = vadd.f32 0.0, %v3810
        %3812 = vmatprep.mubr.bf16.mxu0 %v927
        %3813 = vmatmul.mubr.bf16.gmra.mxu0 %v926
        %v3814 = vpop.f32.mrf.mxu0
        %v3815 = vadd.f32 0.0, %v3814
        %v3816 = vpop.f32.mrf.mxu0
        %v3817 = vadd.f32 0.0, %v3816
        %v3818 = vpop.f32.mrf.mxu0
        %v3819 = vadd.f32 0.0, %v3818
        %v3820 = vpop.f32.mrf.mxu0
        %v3821 = vadd.f32 0.0, %v3820
        %3822 = vdwg.mxu0
        %3823 = vmatprep.subr.bf16.mxu0 %v3016
        %3824 = vmatpush1.bf16.msra.mxu0 %v3015
        %3825 = vmatprep.subr.bf16.mxu0 %v3009
        %3826 = vmatpush1.bf16.msra.mxu0 %v3008
        %3827 = vmatprep.subr.bf16.mxu0 %v3002
        %3828 = vmatpush1.bf16.msra.mxu0 %v3001
        %3829 = vmatprep.subr.bf16.mxu0 %v2995
        %3830 = vmatpush1.bf16.msra.mxu0 %v2994
        %3831 = vmatprep.subr.bf16.mxu0 %v2988
        %3832 = vmatpush1.bf16.msra.mxu0 %v2987
        %3833 = vmatprep.subr.bf16.mxu0 %v2981
        %3834 = vmatpush1.bf16.msra.mxu0 %v2980
        %3835 = vmatprep.subr.bf16.mxu0 %v2974
        %3836 = vmatpush1.bf16.msra.mxu0 %v2973
        %3837 = vmatprep.subr.bf16.mxu0 %v2967
        %3838 = vmatpush1.bf16.msra.mxu0 %v2966
        %3839 = vmatprep.subr.bf16.mxu0 %v3072
        %3840 = vmatpush2.bf16.msra.mxu0 %v3071
        %3841 = vmatprep.subr.bf16.mxu0 %v3065
        %3842 = vmatpush2.bf16.msra.mxu0 %v3064
        %3843 = vmatprep.subr.bf16.mxu0 %v3058
        %3844 = vmatpush2.bf16.msra.mxu0 %v3057
        %3845 = vmatprep.subr.bf16.mxu0 %v3051
        %3846 = vmatpush2.bf16.msra.mxu0 %v3050
        %3847 = vmatprep.subr.bf16.mxu0 %v3044
        %3848 = vmatpush2.bf16.msra.mxu0 %v3043
        %3849 = vmatprep.subr.bf16.mxu0 %v3037
        %3850 = vmatpush2.bf16.msra.mxu0 %v3036
        %3851 = vmatprep.subr.bf16.mxu0 %v3030
        %3852 = vmatpush2.bf16.msra.mxu0 %v3029
        %3853 = vmatprep.subr.bf16.mxu0 %v3023
        %3854 = vmatpush2.bf16.msra.mxu0 %v3022
        %3855 = vmatprep.mubr.bf16.mxu0 %v905
        %3856 = vmatmul.mubr.bf16.gmra.mxu0 %v904
        %v3857 = vpop.f32.mrf.mxu0
        %v3858 = vadd.f32 %v3785, %v3857
        %v3859 = vpop.f32.mrf.mxu0
        %v3860 = vadd.f32 %v3787, %v3859
        %v3861 = vpop.f32.mrf.mxu0
        %v3862 = vadd.f32 %v3789, %v3861
        %v3863 = vpop.f32.mrf.mxu0
        %v3864 = vadd.f32 %v3791, %v3863
        %3865 = vmatprep.mubr.bf16.mxu0 %v913
        %3866 = vmatmul.mubr.bf16.gmra.mxu0 %v912
        %v3867 = vpop.f32.mrf.mxu0
        %v3868 = vadd.f32 %v3795, %v3867
        %v3869 = vpop.f32.mrf.mxu0
        %v3870 = vadd.f32 %v3797, %v3869
        %v3871 = vpop.f32.mrf.mxu0
        %v3872 = vadd.f32 %v3799, %v3871
        %v3873 = vpop.f32.mrf.mxu0
        %v3874 = vadd.f32 %v3801, %v3873
        %3875 = vmatprep.mubr.bf16.mxu0 %v921
        %3876 = vmatmul.mubr.bf16.gmra.mxu0 %v920
        %v3877 = vpop.f32.mrf.mxu0
        %v3878 = vadd.f32 %v3805, %v3877
        %v3879 = vpop.f32.mrf.mxu0
        %v3880 = vadd.f32 %v3807, %v3879
        %v3881 = vpop.f32.mrf.mxu0
        %v3882 = vadd.f32 %v3809, %v3881
        %v3883 = vpop.f32.mrf.mxu0
        %v3884 = vadd.f32 %v3811, %v3883
        %3885 = vmatprep.mubr.bf16.mxu0 %v929
        %3886 = vmatmul.mubr.bf16.gmra.mxu0 %v928
        %v3887 = vpop.f32.mrf.mxu0
        %v3888 = vadd.f32 %v3815, %v3887
        %v3889 = vpop.f32.mrf.mxu0
        %v3890 = vadd.f32 %v3817, %v3889
        %v3891 = vpop.f32.mrf.mxu0
        %v3892 = vadd.f32 %v3819, %v3891
        %v3893 = vpop.f32.mrf.mxu0
        %v3894 = vadd.f32 %v3821, %v3893
        %3895 = vdwg.mxu0
        %3896 = vmatprep.subr.bf16.mxu0 %v3128
        %3897 = vmatpush1.bf16.msra.mxu0 %v3127
        %3898 = vmatprep.subr.bf16.mxu0 %v3121
        %3899 = vmatpush1.bf16.msra.mxu0 %v3120
        %3900 = vmatprep.subr.bf16.mxu0 %v3114
        %3901 = vmatpush1.bf16.msra.mxu0 %v3113
        %3902 = vmatprep.subr.bf16.mxu0 %v3107
        %3903 = vmatpush1.bf16.msra.mxu0 %v3106
        %3904 = vmatprep.subr.bf16.mxu0 %v3100
        %3905 = vmatpush1.bf16.msra.mxu0 %v3099
        %3906 = vmatprep.subr.bf16.mxu0 %v3093
        %3907 = vmatpush1.bf16.msra.mxu0 %v3092
        %3908 = vmatprep.subr.bf16.mxu0 %v3086
        %3909 = vmatpush1.bf16.msra.mxu0 %v3085
        %3910 = vmatprep.subr.bf16.mxu0 %v3079
        %3911 = vmatpush1.bf16.msra.mxu0 %v3078
        %3912 = vmatprep.subr.bf16.mxu0 %v3184
        %3913 = vmatpush2.bf16.msra.mxu0 %v3183
        %3914 = vmatprep.subr.bf16.mxu0 %v3177
        %3915 = vmatpush2.bf16.msra.mxu0 %v3176
        %3916 = vmatprep.subr.bf16.mxu0 %v3170
        %3917 = vmatpush2.bf16.msra.mxu0 %v3169
        %3918 = vmatprep.subr.bf16.mxu0 %v3163
        %3919 = vmatpush2.bf16.msra.mxu0 %v3162
        %3920 = vmatprep.subr.bf16.mxu0 %v3156
        %3921 = vmatpush2.bf16.msra.mxu0 %v3155
        %3922 = vmatprep.subr.bf16.mxu0 %v3149
        %3923 = vmatpush2.bf16.msra.mxu0 %v3148
        %3924 = vmatprep.subr.bf16.mxu0 %v3142
        %3925 = vmatpush2.bf16.msra.mxu0 %v3141
        %3926 = vmatprep.subr.bf16.mxu0 %v3135
        %3927 = vmatpush2.bf16.msra.mxu0 %v3134
        %3928 = vmatprep.mubr.bf16.mxu0 %v907
        %3929 = vmatmul.mubr.bf16.gmra.mxu0 %v906
        %v3930 = vpop.f32.mrf.mxu0
        %v3931 = vadd.f32 %v3858, %v3930
        %v3932 = vpop.f32.mrf.mxu0
        %v3933 = vadd.f32 %v3860, %v3932
        %v3934 = vpop.f32.mrf.mxu0
        %v3935 = vadd.f32 %v3862, %v3934
        %v3936 = vpop.f32.mrf.mxu0
        %v3937 = vadd.f32 %v3864, %v3936
        %3938 = vmatprep.mubr.bf16.mxu0 %v915
        %3939 = vmatmul.mubr.bf16.gmra.mxu0 %v914
        %v3940 = vpop.f32.mrf.mxu0
        %v3941 = vadd.f32 %v3868, %v3940
        %v3942 = vpop.f32.mrf.mxu0
        %v3943 = vadd.f32 %v3870, %v3942
        %v3944 = vpop.f32.mrf.mxu0
        %v3945 = vadd.f32 %v3872, %v3944
        %v3946 = vpop.f32.mrf.mxu0
        %v3947 = vadd.f32 %v3874, %v3946
        %3948 = vmatprep.mubr.bf16.mxu0 %v923
        %3949 = vmatmul.mubr.bf16.gmra.mxu0 %v922
        %v3950 = vpop.f32.mrf.mxu0
        %v3951 = vadd.f32 %v3878, %v3950
        %v3952 = vpop.f32.mrf.mxu0
        %v3953 = vadd.f32 %v3880, %v3952
        %v3954 = vpop.f32.mrf.mxu0
        %v3955 = vadd.f32 %v3882, %v3954
        %v3956 = vpop.f32.mrf.mxu0
        %v3957 = vadd.f32 %v3884, %v3956
        %3958 = vmatprep.mubr.bf16.mxu0 %v931
        %3959 = vmatmul.mubr.bf16.gmra.mxu0 %v930
        %v3960 = vpop.f32.mrf.mxu0
        %v3961 = vadd.f32 %v3888, %v3960
        %v3962 = vpop.f32.mrf.mxu0
        %v3963 = vadd.f32 %v3890, %v3962
        %v3964 = vpop.f32.mrf.mxu0
        %v3965 = vadd.f32 %v3892, %v3964
        %v3966 = vpop.f32.mrf.mxu0
        %v3967 = vadd.f32 %v3894, %v3966
        %3968 = vdwg.mxu0
        %3969 = vmatprep.subr.bf16.mxu0 %v3240
        %3970 = vmatpush1.bf16.msra.mxu0 %v3239
        %3971 = vmatprep.subr.bf16.mxu0 %v3233
        %3972 = vmatpush1.bf16.msra.mxu0 %v3232
        %3973 = vmatprep.subr.bf16.mxu0 %v3226
        %3974 = vmatpush1.bf16.msra.mxu0 %v3225
        %3975 = vmatprep.subr.bf16.mxu0 %v3219
        %3976 = vmatpush1.bf16.msra.mxu0 %v3218
        %3977 = vmatprep.subr.bf16.mxu0 %v3212
        %3978 = vmatpush1.bf16.msra.mxu0 %v3211
        %3979 = vmatprep.subr.bf16.mxu0 %v3205
        %3980 = vmatpush1.bf16.msra.mxu0 %v3204
        %3981 = vmatprep.subr.bf16.mxu0 %v3198
        %3982 = vmatpush1.bf16.msra.mxu0 %v3197
        %3983 = vmatprep.subr.bf16.mxu0 %v3191
        %3984 = vmatpush1.bf16.msra.mxu0 %v3190
        %3985 = vmatprep.subr.bf16.mxu0 %v3296
        %3986 = vmatpush2.bf16.msra.mxu0 %v3295
        %3987 = vmatprep.subr.bf16.mxu0 %v3289
        %3988 = vmatpush2.bf16.msra.mxu0 %v3288
        %3989 = vmatprep.subr.bf16.mxu0 %v3282
        %3990 = vmatpush2.bf16.msra.mxu0 %v3281
        %3991 = vmatprep.subr.bf16.mxu0 %v3275
        %3992 = vmatpush2.bf16.msra.mxu0 %v3274
        %3993 = vmatprep.subr.bf16.mxu0 %v3268
        %3994 = vmatpush2.bf16.msra.mxu0 %v3267
        %3995 = vmatprep.subr.bf16.mxu0 %v3261
        %3996 = vmatpush2.bf16.msra.mxu0 %v3260
        %3997 = vmatprep.subr.bf16.mxu0 %v3254
        %3998 = vmatpush2.bf16.msra.mxu0 %v3253
        %3999 = vmatprep.subr.bf16.mxu0 %v3247
        %4000 = vmatpush2.bf16.msra.mxu0 %v3246
        %4001 = vmatprep.mubr.bf16.mxu0 %v909
        %4002 = vmatmul.mubr.bf16.gmra.mxu0 %v908
        %v4003 = vpop.f32.mrf.mxu0
        %v4004 = vadd.f32 %v3931, %v4003
        %v4005 = vpop.f32.mrf.mxu0
        %v4006 = vadd.f32 %v3933, %v4005
        %v4007 = vpop.f32.mrf.mxu0
        %v4008 = vadd.f32 %v3935, %v4007
        %v4009 = vpop.f32.mrf.mxu0
        %v4010 = vadd.f32 %v3937, %v4009
        %4011 = vmatprep.mubr.bf16.mxu0 %v917
        %4012 = vmatmul.mubr.bf16.gmra.mxu0 %v916
        %v4013 = vpop.f32.mrf.mxu0
        %v4014 = vadd.f32 %v3941, %v4013
        %v4015 = vpop.f32.mrf.mxu0
        %v4016 = vadd.f32 %v3943, %v4015
        %v4017 = vpop.f32.mrf.mxu0
        %v4018 = vadd.f32 %v3945, %v4017
        %v4019 = vpop.f32.mrf.mxu0
        %v4020 = vadd.f32 %v3947, %v4019
        %4021 = vmatprep.mubr.bf16.mxu0 %v925
        %4022 = vmatmul.mubr.bf16.gmra.mxu0 %v924
        %v4023 = vpop.f32.mrf.mxu0
        %v4024 = vadd.f32 %v3951, %v4023
        %v4025 = vpop.f32.mrf.mxu0
        %v4026 = vadd.f32 %v3953, %v4025
        %v4027 = vpop.f32.mrf.mxu0
        %v4028 = vadd.f32 %v3955, %v4027
        %v4029 = vpop.f32.mrf.mxu0
        %v4030 = vadd.f32 %v3957, %v4029
        %4031 = vmatprep.mubr.bf16.mxu0 %v933
        %4032 = vmatmul.mubr.bf16.gmra.mxu0 %v932
        %v4033 = vpop.f32.mrf.mxu0
        %v4034 = vadd.f32 %v3961, %v4033
        %v4035 = vpop.f32.mrf.mxu0
        %v4036 = vadd.f32 %v3963, %v4035
        %v4037 = vpop.f32.mrf.mxu0
        %v4038 = vadd.f32 %v3965, %v4037
        %v4039 = vpop.f32.mrf.mxu0
        %v4040 = vadd.f32 %v3967, %v4039
        %4041 = vdwg.mxu0
        %4042 = vmatprep.subr.bf16.mxu0 %v2906
        %4043 = vmatpush1.bf16.msra.mxu0 %v2905
        %4044 = vmatprep.subr.bf16.mxu0 %v2899
        %4045 = vmatpush1.bf16.msra.mxu0 %v2898
        %4046 = vmatprep.subr.bf16.mxu0 %v2892
        %4047 = vmatpush1.bf16.msra.mxu0 %v2891
        %4048 = vmatprep.subr.bf16.mxu0 %v2885
        %4049 = vmatpush1.bf16.msra.mxu0 %v2884
        %4050 = vmatprep.subr.bf16.mxu0 %v2878
        %4051 = vmatpush1.bf16.msra.mxu0 %v2877
        %4052 = vmatprep.subr.bf16.mxu0 %v2871
        %4053 = vmatpush1.bf16.msra.mxu0 %v2870
        %4054 = vmatprep.subr.bf16.mxu0 %v2864
        %4055 = vmatpush1.bf16.msra.mxu0 %v2863
        %4056 = vmatprep.subr.bf16.mxu0 %v2857
        %4057 = vmatpush1.bf16.msra.mxu0 %v2856
        %4058 = vmatprep.subr.bf16.mxu0 %v2962
        %4059 = vmatpush2.bf16.msra.mxu0 %v2961
        %4060 = vmatprep.subr.bf16.mxu0 %v2955
        %4061 = vmatpush2.bf16.msra.mxu0 %v2954
        %4062 = vmatprep.subr.bf16.mxu0 %v2948
        %4063 = vmatpush2.bf16.msra.mxu0 %v2947
        %4064 = vmatprep.subr.bf16.mxu0 %v2941
        %4065 = vmatpush2.bf16.msra.mxu0 %v2940
        %4066 = vmatprep.subr.bf16.mxu0 %v2934
        %4067 = vmatpush2.bf16.msra.mxu0 %v2933
        %4068 = vmatprep.subr.bf16.mxu0 %v2927
        %4069 = vmatpush2.bf16.msra.mxu0 %v2926
        %4070 = vmatprep.subr.bf16.mxu0 %v2920
        %4071 = vmatpush2.bf16.msra.mxu0 %v2919
        %4072 = vmatprep.subr.bf16.mxu0 %v2913
        %4073 = vmatpush2.bf16.msra.mxu0 %v2912
        %4074 = vmatprep.mubr.bf16.mxu0 %v903
        %4075 = vmatmul.mubr.bf16.gmra.mxu0 %v902
        %v4076 = vpop.f32.mrf.mxu0
        %v4077 = vadd.f32 0.0, %v4076
        %v4078 = vpop.f32.mrf.mxu0
        %v4079 = vadd.f32 0.0, %v4078
        %v4080 = vpop.f32.mrf.mxu0
        %v4081 = vadd.f32 0.0, %v4080
        %v4082 = vpop.f32.mrf.mxu0
        %v4083 = vadd.f32 0.0, %v4082
        %4084 = vmatprep.mubr.bf16.mxu0 %v911
        %4085 = vmatmul.mubr.bf16.gmra.mxu0 %v910
        %v4086 = vpop.f32.mrf.mxu0
        %v4087 = vadd.f32 0.0, %v4086
        %v4088 = vpop.f32.mrf.mxu0
        %v4089 = vadd.f32 0.0, %v4088
        %v4090 = vpop.f32.mrf.mxu0
        %v4091 = vadd.f32 0.0, %v4090
        %v4092 = vpop.f32.mrf.mxu0
        %v4093 = vadd.f32 0.0, %v4092
        %4094 = vmatprep.mubr.bf16.mxu0 %v919
        %4095 = vmatmul.mubr.bf16.gmra.mxu0 %v918
        %v4096 = vpop.f32.mrf.mxu0
        %v4097 = vadd.f32 0.0, %v4096
        %v4098 = vpop.f32.mrf.mxu0
        %v4099 = vadd.f32 0.0, %v4098
        %v4100 = vpop.f32.mrf.mxu0
        %v4101 = vadd.f32 0.0, %v4100
        %v4102 = vpop.f32.mrf.mxu0
        %v4103 = vadd.f32 0.0, %v4102
        %4104 = vmatprep.mubr.bf16.mxu0 %v927
        %4105 = vmatmul.mubr.bf16.gmra.mxu0 %v926
        %v4106 = vpop.f32.mrf.mxu0
        %v4107 = vadd.f32 0.0, %v4106
        %v4108 = vpop.f32.mrf.mxu0
        %v4109 = vadd.f32 0.0, %v4108
        %v4110 = vpop.f32.mrf.mxu0
        %v4111 = vadd.f32 0.0, %v4110
        %v4112 = vpop.f32.mrf.mxu0
        %v4113 = vadd.f32 0.0, %v4112
        %4114 = vdwg.mxu0
        %4115 = vmatprep.subr.bf16.mxu0 %v3018
        %4116 = vmatpush1.bf16.msra.mxu0 %v3017
        %4117 = vmatprep.subr.bf16.mxu0 %v3011
        %4118 = vmatpush1.bf16.msra.mxu0 %v3010
        %4119 = vmatprep.subr.bf16.mxu0 %v3004
        %4120 = vmatpush1.bf16.msra.mxu0 %v3003
        %4121 = vmatprep.subr.bf16.mxu0 %v2997
        %4122 = vmatpush1.bf16.msra.mxu0 %v2996
        %4123 = vmatprep.subr.bf16.mxu0 %v2990
        %4124 = vmatpush1.bf16.msra.mxu0 %v2989
        %4125 = vmatprep.subr.bf16.mxu0 %v2983
        %4126 = vmatpush1.bf16.msra.mxu0 %v2982
        %4127 = vmatprep.subr.bf16.mxu0 %v2976
        %4128 = vmatpush1.bf16.msra.mxu0 %v2975
        %4129 = vmatprep.subr.bf16.mxu0 %v2969
        %4130 = vmatpush1.bf16.msra.mxu0 %v2968
        %4131 = vmatprep.subr.bf16.mxu0 %v3074
        %4132 = vmatpush2.bf16.msra.mxu0 %v3073
        %4133 = vmatprep.subr.bf16.mxu0 %v3067
        %4134 = vmatpush2.bf16.msra.mxu0 %v3066
        %4135 = vmatprep.subr.bf16.mxu0 %v3060
        %4136 = vmatpush2.bf16.msra.mxu0 %v3059
        %4137 = vmatprep.subr.bf16.mxu0 %v3053
        %4138 = vmatpush2.bf16.msra.mxu0 %v3052
        %4139 = vmatprep.subr.bf16.mxu0 %v3046
        %4140 = vmatpush2.bf16.msra.mxu0 %v3045
        %4141 = vmatprep.subr.bf16.mxu0 %v3039
        %4142 = vmatpush2.bf16.msra.mxu0 %v3038
        %4143 = vmatprep.subr.bf16.mxu0 %v3032
        %4144 = vmatpush2.bf16.msra.mxu0 %v3031
        %4145 = vmatprep.subr.bf16.mxu0 %v3025
        %4146 = vmatpush2.bf16.msra.mxu0 %v3024
        %4147 = vmatprep.mubr.bf16.mxu0 %v905
        %4148 = vmatmul.mubr.bf16.gmra.mxu0 %v904
        %v4149 = vpop.f32.mrf.mxu0
        %v4150 = vadd.f32 %v4077, %v4149
        %v4151 = vpop.f32.mrf.mxu0
        %v4152 = vadd.f32 %v4079, %v4151
        %v4153 = vpop.f32.mrf.mxu0
        %v4154 = vadd.f32 %v4081, %v4153
        %v4155 = vpop.f32.mrf.mxu0
        %v4156 = vadd.f32 %v4083, %v4155
        %4157 = vmatprep.mubr.bf16.mxu0 %v913
        %4158 = vmatmul.mubr.bf16.gmra.mxu0 %v912
        %v4159 = vpop.f32.mrf.mxu0
        %v4160 = vadd.f32 %v4087, %v4159
        %v4161 = vpop.f32.mrf.mxu0
        %v4162 = vadd.f32 %v4089, %v4161
        %v4163 = vpop.f32.mrf.mxu0
        %v4164 = vadd.f32 %v4091, %v4163
        %v4165 = vpop.f32.mrf.mxu0
        %v4166 = vadd.f32 %v4093, %v4165
        %4167 = vmatprep.mubr.bf16.mxu0 %v921
        %4168 = vmatmul.mubr.bf16.gmra.mxu0 %v920
        %v4169 = vpop.f32.mrf.mxu0
        %v4170 = vadd.f32 %v4097, %v4169
        %v4171 = vpop.f32.mrf.mxu0
        %v4172 = vadd.f32 %v4099, %v4171
        %v4173 = vpop.f32.mrf.mxu0
        %v4174 = vadd.f32 %v4101, %v4173
        %v4175 = vpop.f32.mrf.mxu0
        %v4176 = vadd.f32 %v4103, %v4175
        %4177 = vmatprep.mubr.bf16.mxu0 %v929
        %4178 = vmatmul.mubr.bf16.gmra.mxu0 %v928
        %v4179 = vpop.f32.mrf.mxu0
        %v4180 = vadd.f32 %v4107, %v4179
        %v4181 = vpop.f32.mrf.mxu0
        %v4182 = vadd.f32 %v4109, %v4181
        %v4183 = vpop.f32.mrf.mxu0
        %v4184 = vadd.f32 %v4111, %v4183
        %v4185 = vpop.f32.mrf.mxu0
        %v4186 = vadd.f32 %v4113, %v4185
        %4187 = vdwg.mxu0
        %4188 = vmatprep.subr.bf16.mxu0 %v3130
        %4189 = vmatpush1.bf16.msra.mxu0 %v3129
        %4190 = vmatprep.subr.bf16.mxu0 %v3123
        %4191 = vmatpush1.bf16.msra.mxu0 %v3122
        %4192 = vmatprep.subr.bf16.mxu0 %v3116
        %4193 = vmatpush1.bf16.msra.mxu0 %v3115
        %4194 = vmatprep.subr.bf16.mxu0 %v3109
        %4195 = vmatpush1.bf16.msra.mxu0 %v3108
        %4196 = vmatprep.subr.bf16.mxu0 %v3102
        %4197 = vmatpush1.bf16.msra.mxu0 %v3101
        %4198 = vmatprep.subr.bf16.mxu0 %v3095
        %4199 = vmatpush1.bf16.msra.mxu0 %v3094
        %4200 = vmatprep.subr.bf16.mxu0 %v3088
        %4201 = vmatpush1.bf16.msra.mxu0 %v3087
        %4202 = vmatprep.subr.bf16.mxu0 %v3081
        %4203 = vmatpush1.bf16.msra.mxu0 %v3080
        %4204 = vmatprep.subr.bf16.mxu0 %v3186
        %4205 = vmatpush2.bf16.msra.mxu0 %v3185
        %4206 = vmatprep.subr.bf16.mxu0 %v3179
        %4207 = vmatpush2.bf16.msra.mxu0 %v3178
        %4208 = vmatprep.subr.bf16.mxu0 %v3172
        %4209 = vmatpush2.bf16.msra.mxu0 %v3171
        %4210 = vmatprep.subr.bf16.mxu0 %v3165
        %4211 = vmatpush2.bf16.msra.mxu0 %v3164
        %4212 = vmatprep.subr.bf16.mxu0 %v3158
        %4213 = vmatpush2.bf16.msra.mxu0 %v3157
        %4214 = vmatprep.subr.bf16.mxu0 %v3151
        %4215 = vmatpush2.bf16.msra.mxu0 %v3150
        %4216 = vmatprep.subr.bf16.mxu0 %v3144
        %4217 = vmatpush2.bf16.msra.mxu0 %v3143
        %4218 = vmatprep.subr.bf16.mxu0 %v3137
        %4219 = vmatpush2.bf16.msra.mxu0 %v3136
        %4220 = vmatprep.mubr.bf16.mxu0 %v907
        %4221 = vmatmul.mubr.bf16.gmra.mxu0 %v906
        %v4222 = vpop.f32.mrf.mxu0
        %v4223 = vadd.f32 %v4150, %v4222
        %v4224 = vpop.f32.mrf.mxu0
        %v4225 = vadd.f32 %v4152, %v4224
        %v4226 = vpop.f32.mrf.mxu0
        %v4227 = vadd.f32 %v4154, %v4226
        %v4228 = vpop.f32.mrf.mxu0
        %v4229 = vadd.f32 %v4156, %v4228
        %4230 = vmatprep.mubr.bf16.mxu0 %v915
        %4231 = vmatmul.mubr.bf16.gmra.mxu0 %v914
        %v4232 = vpop.f32.mrf.mxu0
        %v4233 = vadd.f32 %v4160, %v4232
        %v4234 = vpop.f32.mrf.mxu0
        %v4235 = vadd.f32 %v4162, %v4234
        %v4236 = vpop.f32.mrf.mxu0
        %v4237 = vadd.f32 %v4164, %v4236
        %v4238 = vpop.f32.mrf.mxu0
        %v4239 = vadd.f32 %v4166, %v4238
        %4240 = vmatprep.mubr.bf16.mxu0 %v923
        %4241 = vmatmul.mubr.bf16.gmra.mxu0 %v922
        %v4242 = vpop.f32.mrf.mxu0
        %v4243 = vadd.f32 %v4170, %v4242
        %v4244 = vpop.f32.mrf.mxu0
        %v4245 = vadd.f32 %v4172, %v4244
        %v4246 = vpop.f32.mrf.mxu0
        %v4247 = vadd.f32 %v4174, %v4246
        %v4248 = vpop.f32.mrf.mxu0
        %v4249 = vadd.f32 %v4176, %v4248
        %4250 = vmatprep.mubr.bf16.mxu0 %v931
        %4251 = vmatmul.mubr.bf16.gmra.mxu0 %v930
        %v4252 = vpop.f32.mrf.mxu0
        %v4253 = vadd.f32 %v4180, %v4252
        %v4254 = vpop.f32.mrf.mxu0
        %v4255 = vadd.f32 %v4182, %v4254
        %v4256 = vpop.f32.mrf.mxu0
        %v4257 = vadd.f32 %v4184, %v4256
        %v4258 = vpop.f32.mrf.mxu0
        %v4259 = vadd.f32 %v4186, %v4258
        %4260 = vdwg.mxu0
        %4261 = vmatprep.subr.bf16.mxu0 %v3242
        %4262 = vmatpush1.bf16.msra.mxu0 %v3241
        %4263 = vmatprep.subr.bf16.mxu0 %v3235
        %4264 = vmatpush1.bf16.msra.mxu0 %v3234
        %4265 = vmatprep.subr.bf16.mxu0 %v3228
        %4266 = vmatpush1.bf16.msra.mxu0 %v3227
        %4267 = vmatprep.subr.bf16.mxu0 %v3221
        %4268 = vmatpush1.bf16.msra.mxu0 %v3220
        %4269 = vmatprep.subr.bf16.mxu0 %v3214
        %4270 = vmatpush1.bf16.msra.mxu0 %v3213
        %4271 = vmatprep.subr.bf16.mxu0 %v3207
        %4272 = vmatpush1.bf16.msra.mxu0 %v3206
        %4273 = vmatprep.subr.bf16.mxu0 %v3200
        %4274 = vmatpush1.bf16.msra.mxu0 %v3199
        %4275 = vmatprep.subr.bf16.mxu0 %v3193
        %4276 = vmatpush1.bf16.msra.mxu0 %v3192
        %4277 = vmatprep.subr.bf16.mxu0 %v3298
        %4278 = vmatpush2.bf16.msra.mxu0 %v3297
        %4279 = vmatprep.subr.bf16.mxu0 %v3291
        %4280 = vmatpush2.bf16.msra.mxu0 %v3290
        %4281 = vmatprep.subr.bf16.mxu0 %v3284
        %4282 = vmatpush2.bf16.msra.mxu0 %v3283
        %4283 = vmatprep.subr.bf16.mxu0 %v3277
        %4284 = vmatpush2.bf16.msra.mxu0 %v3276
        %4285 = vmatprep.subr.bf16.mxu0 %v3270
        %4286 = vmatpush2.bf16.msra.mxu0 %v3269
        %4287 = vmatprep.subr.bf16.mxu0 %v3263
        %4288 = vmatpush2.bf16.msra.mxu0 %v3262
        %4289 = vmatprep.subr.bf16.mxu0 %v3256
        %4290 = vmatpush2.bf16.msra.mxu0 %v3255
        %4291 = vmatprep.subr.bf16.mxu0 %v3249
        %4292 = vmatpush2.bf16.msra.mxu0 %v3248
        %4293 = vmatprep.mubr.bf16.mxu0 %v909
        %4294 = vmatmul.mubr.bf16.gmra.mxu0 %v908
        %v4295 = vpop.f32.mrf.mxu0
        %v4296 = vadd.f32 %v4223, %v4295
        %v4297 = vpop.f32.mrf.mxu0
        %v4298 = vadd.f32 %v4225, %v4297
        %v4299 = vpop.f32.mrf.mxu0
        %v4300 = vadd.f32 %v4227, %v4299
        %v4301 = vpop.f32.mrf.mxu0
        %v4302 = vadd.f32 %v4229, %v4301
        %4303 = vmatprep.mubr.bf16.mxu0 %v917
        %4304 = vmatmul.mubr.bf16.gmra.mxu0 %v916
        %v4305 = vpop.f32.mrf.mxu0
        %v4306 = vadd.f32 %v4233, %v4305
        %v4307 = vpop.f32.mrf.mxu0
        %v4308 = vadd.f32 %v4235, %v4307
        %v4309 = vpop.f32.mrf.mxu0
        %v4310 = vadd.f32 %v4237, %v4309
        %v4311 = vpop.f32.mrf.mxu0
        %v4312 = vadd.f32 %v4239, %v4311
        %4313 = vmatprep.mubr.bf16.mxu0 %v925
        %4314 = vmatmul.mubr.bf16.gmra.mxu0 %v924
        %v4315 = vpop.f32.mrf.mxu0
        %v4316 = vadd.f32 %v4243, %v4315
        %v4317 = vpop.f32.mrf.mxu0
        %v4318 = vadd.f32 %v4245, %v4317
        %v4319 = vpop.f32.mrf.mxu0
        %v4320 = vadd.f32 %v4247, %v4319
        %v4321 = vpop.f32.mrf.mxu0
        %v4322 = vadd.f32 %v4249, %v4321
        %4323 = vmatprep.mubr.bf16.mxu0 %v933
        %4324 = vmatmul.mubr.bf16.gmra.mxu0 %v932
        %v4325 = vpop.f32.mrf.mxu0
        %v4326 = vadd.f32 %v4253, %v4325
        %v4327 = vpop.f32.mrf.mxu0
        %v4328 = vadd.f32 %v4255, %v4327
        %v4329 = vpop.f32.mrf.mxu0
        %v4330 = vadd.f32 %v4257, %v4329
        %v4331 = vpop.f32.mrf.mxu0
        %v4332 = vadd.f32 %v4259, %v4331
        %4333 = vdwg.mxu0
        %4334 = vmatprep.subr.bf16.mxu0 %v2908
        %4335 = vmatpush1.bf16.msra.mxu0 %v2907
        %4336 = vmatprep.subr.bf16.mxu0 %v2901
        %4337 = vmatpush1.bf16.msra.mxu0 %v2900
        %4338 = vmatprep.subr.bf16.mxu0 %v2894
        %4339 = vmatpush1.bf16.msra.mxu0 %v2893
        %4340 = vmatprep.subr.bf16.mxu0 %v2887
        %4341 = vmatpush1.bf16.msra.mxu0 %v2886
        %4342 = vmatprep.subr.bf16.mxu0 %v2880
        %4343 = vmatpush1.bf16.msra.mxu0 %v2879
        %4344 = vmatprep.subr.bf16.mxu0 %v2873
        %4345 = vmatpush1.bf16.msra.mxu0 %v2872
        %4346 = vmatprep.subr.bf16.mxu0 %v2866
        %4347 = vmatpush1.bf16.msra.mxu0 %v2865
        %4348 = vmatprep.subr.bf16.mxu0 %v2859
        %4349 = vmatpush1.bf16.msra.mxu0 %v2858
        %4350 = vmatprep.subr.bf16.mxu0 %v2964
        %4351 = vmatpush2.bf16.msra.mxu0 %v2963
        %4352 = vmatprep.subr.bf16.mxu0 %v2957
        %4353 = vmatpush2.bf16.msra.mxu0 %v2956
        %4354 = vmatprep.subr.bf16.mxu0 %v2950
        %4355 = vmatpush2.bf16.msra.mxu0 %v2949
        %4356 = vmatprep.subr.bf16.mxu0 %v2943
        %4357 = vmatpush2.bf16.msra.mxu0 %v2942
        %4358 = vmatprep.subr.bf16.mxu0 %v2936
        %4359 = vmatpush2.bf16.msra.mxu0 %v2935
        %4360 = vmatprep.subr.bf16.mxu0 %v2929
        %4361 = vmatpush2.bf16.msra.mxu0 %v2928
        %4362 = vmatprep.subr.bf16.mxu0 %v2922
        %4363 = vmatpush2.bf16.msra.mxu0 %v2921
        %4364 = vmatprep.subr.bf16.mxu0 %v2915
        %4365 = vmatpush2.bf16.msra.mxu0 %v2914
        %4366 = vmatprep.mubr.bf16.mxu0 %v903
        %4367 = vmatmul.mubr.bf16.gmra.mxu0 %v902
        %v4368 = vpop.f32.mrf.mxu0
        %v4369 = vadd.f32 0.0, %v4368
        %v4370 = vpop.f32.mrf.mxu0
        %v4371 = vadd.f32 0.0, %v4370
        %v4372 = vpop.f32.mrf.mxu0
        %v4373 = vadd.f32 0.0, %v4372
        %v4374 = vpop.f32.mrf.mxu0
        %v4375 = vadd.f32 0.0, %v4374
        %4376 = vmatprep.mubr.bf16.mxu0 %v911
        %4377 = vmatmul.mubr.bf16.gmra.mxu0 %v910
        %v4378 = vpop.f32.mrf.mxu0
        %v4379 = vadd.f32 0.0, %v4378
        %v4380 = vpop.f32.mrf.mxu0
        %v4381 = vadd.f32 0.0, %v4380
        %v4382 = vpop.f32.mrf.mxu0
        %v4383 = vadd.f32 0.0, %v4382
        %v4384 = vpop.f32.mrf.mxu0
        %v4385 = vadd.f32 0.0, %v4384
        %4386 = vmatprep.mubr.bf16.mxu0 %v919
        %4387 = vmatmul.mubr.bf16.gmra.mxu0 %v918
        %v4388 = vpop.f32.mrf.mxu0
        %v4389 = vadd.f32 0.0, %v4388
        %v4390 = vpop.f32.mrf.mxu0
        %v4391 = vadd.f32 0.0, %v4390
        %v4392 = vpop.f32.mrf.mxu0
        %v4393 = vadd.f32 0.0, %v4392
        %v4394 = vpop.f32.mrf.mxu0
        %v4395 = vadd.f32 0.0, %v4394
        %4396 = vmatprep.mubr.bf16.mxu0 %v927
        %4397 = vmatmul.mubr.bf16.gmra.mxu0 %v926
        %v4398 = vpop.f32.mrf.mxu0
        %v4399 = vadd.f32 0.0, %v4398
        %v4400 = vpop.f32.mrf.mxu0
        %v4401 = vadd.f32 0.0, %v4400
        %v4402 = vpop.f32.mrf.mxu0
        %v4403 = vadd.f32 0.0, %v4402
        %v4404 = vpop.f32.mrf.mxu0
        %v4405 = vadd.f32 0.0, %v4404
        %4406 = vdwg.mxu0
        %4407 = vmatprep.subr.bf16.mxu0 %v3020
        %4408 = vmatpush1.bf16.msra.mxu0 %v3019
        %4409 = vmatprep.subr.bf16.mxu0 %v3013
        %4410 = vmatpush1.bf16.msra.mxu0 %v3012
        %4411 = vmatprep.subr.bf16.mxu0 %v3006
        %4412 = vmatpush1.bf16.msra.mxu0 %v3005
        %4413 = vmatprep.subr.bf16.mxu0 %v2999
        %4414 = vmatpush1.bf16.msra.mxu0 %v2998
        %4415 = vmatprep.subr.bf16.mxu0 %v2992
        %4416 = vmatpush1.bf16.msra.mxu0 %v2991
        %4417 = vmatprep.subr.bf16.mxu0 %v2985
        %4418 = vmatpush1.bf16.msra.mxu0 %v2984
        %4419 = vmatprep.subr.bf16.mxu0 %v2978
        %4420 = vmatpush1.bf16.msra.mxu0 %v2977
        %4421 = vmatprep.subr.bf16.mxu0 %v2971
        %4422 = vmatpush1.bf16.msra.mxu0 %v2970
        %4423 = vmatprep.subr.bf16.mxu0 %v3076
        %4424 = vmatpush2.bf16.msra.mxu0 %v3075
        %4425 = vmatprep.subr.bf16.mxu0 %v3069
        %4426 = vmatpush2.bf16.msra.mxu0 %v3068
        %4427 = vmatprep.subr.bf16.mxu0 %v3062
        %4428 = vmatpush2.bf16.msra.mxu0 %v3061
        %4429 = vmatprep.subr.bf16.mxu0 %v3055
        %4430 = vmatpush2.bf16.msra.mxu0 %v3054
        %4431 = vmatprep.subr.bf16.mxu0 %v3048
        %4432 = vmatpush2.bf16.msra.mxu0 %v3047
        %4433 = vmatprep.subr.bf16.mxu0 %v3041
        %4434 = vmatpush2.bf16.msra.mxu0 %v3040
        %4435 = vmatprep.subr.bf16.mxu0 %v3034
        %4436 = vmatpush2.bf16.msra.mxu0 %v3033
        %4437 = vmatprep.subr.bf16.mxu0 %v3027
        %4438 = vmatpush2.bf16.msra.mxu0 %v3026
        %4439 = vmatprep.mubr.bf16.mxu0 %v905
        %4440 = vmatmul.mubr.bf16.gmra.mxu0 %v904
        %v4441 = vpop.f32.mrf.mxu0
        %v4442 = vadd.f32 %v4369, %v4441
        %v4443 = vpop.f32.mrf.mxu0
        %v4444 = vadd.f32 %v4371, %v4443
        %v4445 = vpop.f32.mrf.mxu0
        %v4446 = vadd.f32 %v4373, %v4445
        %v4447 = vpop.f32.mrf.mxu0
        %v4448 = vadd.f32 %v4375, %v4447
        %4449 = vmatprep.mubr.bf16.mxu0 %v913
        %4450 = vmatmul.mubr.bf16.gmra.mxu0 %v912
        %v4451 = vpop.f32.mrf.mxu0
        %v4452 = vadd.f32 %v4379, %v4451
        %v4453 = vpop.f32.mrf.mxu0
        %v4454 = vadd.f32 %v4381, %v4453
        %v4455 = vpop.f32.mrf.mxu0
        %v4456 = vadd.f32 %v4383, %v4455
        %v4457 = vpop.f32.mrf.mxu0
        %v4458 = vadd.f32 %v4385, %v4457
        %4459 = vmatprep.mubr.bf16.mxu0 %v921
        %4460 = vmatmul.mubr.bf16.gmra.mxu0 %v920
        %v4461 = vpop.f32.mrf.mxu0
        %v4462 = vadd.f32 %v4389, %v4461
        %v4463 = vpop.f32.mrf.mxu0
        %v4464 = vadd.f32 %v4391, %v4463
        %v4465 = vpop.f32.mrf.mxu0
        %v4466 = vadd.f32 %v4393, %v4465
        %v4467 = vpop.f32.mrf.mxu0
        %v4468 = vadd.f32 %v4395, %v4467
        %4469 = vmatprep.mubr.bf16.mxu0 %v929
        %4470 = vmatmul.mubr.bf16.gmra.mxu0 %v928
        %v4471 = vpop.f32.mrf.mxu0
        %v4472 = vadd.f32 %v4399, %v4471
        %v4473 = vpop.f32.mrf.mxu0
        %v4474 = vadd.f32 %v4401, %v4473
        %v4475 = vpop.f32.mrf.mxu0
        %v4476 = vadd.f32 %v4403, %v4475
        %v4477 = vpop.f32.mrf.mxu0
        %v4478 = vadd.f32 %v4405, %v4477
        %4479 = vdwg.mxu0
        %4480 = vmatprep.subr.bf16.mxu0 %v3132
        %4481 = vmatpush1.bf16.msra.mxu0 %v3131
        %4482 = vmatprep.subr.bf16.mxu0 %v3125
        %4483 = vmatpush1.bf16.msra.mxu0 %v3124
        %4484 = vmatprep.subr.bf16.mxu0 %v3118
        %4485 = vmatpush1.bf16.msra.mxu0 %v3117
        %4486 = vmatprep.subr.bf16.mxu0 %v3111
        %4487 = vmatpush1.bf16.msra.mxu0 %v3110
        %4488 = vmatprep.subr.bf16.mxu0 %v3104
        %4489 = vmatpush1.bf16.msra.mxu0 %v3103
        %4490 = vmatprep.subr.bf16.mxu0 %v3097
        %4491 = vmatpush1.bf16.msra.mxu0 %v3096
        %4492 = vmatprep.subr.bf16.mxu0 %v3090
        %4493 = vmatpush1.bf16.msra.mxu0 %v3089
        %4494 = vmatprep.subr.bf16.mxu0 %v3083
        %4495 = vmatpush1.bf16.msra.mxu0 %v3082
        %4496 = vmatprep.subr.bf16.mxu0 %v3188
        %4497 = vmatpush2.bf16.msra.mxu0 %v3187
        %4498 = vmatprep.subr.bf16.mxu0 %v3181
        %4499 = vmatpush2.bf16.msra.mxu0 %v3180
        %4500 = vmatprep.subr.bf16.mxu0 %v3174
        %4501 = vmatpush2.bf16.msra.mxu0 %v3173
        %4502 = vmatprep.subr.bf16.mxu0 %v3167
        %4503 = vmatpush2.bf16.msra.mxu0 %v3166
        %4504 = vmatprep.subr.bf16.mxu0 %v3160
        %4505 = vmatpush2.bf16.msra.mxu0 %v3159
        %4506 = vmatprep.subr.bf16.mxu0 %v3153
        %4507 = vmatpush2.bf16.msra.mxu0 %v3152
        %4508 = vmatprep.subr.bf16.mxu0 %v3146
        %4509 = vmatpush2.bf16.msra.mxu0 %v3145
        %4510 = vmatprep.subr.bf16.mxu0 %v3139
        %4511 = vmatpush2.bf16.msra.mxu0 %v3138
        %4512 = vmatprep.mubr.bf16.mxu0 %v907
        %4513 = vmatmul.mubr.bf16.gmra.mxu0 %v906
        %v4514 = vpop.f32.mrf.mxu0
        %v4515 = vadd.f32 %v4442, %v4514
        %v4516 = vpop.f32.mrf.mxu0
        %v4517 = vadd.f32 %v4444, %v4516
        %v4518 = vpop.f32.mrf.mxu0
        %v4519 = vadd.f32 %v4446, %v4518
        %v4520 = vpop.f32.mrf.mxu0
        %v4521 = vadd.f32 %v4448, %v4520
        %4522 = vmatprep.mubr.bf16.mxu0 %v915
        %4523 = vmatmul.mubr.bf16.gmra.mxu0 %v914
        %v4524 = vpop.f32.mrf.mxu0
        %v4525 = vadd.f32 %v4452, %v4524
        %v4526 = vpop.f32.mrf.mxu0
        %v4527 = vadd.f32 %v4454, %v4526
        %v4528 = vpop.f32.mrf.mxu0
        %v4529 = vadd.f32 %v4456, %v4528
        %v4530 = vpop.f32.mrf.mxu0
        %v4531 = vadd.f32 %v4458, %v4530
        %4532 = vmatprep.mubr.bf16.mxu0 %v923
        %4533 = vmatmul.mubr.bf16.gmra.mxu0 %v922
        %v4534 = vpop.f32.mrf.mxu0
        %v4535 = vadd.f32 %v4462, %v4534
        %v4536 = vpop.f32.mrf.mxu0
        %v4537 = vadd.f32 %v4464, %v4536
        %v4538 = vpop.f32.mrf.mxu0
        %v4539 = vadd.f32 %v4466, %v4538
        %v4540 = vpop.f32.mrf.mxu0
        %v4541 = vadd.f32 %v4468, %v4540
        %4542 = vmatprep.mubr.bf16.mxu0 %v931
        %4543 = vmatmul.mubr.bf16.gmra.mxu0 %v930
        %v4544 = vpop.f32.mrf.mxu0
        %v4545 = vadd.f32 %v4472, %v4544
        %v4546 = vpop.f32.mrf.mxu0
        %v4547 = vadd.f32 %v4474, %v4546
        %v4548 = vpop.f32.mrf.mxu0
        %v4549 = vadd.f32 %v4476, %v4548
        %v4550 = vpop.f32.mrf.mxu0
        %v4551 = vadd.f32 %v4478, %v4550
        %4552 = vdwg.mxu0
        %4553 = vmatprep.subr.bf16.mxu0 %v3244
        %4554 = vmatpush1.bf16.msra.mxu0 %v3243
        %4555 = vmatprep.subr.bf16.mxu0 %v3237
        %4556 = vmatpush1.bf16.msra.mxu0 %v3236
        %4557 = vmatprep.subr.bf16.mxu0 %v3230
        %4558 = vmatpush1.bf16.msra.mxu0 %v3229
        %4559 = vmatprep.subr.bf16.mxu0 %v3223
        %4560 = vmatpush1.bf16.msra.mxu0 %v3222
        %4561 = vmatprep.subr.bf16.mxu0 %v3216
        %4562 = vmatpush1.bf16.msra.mxu0 %v3215
        %4563 = vmatprep.subr.bf16.mxu0 %v3209
        %4564 = vmatpush1.bf16.msra.mxu0 %v3208
        %4565 = vmatprep.subr.bf16.mxu0 %v3202
        %4566 = vmatpush1.bf16.msra.mxu0 %v3201
        %4567 = vmatprep.subr.bf16.mxu0 %v3195
        %4568 = vmatpush1.bf16.msra.mxu0 %v3194
        %4569 = vmatprep.subr.bf16.mxu0 %v3300
        %4570 = vmatpush2.bf16.msra.mxu0 %v3299
        %4571 = vmatprep.subr.bf16.mxu0 %v3293
        %4572 = vmatpush2.bf16.msra.mxu0 %v3292
        %4573 = vmatprep.subr.bf16.mxu0 %v3286
        %4574 = vmatpush2.bf16.msra.mxu0 %v3285
        %4575 = vmatprep.subr.bf16.mxu0 %v3279
        %4576 = vmatpush2.bf16.msra.mxu0 %v3278
        %4577 = vmatprep.subr.bf16.mxu0 %v3272
        %4578 = vmatpush2.bf16.msra.mxu0 %v3271
        %4579 = vmatprep.subr.bf16.mxu0 %v3265
        %4580 = vmatpush2.bf16.msra.mxu0 %v3264
        %4581 = vmatprep.subr.bf16.mxu0 %v3258
        %4582 = vmatpush2.bf16.msra.mxu0 %v3257
        %4583 = vmatprep.subr.bf16.mxu0 %v3251
        %4584 = vmatpush2.bf16.msra.mxu0 %v3250
        %4585 = vmatprep.mubr.bf16.mxu0 %v909
        %4586 = vmatmul.mubr.bf16.gmra.mxu0 %v908
        %v4587 = vpop.f32.mrf.mxu0
        %v4588 = vadd.f32 %v4515, %v4587
        %v4589 = vpop.f32.mrf.mxu0
        %v4590 = vadd.f32 %v4517, %v4589
        %v4591 = vpop.f32.mrf.mxu0
        %v4592 = vadd.f32 %v4519, %v4591
        %v4593 = vpop.f32.mrf.mxu0
        %v4594 = vadd.f32 %v4521, %v4593
        %4595 = vmatprep.mubr.bf16.mxu0 %v917
        %4596 = vmatmul.mubr.bf16.gmra.mxu0 %v916
        %v4597 = vpop.f32.mrf.mxu0
        %v4598 = vadd.f32 %v4525, %v4597
        %v4599 = vpop.f32.mrf.mxu0
        %v4600 = vadd.f32 %v4527, %v4599
        %v4601 = vpop.f32.mrf.mxu0
        %v4602 = vadd.f32 %v4529, %v4601
        %v4603 = vpop.f32.mrf.mxu0
        %v4604 = vadd.f32 %v4531, %v4603
        %4605 = vmatprep.mubr.bf16.mxu0 %v925
        %4606 = vmatmul.mubr.bf16.gmra.mxu0 %v924
        %v4607 = vpop.f32.mrf.mxu0
        %v4608 = vadd.f32 %v4535, %v4607
        %v4609 = vpop.f32.mrf.mxu0
        %v4610 = vadd.f32 %v4537, %v4609
        %v4611 = vpop.f32.mrf.mxu0
        %v4612 = vadd.f32 %v4539, %v4611
        %v4613 = vpop.f32.mrf.mxu0
        %v4614 = vadd.f32 %v4541, %v4613
        %4615 = vmatprep.mubr.bf16.mxu0 %v933
        %4616 = vmatmul.mubr.bf16.gmra.mxu0 %v932
        %v4617 = vpop.f32.mrf.mxu0
        %v4618 = vadd.f32 %v4545, %v4617
        %v4619 = vpop.f32.mrf.mxu0
        %v4620 = vadd.f32 %v4547, %v4619
        %v4621 = vpop.f32.mrf.mxu0
        %v4622 = vadd.f32 %v4549, %v4621
        %v4623 = vpop.f32.mrf.mxu0
        %v4624 = vadd.f32 %v4551, %v4623
        %4625 = vdwg.mxu0
        %4626 = vmatprep.subr.bf16.mxu0 0
        %4627 = vmatpush1.bf16.msra.mxu0 %v2909
        %4628 = vmatprep.subr.bf16.mxu0 0
        %4629 = vmatpush1.bf16.msra.mxu0 %v2902
        %4630 = vmatprep.subr.bf16.mxu0 0
        %4631 = vmatpush1.bf16.msra.mxu0 %v2895
        %4632 = vmatprep.subr.bf16.mxu0 0
        %4633 = vmatpush1.bf16.msra.mxu0 %v2888
        %4634 = vmatprep.subr.bf16.mxu0 0
        %4635 = vmatpush1.bf16.msra.mxu0 %v2881
        %4636 = vmatprep.subr.bf16.mxu0 0
        %4637 = vmatpush1.bf16.msra.mxu0 %v2874
        %4638 = vmatprep.subr.bf16.mxu0 0
        %4639 = vmatpush1.bf16.msra.mxu0 %v2867
        %4640 = vmatprep.subr.bf16.mxu0 0
        %4641 = vmatpush1.bf16.msra.mxu0 %v2860
        %4642 = vmatprep.subr.bf16.mxu0 0
        %4643 = vmatpush2.bf16.msra.mxu0 %v2965
        %4644 = vmatprep.subr.bf16.mxu0 0
        %4645 = vmatpush2.bf16.msra.mxu0 %v2958
        %4646 = vmatprep.subr.bf16.mxu0 0
        %4647 = vmatpush2.bf16.msra.mxu0 %v2951
        %4648 = vmatprep.subr.bf16.mxu0 0
        %4649 = vmatpush2.bf16.msra.mxu0 %v2944
        %4650 = vmatprep.subr.bf16.mxu0 0
        %4651 = vmatpush2.bf16.msra.mxu0 %v2937
        %4652 = vmatprep.subr.bf16.mxu0 0
        %4653 = vmatpush2.bf16.msra.mxu0 %v2930
        %4654 = vmatprep.subr.bf16.mxu0 0
        %4655 = vmatpush2.bf16.msra.mxu0 %v2923
        %4656 = vmatprep.subr.bf16.mxu0 0
        %4657 = vmatpush2.bf16.msra.mxu0 %v2916
        %4658 = vmatprep.mubr.bf16.mxu0 %v903
        %4659 = vmatmul.mubr.bf16.gmra.mxu0 %v902
        %v4660 = vpop.f32.mrf.mxu0
        %v4661 = vadd.f32 0.0, %v4660
        %v4662 = vpop.f32.mrf.mxu0
        %v4663 = vpop.f32.mrf.mxu0
        %v4664 = vadd.f32 0.0, %v4663
        %v4665 = vpop.f32.mrf.mxu0
        %4666 = vmatprep.mubr.bf16.mxu0 %v911
        %4667 = vmatmul.mubr.bf16.gmra.mxu0 %v910
        %v4668 = vpop.f32.mrf.mxu0
        %v4669 = vadd.f32 0.0, %v4668
        %v4670 = vpop.f32.mrf.mxu0
        %v4671 = vpop.f32.mrf.mxu0
        %v4672 = vadd.f32 0.0, %v4671
        %v4673 = vpop.f32.mrf.mxu0
        %4674 = vmatprep.mubr.bf16.mxu0 %v919
        %4675 = vmatmul.mubr.bf16.gmra.mxu0 %v918
        %v4676 = vpop.f32.mrf.mxu0
        %v4677 = vadd.f32 0.0, %v4676
        %v4678 = vpop.f32.mrf.mxu0
        %v4679 = vpop.f32.mrf.mxu0
        %v4680 = vadd.f32 0.0, %v4679
        %v4681 = vpop.f32.mrf.mxu0
        %4682 = vmatprep.mubr.bf16.mxu0 %v927
        %4683 = vmatmul.mubr.bf16.gmra.mxu0 %v926
        %v4684 = vpop.f32.mrf.mxu0
        %v4685 = vadd.f32 0.0, %v4684
        %v4686 = vpop.f32.mrf.mxu0
        %v4687 = vpop.f32.mrf.mxu0
        %v4688 = vadd.f32 0.0, %v4687
        %v4689 = vpop.f32.mrf.mxu0
        %4690 = vdwg.mxu0
        %4691 = vmatprep.subr.bf16.mxu0 0
        %4692 = vmatpush1.bf16.msra.mxu0 %v3021
        %4693 = vmatprep.subr.bf16.mxu0 0
        %4694 = vmatpush1.bf16.msra.mxu0 %v3014
        %4695 = vmatprep.subr.bf16.mxu0 0
        %4696 = vmatpush1.bf16.msra.mxu0 %v3007
        %4697 = vmatprep.subr.bf16.mxu0 0
        %4698 = vmatpush1.bf16.msra.mxu0 %v3000
        %4699 = vmatprep.subr.bf16.mxu0 0
        %4700 = vmatpush1.bf16.msra.mxu0 %v2993
        %4701 = vmatprep.subr.bf16.mxu0 0
        %4702 = vmatpush1.bf16.msra.mxu0 %v2986
        %4703 = vmatprep.subr.bf16.mxu0 0
        %4704 = vmatpush1.bf16.msra.mxu0 %v2979
        %4705 = vmatprep.subr.bf16.mxu0 0
        %4706 = vmatpush1.bf16.msra.mxu0 %v2972
        %4707 = vmatprep.subr.bf16.mxu0 0
        %4708 = vmatpush2.bf16.msra.mxu0 %v3077
        %4709 = vmatprep.subr.bf16.mxu0 0
        %4710 = vmatpush2.bf16.msra.mxu0 %v3070
        %4711 = vmatprep.subr.bf16.mxu0 0
        %4712 = vmatpush2.bf16.msra.mxu0 %v3063
        %4713 = vmatprep.subr.bf16.mxu0 0
        %4714 = vmatpush2.bf16.msra.mxu0 %v3056
        %4715 = vmatprep.subr.bf16.mxu0 0
        %4716 = vmatpush2.bf16.msra.mxu0 %v3049
        %4717 = vmatprep.subr.bf16.mxu0 0
        %4718 = vmatpush2.bf16.msra.mxu0 %v3042
        %4719 = vmatprep.subr.bf16.mxu0 0
        %4720 = vmatpush2.bf16.msra.mxu0 %v3035
        %4721 = vmatprep.subr.bf16.mxu0 0
        %4722 = vmatpush2.bf16.msra.mxu0 %v3028
        %4723 = vmatprep.mubr.bf16.mxu0 %v905
        %4724 = vmatmul.mubr.bf16.gmra.mxu0 %v904
        %v4725 = vpop.f32.mrf.mxu0
        %v4726 = vadd.f32 %v4661, %v4725
        %v4727 = vpop.f32.mrf.mxu0
        %v4728 = vpop.f32.mrf.mxu0
        %v4729 = vadd.f32 %v4664, %v4728
        %v4730 = vpop.f32.mrf.mxu0
        %4731 = vmatprep.mubr.bf16.mxu0 %v913
        %4732 = vmatmul.mubr.bf16.gmra.mxu0 %v912
        %v4733 = vpop.f32.mrf.mxu0
        %v4734 = vadd.f32 %v4669, %v4733
        %v4735 = vpop.f32.mrf.mxu0
        %v4736 = vpop.f32.mrf.mxu0
        %v4737 = vadd.f32 %v4672, %v4736
        %v4738 = vpop.f32.mrf.mxu0
        %4739 = vmatprep.mubr.bf16.mxu0 %v921
        %4740 = vmatmul.mubr.bf16.gmra.mxu0 %v920
        %v4741 = vpop.f32.mrf.mxu0
        %v4742 = vadd.f32 %v4677, %v4741
        %v4743 = vpop.f32.mrf.mxu0
        %v4744 = vpop.f32.mrf.mxu0
        %v4745 = vadd.f32 %v4680, %v4744
        %v4746 = vpop.f32.mrf.mxu0
        %4747 = vmatprep.mubr.bf16.mxu0 %v929
        %4748 = vmatmul.mubr.bf16.gmra.mxu0 %v928
        %v4749 = vpop.f32.mrf.mxu0
        %v4750 = vadd.f32 %v4685, %v4749
        %v4751 = vpop.f32.mrf.mxu0
        %v4752 = vpop.f32.mrf.mxu0
        %v4753 = vadd.f32 %v4688, %v4752
        %v4754 = vpop.f32.mrf.mxu0
        %4755 = vdwg.mxu0
        %4756 = vmatprep.subr.bf16.mxu0 0
        %4757 = vmatpush1.bf16.msra.mxu0 %v3133
        %4758 = vmatprep.subr.bf16.mxu0 0
        %4759 = vmatpush1.bf16.msra.mxu0 %v3126
        %4760 = vmatprep.subr.bf16.mxu0 0
        %4761 = vmatpush1.bf16.msra.mxu0 %v3119
        %4762 = vmatprep.subr.bf16.mxu0 0
        %4763 = vmatpush1.bf16.msra.mxu0 %v3112
        %4764 = vmatprep.subr.bf16.mxu0 0
        %4765 = vmatpush1.bf16.msra.mxu0 %v3105
        %4766 = vmatprep.subr.bf16.mxu0 0
        %4767 = vmatpush1.bf16.msra.mxu0 %v3098
        %4768 = vmatprep.subr.bf16.mxu0 0
        %4769 = vmatpush1.bf16.msra.mxu0 %v3091
        %4770 = vmatprep.subr.bf16.mxu0 0
        %4771 = vmatpush1.bf16.msra.mxu0 %v3084
        %4772 = vmatprep.subr.bf16.mxu0 0
        %4773 = vmatpush2.bf16.msra.mxu0 %v3189
        %4774 = vmatprep.subr.bf16.mxu0 0
        %4775 = vmatpush2.bf16.msra.mxu0 %v3182
        %4776 = vmatprep.subr.bf16.mxu0 0
        %4777 = vmatpush2.bf16.msra.mxu0 %v3175
        %4778 = vmatprep.subr.bf16.mxu0 0
        %4779 = vmatpush2.bf16.msra.mxu0 %v3168
        %4780 = vmatprep.subr.bf16.mxu0 0
        %4781 = vmatpush2.bf16.msra.mxu0 %v3161
        %4782 = vmatprep.subr.bf16.mxu0 0
        %4783 = vmatpush2.bf16.msra.mxu0 %v3154
        %4784 = vmatprep.subr.bf16.mxu0 0
        %4785 = vmatpush2.bf16.msra.mxu0 %v3147
        %4786 = vmatprep.subr.bf16.mxu0 0
        %4787 = vmatpush2.bf16.msra.mxu0 %v3140
        %4788 = vmatprep.mubr.bf16.mxu0 %v907
        %4789 = vmatmul.mubr.bf16.gmra.mxu0 %v906
        %v4790 = vpop.f32.mrf.mxu0
        %v4791 = vadd.f32 %v4726, %v4790
        %v4792 = vpop.f32.mrf.mxu0
        %v4793 = vpop.f32.mrf.mxu0
        %v4794 = vadd.f32 %v4729, %v4793
        %v4795 = vpop.f32.mrf.mxu0
        %4796 = vmatprep.mubr.bf16.mxu0 %v915
        %4797 = vmatmul.mubr.bf16.gmra.mxu0 %v914
        %v4798 = vpop.f32.mrf.mxu0
        %v4799 = vadd.f32 %v4734, %v4798
        %v4800 = vpop.f32.mrf.mxu0
        %v4801 = vpop.f32.mrf.mxu0
        %v4802 = vadd.f32 %v4737, %v4801
        %v4803 = vpop.f32.mrf.mxu0
        %4804 = vmatprep.mubr.bf16.mxu0 %v923
        %4805 = vmatmul.mubr.bf16.gmra.mxu0 %v922
        %v4806 = vpop.f32.mrf.mxu0
        %v4807 = vadd.f32 %v4742, %v4806
        %v4808 = vpop.f32.mrf.mxu0
        %v4809 = vpop.f32.mrf.mxu0
        %v4810 = vadd.f32 %v4745, %v4809
        %v4811 = vpop.f32.mrf.mxu0
        %4812 = vmatprep.mubr.bf16.mxu0 %v931
        %4813 = vmatmul.mubr.bf16.gmra.mxu0 %v930
        %v4814 = vpop.f32.mrf.mxu0
        %v4815 = vadd.f32 %v4750, %v4814
        %v4816 = vpop.f32.mrf.mxu0
        %v4817 = vpop.f32.mrf.mxu0
        %v4818 = vadd.f32 %v4753, %v4817
        %v4819 = vpop.f32.mrf.mxu0
        %4820 = vdwg.mxu0
        %4821 = vmatprep.subr.bf16.mxu0 0
        %4822 = vmatpush1.bf16.msra.mxu0 %v3245
        %4823 = vmatprep.subr.bf16.mxu0 0
        %4824 = vmatpush1.bf16.msra.mxu0 %v3238
        %4825 = vmatprep.subr.bf16.mxu0 0
        %4826 = vmatpush1.bf16.msra.mxu0 %v3231
        %4827 = vmatprep.subr.bf16.mxu0 0
        %4828 = vmatpush1.bf16.msra.mxu0 %v3224
        %4829 = vmatprep.subr.bf16.mxu0 0
        %4830 = vmatpush1.bf16.msra.mxu0 %v3217
        %4831 = vmatprep.subr.bf16.mxu0 0
        %4832 = vmatpush1.bf16.msra.mxu0 %v3210
        %4833 = vmatprep.subr.bf16.mxu0 0
        %4834 = vmatpush1.bf16.msra.mxu0 %v3203
        %4835 = vmatprep.subr.bf16.mxu0 0
        %4836 = vmatpush1.bf16.msra.mxu0 %v3196
        %4837 = vmatprep.subr.bf16.mxu0 0
        %4838 = vmatpush2.bf16.msra.mxu0 %v3301
        %4839 = vmatprep.subr.bf16.mxu0 0
        %4840 = vmatpush2.bf16.msra.mxu0 %v3294
        %4841 = vmatprep.subr.bf16.mxu0 0
        %4842 = vmatpush2.bf16.msra.mxu0 %v3287
        %4843 = vmatprep.subr.bf16.mxu0 0
        %4844 = vmatpush2.bf16.msra.mxu0 %v3280
        %4845 = vmatprep.subr.bf16.mxu0 0
        %4846 = vmatpush2.bf16.msra.mxu0 %v3273
        %4847 = vmatprep.subr.bf16.mxu0 0
        %4848 = vmatpush2.bf16.msra.mxu0 %v3266
        %4849 = vmatprep.subr.bf16.mxu0 0
        %4850 = vmatpush2.bf16.msra.mxu0 %v3259
        %4851 = vmatprep.subr.bf16.mxu0 0
        %4852 = vmatpush2.bf16.msra.mxu0 %v3252
        %4853 = vmatprep.mubr.bf16.mxu0 %v909
        %4854 = vmatmul.mubr.bf16.gmra.mxu0 %v908
        %v4855 = vpop.f32.mrf.mxu0
        %v4856 = vadd.f32 %v4791, %v4855
        %v4857 = vpop.f32.mrf.mxu0
        %v4858 = vpop.f32.mrf.mxu0
        %v4859 = vadd.f32 %v4794, %v4858
        %v4860 = vpop.f32.mrf.mxu0
        %4861 = vmatprep.mubr.bf16.mxu0 %v917
        %4862 = vmatmul.mubr.bf16.gmra.mxu0 %v916
        %v4863 = vpop.f32.mrf.mxu0
        %v4864 = vadd.f32 %v4799, %v4863
        %v4865 = vpop.f32.mrf.mxu0
        %v4866 = vpop.f32.mrf.mxu0
        %v4867 = vadd.f32 %v4802, %v4866
        %v4868 = vpop.f32.mrf.mxu0
        %4869 = vmatprep.mubr.bf16.mxu0 %v925
        %4870 = vmatmul.mubr.bf16.gmra.mxu0 %v924
        %v4871 = vpop.f32.mrf.mxu0
        %v4872 = vadd.f32 %v4807, %v4871
        %v4873 = vpop.f32.mrf.mxu0
        %v4874 = vpop.f32.mrf.mxu0
        %v4875 = vadd.f32 %v4810, %v4874
        %v4876 = vpop.f32.mrf.mxu0
        %4877 = vmatprep.mubr.bf16.mxu0 %v933
        %4878 = vmatmul.mubr.bf16.gmra.mxu0 %v932
        %v4879 = vpop.f32.mrf.mxu0
        %v4880 = vadd.f32 %v4815, %v4879
        %v4881 = vpop.f32.mrf.mxu0
        %v4882 = vpop.f32.mrf.mxu0
        %v4883 = vadd.f32 %v4818, %v4882
        %v4884 = vpop.f32.mrf.mxu0
        %4885 = vdwg.mxu0
        %v4886 = vadd.f32 %v846, %v4004
        %v4887 = vadd.f32 %v847, %v4006
        %v4888 = vadd.f32 %v848, %v4296
        %v4889 = vadd.f32 %v849, %v4298
        %v4890 = vadd.f32 %v850, %v4588
        %v4891 = vadd.f32 %v851, %v4590
        %v4892 = vadd.f32 %v852, %v4856
        %v4893 = vadd.f32 %v853, %v4008
        %v4894 = vadd.f32 %v854, %v4010
        %v4895 = vadd.f32 %v855, %v4300
        %v4896 = vadd.f32 %v856, %v4302
        %v4897 = vadd.f32 %v857, %v4592
        %v4898 = vadd.f32 %v858, %v4594
        %v4899 = vadd.f32 %v859, %v4859
        %v4900 = vadd.f32 %v860, %v4014
        %v4901 = vadd.f32 %v861, %v4016
        %v4902 = vadd.f32 %v862, %v4306
        %v4903 = vadd.f32 %v863, %v4308
        %v4904 = vadd.f32 %v864, %v4598
        %v4905 = vadd.f32 %v865, %v4600
        %v4906 = vadd.f32 %v866, %v4864
        %v4907 = vadd.f32 %v867, %v4018
        %v4908 = vadd.f32 %v868, %v4020
        %v4909 = vadd.f32 %v869, %v4310
        %v4910 = vadd.f32 %v870, %v4312
        %v4911 = vadd.f32 %v871, %v4602
        %v4912 = vadd.f32 %v872, %v4604
        %v4913 = vadd.f32 %v873, %v4867
        %v4914 = vadd.f32 %v874, %v4024
        %v4915 = vadd.f32 %v875, %v4026
        %v4916 = vadd.f32 %v876, %v4316
        %v4917 = vadd.f32 %v877, %v4318
        %v4918 = vadd.f32 %v878, %v4608
        %v4919 = vadd.f32 %v879, %v4610
        %v4920 = vadd.f32 %v880, %v4872
        %v4921 = vadd.f32 %v881, %v4028
        %v4922 = vadd.f32 %v882, %v4030
        %v4923 = vadd.f32 %v883, %v4320
        %v4924 = vadd.f32 %v884, %v4322
        %v4925 = vadd.f32 %v885, %v4612
        %v4926 = vadd.f32 %v886, %v4614
        %v4927 = vadd.f32 %v887, %v4875
        %v4928 = vadd.f32 %v888, %v4034
        %v4929 = vadd.f32 %v889, %v4036
        %v4930 = vadd.f32 %v890, %v4326
        %v4931 = vadd.f32 %v891, %v4328
        %v4932 = vadd.f32 %v892, %v4618
        %v4933 = vadd.f32 %v893, %v4620
        %v4934 = vadd.f32 %v894, %v4880
        %v4935 = vadd.f32 %v895, %v4038
        %v4936 = vadd.f32 %v896, %v4040
        %v4937 = vadd.f32 %v897, %v4330
        %v4938 = vadd.f32 %v898, %v4332
        %v4939 = vadd.f32 %v899, %v4622
        %v4940 = vadd.f32 %v900, %v4624
        %v4941 = vadd.f32 %v901, %v4883
        %4942 = vst [vmem:[#allocation2] sm:$0xff] %v4886
        %4943 = vst [vmem:[#allocation2 + $0x8] sm:$0xff] %v4887
        %4944 = vst [vmem:[#allocation2 + $0x10] sm:$0xff] %v4888
        %4945 = vst [vmem:[#allocation2 + $0x18] sm:$0xff] %v4889
        %4946 = vst [vmem:[#allocation2 + $0x20] sm:$0xff] %v4890
        %4947 = vst [vmem:[#allocation2 + $0x28] sm:$0xff] %v4891
        %vm4948 = vcmask 130048
        %4949 = vst.msk [vmem:[#allocation2 + $0x30] sm:$0xff] %vm4948, %v4892
        %4950 = vst [vmem:[#allocation2 + $0x38] sm:$0xff] %v4893
        %4951 = vst [vmem:[#allocation2 + $0x40] sm:$0xff] %v4894
        %4952 = vst [vmem:[#allocation2 + $0x48] sm:$0xff] %v4895
        %4953 = vst [vmem:[#allocation2 + $0x50] sm:$0xff] %v4896
        %4954 = vst [vmem:[#allocation2 + $0x58] sm:$0xff] %v4897
        %4955 = vst [vmem:[#allocation2 + $0x60] sm:$0xff] %v4898
        %4956 = vst.msk [vmem:[#allocation2 + $0x68] sm:$0xff] %vm4948, %v4899
        %4957 = vst [vmem:[#allocation2 + $0x70] sm:$0xff] %v4900
        %4958 = vst [vmem:[#allocation2 + $0x78] sm:$0xff] %v4901
        %4959 = vst [vmem:[#allocation2 + $0x80] sm:$0xff] %v4902
        %4960 = vst [vmem:[#allocation2 + $0x88] sm:$0xff] %v4903
        %4961 = vst [vmem:[#allocation2 + $0x90] sm:$0xff] %v4904
        %4962 = vst [vmem:[#allocation2 + $0x98] sm:$0xff] %v4905
        %4963 = vst.msk [vmem:[#allocation2 + $0xa0] sm:$0xff] %vm4948, %v4906
        %4964 = vst [vmem:[#allocation2 + $0xa8] sm:$0xff] %v4907
        %4965 = vst [vmem:[#allocation2 + $0xb0] sm:$0xff] %v4908
        %4966 = vst [vmem:[#allocation2 + $0xb8] sm:$0xff] %v4909
        %4967 = vst [vmem:[#allocation2 + $0xc0] sm:$0xff] %v4910
        %4968 = vst [vmem:[#allocation2 + $0xc8] sm:$0xff] %v4911
        %4969 = vst [vmem:[#allocation2 + $0xd0] sm:$0xff] %v4912
        %4970 = vst.msk [vmem:[#allocation2 + $0xd8] sm:$0xff] %vm4948, %v4913
        %4971 = vst [vmem:[#allocation2 + $0xe0] sm:$0xff] %v4914
        %4972 = vst [vmem:[#allocation2 + $0xe8] sm:$0xff] %v4915
        %4973 = vst [vmem:[#allocation2 + $0xf0] sm:$0xff] %v4916
        %4974 = vst [vmem:[#allocation2 + $0xf8] sm:$0xff] %v4917
        %4975 = vst [vmem:[#allocation2 + $0x100] sm:$0xff] %v4918
        %4976 = vst [vmem:[#allocation2 + $0x108] sm:$0xff] %v4919
        %4977 = vst.msk [vmem:[#allocation2 + $0x110] sm:$0xff] %vm4948, %v4920
        %4978 = vst [vmem:[#allocation2 + $0x118] sm:$0xff] %v4921
        %4979 = vst [vmem:[#allocation2 + $0x120] sm:$0xff] %v4922
        %4980 = vst [vmem:[#allocation2 + $0x128] sm:$0xff] %v4923
        %4981 = vst [vmem:[#allocation2 + $0x130] sm:$0xff] %v4924
        %4982 = vst [vmem:[#allocation2 + $0x138] sm:$0xff] %v4925
        %4983 = vst [vmem:[#allocation2 + $0x140] sm:$0xff] %v4926
        %4984 = vst.msk [vmem:[#allocation2 + $0x148] sm:$0xff] %vm4948, %v4927
        %4985 = vst [vmem:[#allocation2 + $0x150] sm:$0xff] %v4928
        %4986 = vst [vmem:[#allocation2 + $0x158] sm:$0xff] %v4929
        %4987 = vst [vmem:[#allocation2 + $0x160] sm:$0xff] %v4930
        %4988 = vst [vmem:[#allocation2 + $0x168] sm:$0xff] %v4931
        %4989 = vst [vmem:[#allocation2 + $0x170] sm:$0xff] %v4932
        %4990 = vst [vmem:[#allocation2 + $0x178] sm:$0xff] %v4933
        %4991 = vst.msk [vmem:[#allocation2 + $0x180] sm:$0xff] %vm4948, %v4934
        %4992 = vst [vmem:[#allocation2 + $0x188] sm:$0xff] %v4935
        %4993 = vst [vmem:[#allocation2 + $0x190] sm:$0xff] %v4936
        %4994 = vst [vmem:[#allocation2 + $0x198] sm:$0xff] %v4937
        %4995 = vst [vmem:[#allocation2 + $0x1a0] sm:$0xff] %v4938
        %4996 = vst [vmem:[#allocation2 + $0x1a8] sm:$0xff] %v4939
        %4997 = vst [vmem:[#allocation2 + $0x1b0] sm:$0xff] %v4940
        %4998 = vst.msk [vmem:[#allocation2 + $0x1b8] sm:$0xff] %vm4948, %v4941
        %p4999 = scmp.eq.s32.totalorder %s17, 3
        // Predicated region
        $region45: #{decoder_forward.1} parent=39 // pred_check
          %p5000 = pneg %p4999
        $region46: #{decoder_forward.1} parent=39 // pred_check_branch
          %5002 = sbr.rel (%p5000) target = $region48
        $region47: #{decoder_forward.1} parent=39 // pred_region
          %v5003 = vld [vmem:[#allocation2] sm:$0xff]
          %v5004 = vld [vmem:[#allocation2 + $0x8] sm:$0xff]
          %v5005 = vld [vmem:[#allocation2 + $0x10] sm:$0xff]
          %v5006 = vld [vmem:[#allocation2 + $0x18] sm:$0xff]
          %v5007 = vld [vmem:[#allocation2 + $0x20] sm:$0xff]
          %v5008 = vld [vmem:[#allocation2 + $0x28] sm:$0xff]
          %v5009 = vld [vmem:[#allocation2 + $0x30] sm:$0xff]
          %v5010 = vld [vmem:[#allocation2 + $0x38] sm:$0xff]
          %v5011 = vld [vmem:[#allocation2 + $0x40] sm:$0xff]
          %v5012 = vld [vmem:[#allocation2 + $0x48] sm:$0xff]
          %v5013 = vld [vmem:[#allocation2 + $0x50] sm:$0xff]
          %v5014 = vld [vmem:[#allocation2 + $0x58] sm:$0xff]
          %v5015 = vld [vmem:[#allocation2 + $0x60] sm:$0xff]
          %v5016 = vld [vmem:[#allocation2 + $0x68] sm:$0xff]
          %v5017 = vld [vmem:[#allocation2 + $0x70] sm:$0xff]
          %v5018 = vld [vmem:[#allocation2 + $0x78] sm:$0xff]
          %v5019 = vld [vmem:[#allocation2 + $0x80] sm:$0xff]
          %v5020 = vld [vmem:[#allocation2 + $0x88] sm:$0xff]
          %v5021 = vld [vmem:[#allocation2 + $0x90] sm:$0xff]
          %v5022 = vld [vmem:[#allocation2 + $0x98] sm:$0xff]
          %v5023 = vld [vmem:[#allocation2 + $0xa0] sm:$0xff]
          %v5024 = vld [vmem:[#allocation2 + $0xa8] sm:$0xff]
          %v5025 = vld [vmem:[#allocation2 + $0xb0] sm:$0xff]
          %v5026 = vld [vmem:[#allocation2 + $0xb8] sm:$0xff]
          %v5027 = vld [vmem:[#allocation2 + $0xc0] sm:$0xff]
          %v5028 = vld [vmem:[#allocation2 + $0xc8] sm:$0xff]
          %v5029 = vld [vmem:[#allocation2 + $0xd0] sm:$0xff]
          %v5030 = vld [vmem:[#allocation2 + $0xd8] sm:$0xff]
          %v5031 = vld [vmem:[#allocation2 + $0xe0] sm:$0xff]
          %v5032 = vld [vmem:[#allocation2 + $0xe8] sm:$0xff]
          %v5033 = vld [vmem:[#allocation2 + $0xf0] sm:$0xff]
          %v5034 = vld [vmem:[#allocation2 + $0xf8] sm:$0xff]
          %v5035 = vld [vmem:[#allocation2 + $0x100] sm:$0xff]
          %v5036 = vld [vmem:[#allocation2 + $0x108] sm:$0xff]
          %v5037 = vld [vmem:[#allocation2 + $0x110] sm:$0xff]
          %v5038 = vld [vmem:[#allocation2 + $0x118] sm:$0xff]
          %v5039 = vld [vmem:[#allocation2 + $0x120] sm:$0xff]
          %v5040 = vld [vmem:[#allocation2 + $0x128] sm:$0xff]
          %v5041 = vld [vmem:[#allocation2 + $0x130] sm:$0xff]
          %v5042 = vld [vmem:[#allocation2 + $0x138] sm:$0xff]
          %v5043 = vld [vmem:[#allocation2 + $0x140] sm:$0xff]
          %v5044 = vld [vmem:[#allocation2 + $0x148] sm:$0xff]
          %v5045 = vld [vmem:[#allocation2 + $0x150] sm:$0xff]
          %v5046 = vld [vmem:[#allocation2 + $0x158] sm:$0xff]
          %v5047 = vld [vmem:[#allocation2 + $0x160] sm:$0xff]
          %v5048 = vld [vmem:[#allocation2 + $0x168] sm:$0xff]
          %v5049 = vld [vmem:[#allocation2 + $0x170] sm:$0xff]
          %v5050 = vld [vmem:[#allocation2 + $0x178] sm:$0xff]
          %v5051 = vld [vmem:[#allocation2 + $0x180] sm:$0xff]
          %v5052 = vld [vmem:[#allocation2 + $0x188] sm:$0xff]
          %v5053 = vld [vmem:[#allocation2 + $0x190] sm:$0xff]
          %v5054 = vld [vmem:[#allocation2 + $0x198] sm:$0xff]
          %v5055 = vld [vmem:[#allocation2 + $0x1a0] sm:$0xff]
          %v5056 = vld [vmem:[#allocation2 + $0x1a8] sm:$0xff]
          %v5057 = vld [vmem:[#allocation2 + $0x1b0] sm:$0xff]
          %v5058 = vld [vmem:[#allocation2 + $0x1b8] sm:$0xff]
          %v5059 = vld [vmem:[%s4] sm:$0x7f]
          %v5061 = vlaneseq
          %v5062 = vshrl.u32 %v5061, 7
          %v5063 = vsub.s32 0, %v5062
          %v5064 = vrot.slane %v5059, %v5063
          %v5065 = vlaneseq
          %v5066 = vshrl.u32 %v5065, 7
          %v5067 = vsub.s32 1, %v5066
          %v5068 = vrot.slane %v5059, %v5067
          %v5069 = vlaneseq
          %v5070 = vshrl.u32 %v5069, 7
          %v5071 = vsub.s32 2, %v5070
          %v5072 = vrot.slane %v5059, %v5071
          %v5073 = vlaneseq
          %v5074 = vshrl.u32 %v5073, 7
          %v5075 = vsub.s32 3, %v5074
          %v5076 = vrot.slane %v5059, %v5075
          %v5077 = vlaneseq
          %v5078 = vshrl.u32 %v5077, 7
          %v5079 = vsub.s32 4, %v5078
          %v5080 = vrot.slane %v5059, %v5079
          %v5081 = vlaneseq
          %v5082 = vshrl.u32 %v5081, 7
          %v5083 = vsub.s32 5, %v5082
          %v5084 = vrot.slane %v5059, %v5083
          %v5085 = vlaneseq
          %v5086 = vshrl.u32 %v5085, 7
          %v5087 = vsub.s32 6, %v5086
          %v5088 = vrot.slane %v5059, %v5087
          %v5096 = vadd.f32 %v5003, %v5064
          %v5097 = vadd.f32 %v5004, %v5068
          %v5098 = vadd.f32 %v5005, %v5072
          %v5099 = vadd.f32 %v5006, %v5076
          %v5100 = vadd.f32 %v5007, %v5080
          %v5101 = vadd.f32 %v5008, %v5084
          %v5102 = vadd.f32 %v5009, %v5088
          %v5103 = vadd.f32 %v5010, %v5064
          %v5104 = vadd.f32 %v5011, %v5068
          %v5105 = vadd.f32 %v5012, %v5072
          %v5106 = vadd.f32 %v5013, %v5076
          %v5107 = vadd.f32 %v5014, %v5080
          %v5108 = vadd.f32 %v5015, %v5084
          %v5109 = vadd.f32 %v5016, %v5088
          %v5110 = vadd.f32 %v5017, %v5064
          %v5111 = vadd.f32 %v5018, %v5068
          %v5112 = vadd.f32 %v5019, %v5072
          %v5113 = vadd.f32 %v5020, %v5076
          %v5114 = vadd.f32 %v5021, %v5080
          %v5115 = vadd.f32 %v5022, %v5084
          %v5116 = vadd.f32 %v5023, %v5088
          %v5117 = vadd.f32 %v5024, %v5064
          %v5118 = vadd.f32 %v5025, %v5068
          %v5119 = vadd.f32 %v5026, %v5072
          %v5120 = vadd.f32 %v5027, %v5076
          %v5121 = vadd.f32 %v5028, %v5080
          %v5122 = vadd.f32 %v5029, %v5084
          %v5123 = vadd.f32 %v5030, %v5088
          %v5124 = vadd.f32 %v5031, %v5064
          %v5125 = vadd.f32 %v5032, %v5068
          %v5126 = vadd.f32 %v5033, %v5072
          %v5127 = vadd.f32 %v5034, %v5076
          %v5128 = vadd.f32 %v5035, %v5080
          %v5129 = vadd.f32 %v5036, %v5084
          %v5130 = vadd.f32 %v5037, %v5088
          %v5131 = vadd.f32 %v5038, %v5064
          %v5132 = vadd.f32 %v5039, %v5068
          %v5133 = vadd.f32 %v5040, %v5072
          %v5134 = vadd.f32 %v5041, %v5076
          %v5135 = vadd.f32 %v5042, %v5080
          %v5136 = vadd.f32 %v5043, %v5084
          %v5137 = vadd.f32 %v5044, %v5088
          %v5138 = vadd.f32 %v5045, %v5064
          %v5139 = vadd.f32 %v5046, %v5068
          %v5140 = vadd.f32 %v5047, %v5072
          %v5141 = vadd.f32 %v5048, %v5076
          %v5142 = vadd.f32 %v5049, %v5080
          %v5143 = vadd.f32 %v5050, %v5084
          %v5144 = vadd.f32 %v5051, %v5088
          %v5145 = vadd.f32 %v5052, %v5064
          %v5146 = vadd.f32 %v5053, %v5068
          %v5147 = vadd.f32 %v5054, %v5072
          %v5148 = vadd.f32 %v5055, %v5076
          %v5149 = vadd.f32 %v5056, %v5080
          %v5150 = vadd.f32 %v5057, %v5084
          %v5151 = vadd.f32 %v5058, %v5088
          %v5152 = vtanh.pop %v5096
          %v5153 = vtanh.pop %v5097
          %v5154 = vtanh.pop %v5098
          %v5155 = vtanh.pop %v5099
          %v5156 = vtanh.pop %v5100
          %v5157 = vtanh.pop %v5101
          %v5158 = vtanh.pop %v5102
          %v5159 = vtanh.pop %v5103
          %v5160 = vtanh.pop %v5104
          %v5161 = vtanh.pop %v5105
          %v5162 = vtanh.pop %v5106
          %v5163 = vtanh.pop %v5107
          %v5164 = vtanh.pop %v5108
          %v5165 = vtanh.pop %v5109
          %v5166 = vtanh.pop %v5110
          %v5167 = vtanh.pop %v5111
          %v5168 = vtanh.pop %v5112
          %v5169 = vtanh.pop %v5113
          %v5170 = vtanh.pop %v5114
          %v5171 = vtanh.pop %v5115
          %v5172 = vtanh.pop %v5116
          %v5173 = vtanh.pop %v5117
          %v5174 = vtanh.pop %v5118
          %v5175 = vtanh.pop %v5119
          %v5176 = vtanh.pop %v5120
          %v5177 = vtanh.pop %v5121
          %v5178 = vtanh.pop %v5122
          %v5179 = vtanh.pop %v5123
          %v5180 = vtanh.pop %v5124
          %v5181 = vtanh.pop %v5125
          %v5182 = vtanh.pop %v5126
          %v5183 = vtanh.pop %v5127
          %v5184 = vtanh.pop %v5128
          %v5185 = vtanh.pop %v5129
          %v5186 = vtanh.pop %v5130
          %v5187 = vtanh.pop %v5131
          %v5188 = vtanh.pop %v5132
          %v5189 = vtanh.pop %v5133
          %v5190 = vtanh.pop %v5134
          %v5191 = vtanh.pop %v5135
          %v5192 = vtanh.pop %v5136
          %v5193 = vtanh.pop %v5137
          %v5194 = vtanh.pop %v5138
          %v5195 = vtanh.pop %v5139
          %v5196 = vtanh.pop %v5140
          %v5197 = vtanh.pop %v5141
          %v5198 = vtanh.pop %v5142
          %v5199 = vtanh.pop %v5143
          %v5200 = vtanh.pop %v5144
          %v5201 = vtanh.pop %v5145
          %v5202 = vtanh.pop %v5146
          %v5203 = vtanh.pop %v5147
          %v5204 = vtanh.pop %v5148
          %v5205 = vtanh.pop %v5149
          %v5206 = vtanh.pop %v5150
          %v5207 = vtanh.pop %v5151
          %5208 = vst [vmem:[#allocation3] sm:$0xff] %v5152
          %5209 = vst [vmem:[#allocation3 + $0x8] sm:$0xff] %v5153
          %5210 = vst [vmem:[#allocation3 + $0x10] sm:$0xff] %v5154
          %5211 = vst [vmem:[#allocation3 + $0x18] sm:$0xff] %v5155
          %5212 = vst [vmem:[#allocation3 + $0x20] sm:$0xff] %v5156
          %5213 = vst [vmem:[#allocation3 + $0x28] sm:$0xff] %v5157
          %5214 = vst.msk [vmem:[#allocation3 + $0x30] sm:$0xff] %vm4948, %v5158
          %5215 = vst [vmem:[#allocation3 + $0x38] sm:$0xff] %v5159
          %5216 = vst [vmem:[#allocation3 + $0x40] sm:$0xff] %v5160
          %5217 = vst [vmem:[#allocation3 + $0x48] sm:$0xff] %v5161
          %5218 = vst [vmem:[#allocation3 + $0x50] sm:$0xff] %v5162
          %5219 = vst [vmem:[#allocation3 + $0x58] sm:$0xff] %v5163
          %5220 = vst [vmem:[#allocation3 + $0x60] sm:$0xff] %v5164
          %5221 = vst.msk [vmem:[#allocation3 + $0x68] sm:$0xff] %vm4948, %v5165
          %5222 = vst [vmem:[#allocation3 + $0x70] sm:$0xff] %v5166
          %5223 = vst [vmem:[#allocation3 + $0x78] sm:$0xff] %v5167
          %5224 = vst [vmem:[#allocation3 + $0x80] sm:$0xff] %v5168
          %5225 = vst [vmem:[#allocation3 + $0x88] sm:$0xff] %v5169
          %5226 = vst [vmem:[#allocation3 + $0x90] sm:$0xff] %v5170
          %5227 = vst [vmem:[#allocation3 + $0x98] sm:$0xff] %v5171
          %5228 = vst.msk [vmem:[#allocation3 + $0xa0] sm:$0xff] %vm4948, %v5172
          %5229 = vst [vmem:[#allocation3 + $0xa8] sm:$0xff] %v5173
          %5230 = vst [vmem:[#allocation3 + $0xb0] sm:$0xff] %v5174
          %5231 = vst [vmem:[#allocation3 + $0xb8] sm:$0xff] %v5175
          %5232 = vst [vmem:[#allocation3 + $0xc0] sm:$0xff] %v5176
          %5233 = vst [vmem:[#allocation3 + $0xc8] sm:$0xff] %v5177
          %5234 = vst [vmem:[#allocation3 + $0xd0] sm:$0xff] %v5178
          %5235 = vst.msk [vmem:[#allocation3 + $0xd8] sm:$0xff] %vm4948, %v5179
          %5236 = vst [vmem:[#allocation3 + $0xe0] sm:$0xff] %v5180
          %5237 = vst [vmem:[#allocation3 + $0xe8] sm:$0xff] %v5181
          %5238 = vst [vmem:[#allocation3 + $0xf0] sm:$0xff] %v5182
          %5239 = vst [vmem:[#allocation3 + $0xf8] sm:$0xff] %v5183
          %5240 = vst [vmem:[#allocation3 + $0x100] sm:$0xff] %v5184
          %5241 = vst [vmem:[#allocation3 + $0x108] sm:$0xff] %v5185
          %5242 = vst.msk [vmem:[#allocation3 + $0x110] sm:$0xff] %vm4948, %v5186
          %5243 = vst [vmem:[#allocation3 + $0x118] sm:$0xff] %v5187
          %5244 = vst [vmem:[#allocation3 + $0x120] sm:$0xff] %v5188
          %5245 = vst [vmem:[#allocation3 + $0x128] sm:$0xff] %v5189
          %5246 = vst [vmem:[#allocation3 + $0x130] sm:$0xff] %v5190
          %5247 = vst [vmem:[#allocation3 + $0x138] sm:$0xff] %v5191
          %5248 = vst [vmem:[#allocation3 + $0x140] sm:$0xff] %v5192
          %5249 = vst.msk [vmem:[#allocation3 + $0x148] sm:$0xff] %vm4948, %v5193
          %5250 = vst [vmem:[#allocation3 + $0x150] sm:$0xff] %v5194
          %5251 = vst [vmem:[#allocation3 + $0x158] sm:$0xff] %v5195
          %5252 = vst [vmem:[#allocation3 + $0x160] sm:$0xff] %v5196
          %5253 = vst [vmem:[#allocation3 + $0x168] sm:$0xff] %v5197
          %5254 = vst [vmem:[#allocation3 + $0x170] sm:$0xff] %v5198
          %5255 = vst [vmem:[#allocation3 + $0x178] sm:$0xff] %v5199
          %5256 = vst.msk [vmem:[#allocation3 + $0x180] sm:$0xff] %vm4948, %v5200
          %5257 = vst [vmem:[#allocation3 + $0x188] sm:$0xff] %v5201
          %5258 = vst [vmem:[#allocation3 + $0x190] sm:$0xff] %v5202
          %5259 = vst [vmem:[#allocation3 + $0x198] sm:$0xff] %v5203
          %5260 = vst [vmem:[#allocation3 + $0x1a0] sm:$0xff] %v5204
          %5261 = vst [vmem:[#allocation3 + $0x1a8] sm:$0xff] %v5205
          %5262 = vst [vmem:[#allocation3 + $0x1b0] sm:$0xff] %v5206
          %5263 = vst.msk [vmem:[#allocation3 + $0x1b8] sm:$0xff] %vm4948, %v5207
        $region48: #{decoder_forward.1} parent=39 // pred_fallthru
          _
        // Predicated region
        $region49: #{decoder_forward.1} parent=39 // pred_check
          %p5264 = pneg %p150
        $region50: #{decoder_forward.1} parent=39 // pred_check_branch
          %5266 = sbr.rel (%p5264) target = $region52
        $region51: #{decoder_forward.1} parent=39 // pred_region
          %s5268 = ssub.s32 7168, 7168
          %5269 = vsyncadd [#allocation4], %s5268
          %s5270 = sshll.u32 [#allocation3], 4
          %s5271 = int_to_ptr.vmem [resolvable:$true] %s5270
          %5276 = dma.vmem_to_hbm [thread:$0]  %s5271, 7168, %s5, [#allocation4], 896, 896, 56
        $region52: #{decoder_forward.1} parent=39 // pred_fallthru
          _
        // Predicated region
        $region53: #{decoder_forward.1} parent=39 // pred_check
          %p5277 = pneg %p150
        $region54: #{decoder_forward.1} parent=39 // pred_check_branch
          %5279 = sbr.rel (%p5277) target = $region56
        $region55: #{decoder_forward.1} parent=39 // pred_region
          %5280 = dma.done [#allocation4], 7168
        $region56: #{decoder_forward.1} parent=39 // pred_fallthru
          _
      $region40: #{decoder_forward.1} parent=5 // pred_fallthru
        _
      %p5281 = scmp.le.s32.totalorder 2, %s12
      // Predicated region
      $region57: #{decoder_forward.1} parent=5 // pred_check
        %p5282 = pneg %p5281
      $region58: #{decoder_forward.1} parent=5 // pred_check_branch
        %5284 = sbr.rel (%p5282) target = $region60
      $region59: #{decoder_forward.1} parent=5 // pred_region
        %s5285 = ssub.s32 %s12, 2
      $region60: #{decoder_forward.1} parent=5 // pred_fallthru
        _
    $region6: #{decoder_forward.1} parent=1 // loop_footer
      %s16 = sadd.s32 1, %s12
    $region7: #{decoder_forward.1} parent=1 // loop_footer_branch
      %11 = sbr.rel target = $region3
    $region8: #{decoder_forward.1} parent=1 // loop_exit
      _
    %5286 = vsyncpa [#allocation4], 1
    %s5287 = scalar_lea.sflag [#allocation4], 1
    %5288 = vsyncpa %s5287, 1

</llo_original>
